<compile_context>
chip_gen: v6e
topology: v6e:2x2x1
jax: 0.10.0
libtpu: 0.0.40
codegen_flags: <defaults>
</compile_context>

<pallas_src>
import functools

import jax
import jax.numpy as jnp
import numpy as np
from jax import lax
from jax.experimental import pallas as pl
from jax.experimental.pallas import tpu as pltpu


MAT_ORDER = ("vmsg_w1", "vmsg_w2", "vmsg_w3",
             "emsg_w1", "emsg_w2", "emsg_w3",
             "vote_w1", "vote_w2")

# canonical batched matmul: (B, M, K) x (B, K, N) -> (B, M, N)
_BMM_DN = (((2,), (1,)), ((0,), (0,)))


def neuro_kernel(scal_ref, ev_ref, wr_ref, mask_ref,
                 mats_ref, wih_ref, whh_ref, lstmb_ref, vec_ref, out_ref,
                 *, iters, H, Bt, unroll_thresh):
    n_edge = ev_ref.shape[1]
    n_vertex = ev_ref.shape[2]
    NE = Bt * n_edge
    NV = Bt * n_vertex
    cdt = mats_ref.dtype                          # MXU operand dtype (bf16 or f32)
    f32 = jnp.float32

    k = scal_ref[0]                               # scalars live in SMEM
    vote_b3 = scal_ref[1]

    # ---- weight slabs: slice every piece once, hoisted out of the iteration loop ----
    vmsg_w = (mats_ref[0], mats_ref[1], mats_ref[2])
    emsg_w = (mats_ref[3], mats_ref[4], mats_ref[5])
    vote_w1, vote_w2 = mats_ref[6], mats_ref[7]
    v_wih, e_wih = wih_ref[0], wih_ref[1]         # (H, 4H), gate columns are [i,f,o,g]
    v_whh, e_whh = whh_ref[0], whh_ref[1]
    v_b = lstmb_ref[0:1, :]                       # (1, 4H)  b_ih + b_hh, reordered
    e_b = lstmb_ref[1:2, :]

    def vrow(i):                                  # (1, H) f32 row of the vector slab
        return vec_ref[i:i + 1, :]

    wv_one, wv_k, bv = vrow(0), vrow(1), vrow(2)
    we_w, we_r, be = vrow(3), vrow(4), vrow(5)
    vmsg_b = (vrow(6), vrow(7), vrow(8))
    emsg_b = (vrow(9), vrow(10), vrow(11))
    vnorm_g, vnorm_b = vrow(12), vrow(13)
    enorm_g, enorm_b = vrow(14), vrow(15)
    vote_b1, vote_b2 = vrow(16), vrow(17)
    vote_w3 = vrow(18)

    # ---- per-tile inputs (read once per grid step) ----
    ev = ev_ref[...]                              # (Bt, n_edge, n_vertex), cdt
    # EV^T hoisted out of the iteration loop; transpose done in f32 (safe lowering),
    # then cast back to the matmul operand dtype.
    evT = jnp.swapaxes(ev.astype(f32), 1, 2).astype(cdt)    # (Bt, n_vertex, n_edge)
    wr = wr_ref[...]                              # (Bt, n_edge, 2) f32  [W | R]
    mask = mask_ref[...]                          # (Bt, n_vertex, 1) f32

    def mlp(x, Ws, Bs):
        h = jnp.maximum(jnp.dot(x.astype(cdt), Ws[0],
                                preferred_element_type=f32) + Bs[0], 0.0)
        h = jnp.maximum(jnp.dot(h.astype(cdt), Ws[1],
                                preferred_element_type=f32) + Bs[1], 0.0)
        return jnp.dot(h.astype(cdt), Ws[2], preferred_element_type=f32) + Bs[2]

    def lstm(x, h, c, w_ih, w_hh, b):
        # two matmuls (no lane-axis concat); gate columns pre-ordered [i, f, o, g]
        g = (jnp.dot(x.astype(cdt), w_ih, preferred_element_type=f32)
             + jnp.dot(h.astype(cdt), w_hh, preferred_element_type=f32) + b)   # (N,4H) f32
        sg = jax.nn.sigmoid(g[:, :3 * H])         # i, f, o  (3H columns of EUP work)
        tg = jnp.tanh(g[:, 3 * H:])               # g        (H columns)
        i_g = sg[:, 0:H]
        f_g = sg[:, H:2 * H]
        o_g = sg[:, 2 * H:3 * H]
        c_new = f_g * c + i_g * tg                # cell state kept in f32
        h_new = o_g * jnp.tanh(c_new)
        return h_new, c_new

    def layernorm(x, gamma, beta, eps=1e-5):
        m = jnp.mean(x, axis=-1, keepdims=True)
        v = jnp.mean((x - m) ** 2, axis=-1, keepdims=True)
        return (x - m) * lax.rsqrt(v + eps) * gamma + beta

    # ---- init: V_init = Linear(2,H)([1, k]) is identical for every vertex ----
    v_row = wv_one + k * wv_k + bv                                        # (1, H)
    V_h = jnp.broadcast_to(v_row, (NV, H)).astype(f32)
    V_c = jnp.zeros((NV, H), f32)
    E_h = (wr[:, :, 0:1] * we_w + wr[:, :, 1:2] * we_r + be).reshape(NE, H)
    E_c = jnp.zeros((NE, H), f32)

    E = layernorm(E_h, enorm_g, enorm_b)
    V = layernorm(V_h, vnorm_g, vnorm_b)   # placeholder, overwritten in iteration 1

    def body(carry):
        V, V_h, V_c, E_h, E_c, E = carry
        # E -> V messages:  e2v[b] = EV[b]^T @ E_msg(E[b])   (single batched matmul)
        msg_e = mlp(E, emsg_w, emsg_b).astype(cdt).reshape(Bt, n_edge, H)
        e2v = lax.dot_general(evT, msg_e, _BMM_DN,
                              preferred_element_type=f32)                 # (Bt, nv, H)
        V_h, V_c = lstm(e2v.reshape(NV, H), V_h, V_c, v_wih, v_whh, v_b)
        V = layernorm(V_h, vnorm_g, vnorm_b)
        # V -> E messages:  v2e[b] = EV[b] @ V_msg(V[b])      (single batched matmul)
        msg_v = mlp(V, vmsg_w, vmsg_b).astype(cdt).reshape(Bt, n_vertex, H)
        v2e = lax.dot_general(ev, msg_v, _BMM_DN,
                              preferred_element_type=f32)                 # (Bt, ne, H)
        E_h, E_c = lstm(v2e.reshape(NE, H), E_h, E_c, e_wih, e_whh, e_b)
        E = layernorm(E_h, enorm_g, enorm_b)
        return (V, V_h, V_c, E_h, E_c, E)

    # visible loop keeps live ranges bounded; fully unroll only for small iters
    carry = (V, V_h, V_c, E_h, E_c, E)
    carry = lax.fori_loop(0, iters, lambda _, c: body(c), carry,
                          unroll=iters if iters <= unroll_thresh else 1)
    V = carry[0]

    # ---- vote MLP (out_dim 1 -> last layer as a lane reduction) + batched mask-sum ----
    h1 = jnp.maximum(jnp.dot(V.astype(cdt), vote_w1,
                             preferred_element_type=f32) + vote_b1, 0.0)
    h2 = jnp.maximum(jnp.dot(h1.astype(cdt), vote_w2,
                             preferred_element_type=f32) + vote_b2, 0.0)
    h2_3 = h2.reshape(Bt, n_vertex, H)
    vote = jnp.sum(h2_3 * vote_w3, axis=-1, keepdims=True) + vote_b3      # (Bt, nv, 1)
    s = jnp.sum(vote * mask, axis=1)                                      # (Bt, 1)
    # output is only Bt scalars per grid step -> a single (Bt,1,1) store; the padded
    # batch rows hold sigmoid(0)=0.5 garbage and are sliced off by the wrapper.
    out_ref[...] = jax.nn.sigmoid(s)[:, :, None]


def _round_up(x, m):
    return -(-int(x) // m) * m


def _est_vmem_bytes(bt, n_edge, n_vertex, H, cdt_bytes):
    """Rough per-grid-step VMEM footprint (padded (8,128) tiles, double-buffered I/O)."""
    r8 = lambda v: _round_up(max(v, 1), 8)
    r128 = lambda v: _round_up(max(v, 1), 128)
    nmax = max(bt * n_edge, bt * n_vertex)
    ev = 2 * bt * r8(n_edge) * r128(n_vertex) * cdt_bytes     # EV tile, double-buffered
    ev += bt * r8(n_vertex) * r128(n_edge) * (4 + cdt_bytes)  # hoisted EV^T (+f32 temp)
    wr = 2 * bt * r8(n_edge) * 128 * 4
    msk = 2 * bt * r8(n_vertex) * 128 * 4
    # 6 carries + msg/e2v/LN temps (~12 H-wide f32) + LSTM gates (2 x 4H-wide f32)
    act = (12 * r8(nmax) * r128(H) + 2 * r8(nmax) * r128(4 * H)) * 4
    wts = 2 * (8 * r8(H) * r128(H) * cdt_bytes                # HxH slab
               + 4 * r8(H) * r128(4 * H) * cdt_bytes          # LSTM W_ih/W_hh slabs
               + r8(2) * r128(4 * H) * 4                      # LSTM bias slab
               + r8(19) * r128(H) * 4)                        # H-row slab
    return ev + wr + msk + act + wts + (2 << 20)              # +2 MiB margin


def _reorder_gates(w):
    """PyTorch LSTM gate order [i|f|g|o] -> kernel order [i|f|o|g] (columns)."""
    i, f, g, o = jnp.split(w, 4, axis=-1)
    return jnp.concatenate([i, f, o, g], axis=-1)


def neuro_center_net(params, EV, W, R, k, mask, *, iters,
                     batch_tile=None, matmul_dtype=jnp.bfloat16,
                     unroll_thresh=4, vmem_limit_bytes=32 * 1024 * 1024):
    assert iters >= 1, "NeuroCenterNet forward requires iters >= 1"
    bsz, n_edge, n_vertex = EV.shape
    H = params["vnorm_g"].shape[-1]
    cdt = matmul_dtype
    cdt_bytes = jnp.dtype(cdt).itemsize

    # ---- batch tile: target >=128 sublane rows per grid step, capped by VMEM budget
    # (budget ~0.7 * vmem_limit, which itself stays under v7x's 64 MiB physical VMEM).
    if batch_tile is None:
        batch_tile = max(1, -(-128 // max(1, min(n_edge, n_vertex))))
    Bt = max(1, min(batch_tile, bsz))
    budget = int(0.7 * vmem_limit_bytes) if vmem_limit_bytes else 20 * 1024 * 1024
    while Bt > 1 and _est_vmem_bytes(Bt, n_edge, n_vertex, H, cdt_bytes) > budget:
        Bt = max(1, Bt // 2)

    pad = (-bsz) % Bt
    if pad:
        EV = jnp.pad(EV, ((0, pad), (0, 0), (0, 0)))
        W = jnp.pad(W, ((0, pad), (0, 0), (0, 0)))
        R = jnp.pad(R, ((0, pad), (0, 0), (0, 0)))
        mask = jnp.pad(mask, ((0, pad), (0, 0)))
    bsz_p = bsz + pad
    num_tiles = bsz_p // Bt                       # (on v7x an even grid balances both TCs)

    EVc = EV.astype(cdt)                          # bf16 adjacency halves the dominant DMA
    wr = jnp.concatenate([W, R], axis=2).astype(jnp.float32)              # (bsz, ne, 2)
    mask3 = mask[..., None].astype(jnp.float32)                           # (bsz, nv, 1)

    # ---- pack parameters into 5 slabs + 1 tiny SMEM scalar vector ----
    mats = jnp.stack([params[n] for n in MAT_ORDER], axis=0).astype(cdt)          # (8,H,H)
    lstm_wih = jnp.stack([_reorder_gates(params["vupd_wih"]),
                          _reorder_gates(params["eupd_wih"])], axis=0).astype(cdt)  # (2,H,4H)
    lstm_whh = jnp.stack([_reorder_gates(params["vupd_whh"]),
                          _reorder_gates(params["eupd_whh"])], axis=0).astype(cdt)  # (2,H,4H)
    lstm_b = jnp.concatenate([_reorder_gates(params["vupd_b"]),
                              _reorder_gates(params["eupd_b"])],
                             axis=0).astype(jnp.float32)                            # (2,4H)
    vecs = jnp.concatenate(
        [params["wv_init"][0:1], params["wv_init"][1:2], params["bv_init"],
         params["we_init"][0:1], params["we_init"][1:2], params["be_init"],
         params["vmsg_b1"], params["vmsg_b2"], params["vmsg_b3"],
         params["emsg_b1"], params["emsg_b2"], params["emsg_b3"],
         params["vnorm_g"], params["vnorm_b"], params["enorm_g"], params["enorm_b"],
         params["vote_b1"], params["vote_b2"], params["vote_w3"]],
        axis=0).astype(jnp.float32)                                               # (19,H)
    scalars = jnp.concatenate(
        [jnp.full((1,), k, jnp.float32),
         params["vote_b3"].reshape(1).astype(jnp.float32)])                       # (2,)

    in_specs = [
        pl.BlockSpec(memory_space=pltpu.MemorySpace.SMEM),                        # scalars
        pl.BlockSpec((Bt, n_edge, n_vertex), lambda b: (b, 0, 0)),                # EV
        pl.BlockSpec((Bt, n_edge, 2), lambda b: (b, 0, 0)),                       # [W|R]
        pl.BlockSpec((Bt, n_vertex, 1), lambda b: (b, 0, 0)),                     # mask
        # weight slabs: constant block index -> Pallas skips re-DMA across grid steps
        pl.BlockSpec(mats.shape, lambda b: (0, 0, 0)),
        pl.BlockSpec(lstm_wih.shape, lambda b: (0, 0, 0)),
        pl.BlockSpec(lstm_whh.shape, lambda b: (0, 0, 0)),
        pl.BlockSpec(lstm_b.shape, lambda b: (0, 0)),
        pl.BlockSpec(vecs.shape, lambda b: (0, 0)),
    ]

    out = pl.pallas_call(
        functools.partial(neuro_kernel, iters=iters, H=H, Bt=Bt,
                          unroll_thresh=unroll_thresh),
        grid=(num_tiles,),
        in_specs=in_specs,
        out_specs=pl.BlockSpec((Bt, 1, 1), lambda b: (b, 0, 0)),
        out_shape=jax.ShapeDtypeStruct((bsz_p, 1, 1), jnp.float32),
        compiler_params=pltpu.CompilerParams(
            dimension_semantics=("parallel",),    # batch tiles are fully independent
            vmem_limit_bytes=vmem_limit_bytes),
    )(scalars, EVc, wr, mask3, mats, lstm_wih, lstm_whh, lstm_b, vecs)
    return out[:bsz, 0, 0]


def reference_forward(p, EV, W, R, k, mask, iters):
    """Pure-JAX (f32) mirror of the PyTorch forward, same weight layout as the kernel."""
    bsz, n_edge, n_vertex = EV.shape
    ones = jnp.ones((bsz, n_vertex, 1), jnp.float32)
    v_in = jnp.concatenate([ones, ones * k], axis=2)
    V_h = v_in @ p["wv_init"] + p["bv_init"]
    V_c = jnp.zeros_like(V_h)
    e_in = jnp.concatenate([W, R], axis=2)
    E_h = e_in @ p["we_init"] + p["be_init"]
    E_c = jnp.zeros_like(E_h)

    def ln(x, g, b, eps=1e-5):
        m = x.mean(-1, keepdims=True)
        v = ((x - m) ** 2).mean(-1, keepdims=True)
        return (x - m) / jnp.sqrt(v + eps) * g + b

    def mlp(x, w1, b1, w2, b2, w3, b3):
        x = jax.nn.relu(x @ w1 + b1)
        x = jax.nn.relu(x @ w2 + b2)
        return x @ w3 + b3

    def lstm(x, h, c, wih, whh, b):
        g = x @ wih + h @ whh + b
        H = h.shape[-1]
        i = jax.nn.sigmoid(g[..., :H])
        f = jax.nn.sigmoid(g[..., H:2 * H])
        gg = jnp.tanh(g[..., 2 * H:3 * H])
        o = jax.nn.sigmoid(g[..., 3 * H:])
        c_new = f * c + i * gg
        return o * jnp.tanh(c_new), c_new

    E = ln(E_h, p["enorm_g"], p["enorm_b"])
    V = None
    for _ in range(iters):
        msg_e = mlp(E, p["emsg_w1"], p["emsg_b1"], p["emsg_w2"], p["emsg_b2"],
                    p["emsg_w3"], p["emsg_b3"])
        e2v = jnp.einsum("bev,beh->bvh", EV, msg_e)
        V_h, V_c = lstm(e2v, V_h, V_c, p["vupd_wih"], p["vupd_whh"], p["vupd_b"])
        V = ln(V_h, p["vnorm_g"], p["vnorm_b"])
        msg_v = mlp(V, p["vmsg_w1"], p["vmsg_b1"], p["vmsg_w2"], p["vmsg_b2"],
                    p["vmsg_w3"], p["vmsg_b3"])
        v2e = jnp.einsum("bev,bvh->beh", EV, msg_v)
        E_h, E_c = lstm(v2e, E_h, E_c, p["eupd_wih"], p["eupd_whh"], p["eupd_b"])
        E = ln(E_h, p["enorm_g"], p["enorm_b"])
    h = jax.nn.relu(V @ p["vote_w1"] + p["vote_b1"])
    h = jax.nn.relu(h @ p["vote_w2"] + p["vote_b2"])
    vote = (h @ p["vote_w3"].T + p["vote_b3"])[..., 0]              # (bsz, n_vertex)
    return jax.nn.sigmoid((vote * mask).sum(1))


if __name__ == "__main__":
    bsz, n_edge, n_vertex, H, iters = 4, 8, 16, 32, 3

    key = jax.random.PRNGKey(0)
    keys = iter(jax.random.split(key, 64))

    def nrm(shape, scale=0.1):
        return (scale * jax.random.normal(next(keys), shape)).astype(jnp.float32)

    # Weights stored as (in_features, out_features); LSTM biases pre-summed (b_ih + b_hh).
    params = dict(
        wv_init=nrm((2, H)), bv_init=nrm((1, H)),
        we_init=nrm((2, H)), be_init=nrm((1, H)),
        vmsg_w1=nrm((H, H)), vmsg_b1=nrm((1, H)),
        vmsg_w2=nrm((H, H)), vmsg_b2=nrm((1, H)),
        vmsg_w3=nrm((H, H)), vmsg_b3=nrm((1, H)),
        emsg_w1=nrm((H, H)), emsg_b1=nrm((1, H)),
        emsg_w2=nrm((H, H)), emsg_b2=nrm((1, H)),
        emsg_w3=nrm((H, H)), emsg_b3=nrm((1, H)),
        vupd_wih=nrm((H, 4 * H)), vupd_whh=nrm((H, 4 * H)), vupd_b=nrm((1, 4 * H)),
        eupd_wih=nrm((H, 4 * H)), eupd_whh=nrm((H, 4 * H)), eupd_b=nrm((1, 4 * H)),
        vnorm_g=jnp.ones((1, H), jnp.float32), vnorm_b=jnp.zeros((1, H), jnp.float32),
        enorm_g=jnp.ones((1, H), jnp.float32), enorm_b=jnp.zeros((1, H), jnp.float32),
        vote_w1=nrm((H, H)), vote_b1=nrm((1, H)),
        vote_w2=nrm((H, H)), vote_b2=nrm((1, H)),
        vote_w3=nrm((1, H)), vote_b3=nrm((1, 1)),
    )

    k_ev, k_w, k_r, k_m = jax.random.split(next(keys), 4)
    EV = jax.random.bernoulli(k_ev, 0.3, (bsz, n_edge, n_vertex)).astype(jnp.float32)
    W = jax.random.uniform(k_w, (bsz, n_edge, 1), jnp.float32)
    R = jax.random.uniform(k_r, (bsz, n_edge, 1), jnp.float32)
    mask = jax.random.bernoulli(k_m, 0.7, (bsz, n_vertex)).astype(jnp.float32)
    k_val = 3.0

    out = neuro_center_net(params, EV, W, R, k_val, mask, iters=iters)
    out = jax.block_until_ready(out)

    ref = jax.block_until_ready(reference_forward(params, EV, W, R, k_val, mask, iters))

    assert out.shape == (bsz,)
    assert np.all(np.isfinite(np.asarray(out)))
    # tolerance accounts for bf16 MXU operands (accumulation stays f32)
    np.testing.assert_allclose(np.asarray(out), np.asarray(ref), atol=3e-2, rtol=3e-2)
    print("KERNEL_OK")
</pallas_src>

<mosaic_0001>
module attributes {stable_mosaic.version = 11 : i64} {
  func.func @neuro_kernel(%arg0: i32, %arg1: memref<2xf32, #tpu.memory_space<smem>>, %arg2: memref<4x8x16xbf16, #tpu.memory_space<vmem>>, %arg3: memref<4x8x2xf32, #tpu.memory_space<vmem>>, %arg4: memref<4x16x1xf32, #tpu.memory_space<vmem>>, %arg5: memref<8x32x32xbf16, #tpu.memory_space<vmem>>, %arg6: memref<2x32x128xbf16, #tpu.memory_space<vmem>>, %arg7: memref<2x32x128xbf16, #tpu.memory_space<vmem>>, %arg8: memref<2x128xf32, #tpu.memory_space<vmem>>, %arg9: memref<19x32xf32, #tpu.memory_space<vmem>>, %arg10: memref<4x1x1xf32, #tpu.memory_space<vmem>>) attributes {dimension_semantics = [#tpu.dimension_semantics<parallel>], iteration_bounds = array<i64: 1>, scalar_prefetch = 0 : i64, scratch_operands = 0 : i64, tpu.core_type = #tpu.core_type<tc>, window_params = [{transform_indices = @transform_0, window_bounds = array<i64: 2>}, {transform_indices = @transform_1, window_bounds = array<i64: 4, 8, 16>}, {transform_indices = @transform_2, window_bounds = array<i64: 4, 8, 2>}, {transform_indices = @transform_3, window_bounds = array<i64: 4, 16, 1>}, {pipeline_mode = #tpu.pipeline_mode<synchronous>, transform_indices = @transform_4, window_bounds = array<i64: 8, 32, 32>}, {pipeline_mode = #tpu.pipeline_mode<synchronous>, transform_indices = @transform_5, window_bounds = array<i64: 2, 32, 128>}, {pipeline_mode = #tpu.pipeline_mode<synchronous>, transform_indices = @transform_6, window_bounds = array<i64: 2, 32, 128>}, {pipeline_mode = #tpu.pipeline_mode<synchronous>, transform_indices = @transform_7, window_bounds = array<i64: 2, 128>}, {pipeline_mode = #tpu.pipeline_mode<synchronous>, transform_indices = @transform_8, window_bounds = array<i64: 19, 32>}, {transform_indices = @transform_9, window_bounds = array<i64: 4, 1, 1>}]} {
    %c0 = arith.constant 0 : index
    %0 = memref.load %arg1[%c0] : memref<2xf32, #tpu.memory_space<smem>>
    %c1 = arith.constant 1 : index
    %1 = memref.load %arg1[%c1] : memref<2xf32, #tpu.memory_space<smem>>
    %c0_0 = arith.constant 0 : index
    %c0_1 = arith.constant 0 : index
    %c0_2 = arith.constant 0 : index
    %2 = vector.load %arg5[%c0_0, %c0_1, %c0_2] : memref<8x32x32xbf16, #tpu.memory_space<vmem>>, vector<1x32x32xbf16>
    %3 = vector.shape_cast %2 : vector<1x32x32xbf16> to vector<32x32xbf16>
    %c1_3 = arith.constant 1 : index
    %c0_4 = arith.constant 0 : index
    %c0_5 = arith.constant 0 : index
    %4 = vector.load %arg5[%c1_3, %c0_4, %c0_5] : memref<8x32x32xbf16, #tpu.memory_space<vmem>>, vector<1x32x32xbf16>
    %5 = vector.shape_cast %4 : vector<1x32x32xbf16> to vector<32x32xbf16>
    %c2 = arith.constant 2 : index
    %c0_6 = arith.constant 0 : index
    %c0_7 = arith.constant 0 : index
    %6 = vector.load %arg5[%c2, %c0_6, %c0_7] : memref<8x32x32xbf16, #tpu.memory_space<vmem>>, vector<1x32x32xbf16>
    %7 = vector.shape_cast %6 : vector<1x32x32xbf16> to vector<32x32xbf16>
    %c3 = arith.constant 3 : index
    %c0_8 = arith.constant 0 : index
    %c0_9 = arith.constant 0 : index
    %8 = vector.load %arg5[%c3, %c0_8, %c0_9] : memref<8x32x32xbf16, #tpu.memory_space<vmem>>, vector<1x32x32xbf16>
    %9 = vector.shape_cast %8 : vector<1x32x32xbf16> to vector<32x32xbf16>
    %c4 = arith.constant 4 : index
    %c0_10 = arith.constant 0 : index
    %c0_11 = arith.constant 0 : index
    %10 = vector.load %arg5[%c4, %c0_10, %c0_11] : memref<8x32x32xbf16, #tpu.memory_space<vmem>>, vector<1x32x32xbf16>
    %11 = vector.shape_cast %10 : vector<1x32x32xbf16> to vector<32x32xbf16>
    %c5 = arith.constant 5 : index
    %c0_12 = arith.constant 0 : index
    %c0_13 = arith.constant 0 : index
    %12 = vector.load %arg5[%c5, %c0_12, %c0_13] : memref<8x32x32xbf16, #tpu.memory_space<vmem>>, vector<1x32x32xbf16>
    %13 = vector.shape_cast %12 : vector<1x32x32xbf16> to vector<32x32xbf16>
    %c6 = arith.constant 6 : index
    %c0_14 = arith.constant 0 : index
    %c0_15 = arith.constant 0 : index
    %14 = vector.load %arg5[%c6, %c0_14, %c0_15] : memref<8x32x32xbf16, #tpu.memory_space<vmem>>, vector<1x32x32xbf16>
    %15 = vector.shape_cast %14 : vector<1x32x32xbf16> to vector<32x32xbf16>
    %c7 = arith.constant 7 : index
    %c0_16 = arith.constant 0 : index
    %c0_17 = arith.constant 0 : index
    %16 = vector.load %arg5[%c7, %c0_16, %c0_17] : memref<8x32x32xbf16, #tpu.memory_space<vmem>>, vector<1x32x32xbf16>
    %17 = vector.shape_cast %16 : vector<1x32x32xbf16> to vector<32x32xbf16>
    %c0_18 = arith.constant 0 : index
    %c0_19 = arith.constant 0 : index
    %c0_20 = arith.constant 0 : index
    %18 = vector.load %arg6[%c0_18, %c0_19, %c0_20] : memref<2x32x128xbf16, #tpu.memory_space<vmem>>, vector<1x32x128xbf16>
    %19 = vector.shape_cast %18 : vector<1x32x128xbf16> to vector<32x128xbf16>
    %c1_21 = arith.constant 1 : index
    %c0_22 = arith.constant 0 : index
    %c0_23 = arith.constant 0 : index
    %20 = vector.load %arg6[%c1_21, %c0_22, %c0_23] : memref<2x32x128xbf16, #tpu.memory_space<vmem>>, vector<1x32x128xbf16>
    %21 = vector.shape_cast %20 : vector<1x32x128xbf16> to vector<32x128xbf16>
    %c0_24 = arith.constant 0 : index
    %c0_25 = arith.constant 0 : index
    %c0_26 = arith.constant 0 : index
    %22 = vector.load %arg7[%c0_24, %c0_25, %c0_26] : memref<2x32x128xbf16, #tpu.memory_space<vmem>>, vector<1x32x128xbf16>
    %23 = vector.shape_cast %22 : vector<1x32x128xbf16> to vector<32x128xbf16>
    %c1_27 = arith.constant 1 : index
    %c0_28 = arith.constant 0 : index
    %c0_29 = arith.constant 0 : index
    %24 = vector.load %arg7[%c1_27, %c0_28, %c0_29] : memref<2x32x128xbf16, #tpu.memory_space<vmem>>, vector<1x32x128xbf16>
    %25 = vector.shape_cast %24 : vector<1x32x128xbf16> to vector<32x128xbf16>
    %c0_30 = arith.constant 0 : index
    %c0_31 = arith.constant 0 : index
    %26 = vector.load %arg8[%c0_30, %c0_31] : memref<2x128xf32, #tpu.memory_space<vmem>>, vector<1x128xf32>
    %c1_32 = arith.constant 1 : index
    %c0_33 = arith.constant 0 : index
    %27 = vector.load %arg8[%c1_32, %c0_33] : memref<2x128xf32, #tpu.memory_space<vmem>>, vector<1x128xf32>
    %c0_34 = arith.constant 0 : index
    %c0_35 = arith.constant 0 : index
    %28 = vector.load %arg9[%c0_34, %c0_35] : memref<19x32xf32, #tpu.memory_space<vmem>>, vector<1x32xf32>
    %c1_36 = arith.constant 1 : index
    %c0_37 = arith.constant 0 : index
    %29 = vector.load %arg9[%c1_36, %c0_37] : memref<19x32xf32, #tpu.memory_space<vmem>>, vector<1x32xf32>
    %c2_38 = arith.constant 2 : index
    %c0_39 = arith.constant 0 : index
    %30 = vector.load %arg9[%c2_38, %c0_39] : memref<19x32xf32, #tpu.memory_space<vmem>>, vector<1x32xf32>
    %c3_40 = arith.constant 3 : index
    %c0_41 = arith.constant 0 : index
    %31 = vector.load %arg9[%c3_40, %c0_41] : memref<19x32xf32, #tpu.memory_space<vmem>>, vector<1x32xf32>
    %c4_42 = arith.constant 4 : index
    %c0_43 = arith.constant 0 : index
    %32 = vector.load %arg9[%c4_42, %c0_43] : memref<19x32xf32, #tpu.memory_space<vmem>>, vector<1x32xf32>
    %c5_44 = arith.constant 5 : index
    %c0_45 = arith.constant 0 : index
    %33 = vector.load %arg9[%c5_44, %c0_45] : memref<19x32xf32, #tpu.memory_space<vmem>>, vector<1x32xf32>
    %c6_46 = arith.constant 6 : index
    %c0_47 = arith.constant 0 : index
    %34 = vector.load %arg9[%c6_46, %c0_47] : memref<19x32xf32, #tpu.memory_space<vmem>>, vector<1x32xf32>
    %c7_48 = arith.constant 7 : index
    %c0_49 = arith.constant 0 : index
    %35 = vector.load %arg9[%c7_48, %c0_49] : memref<19x32xf32, #tpu.memory_space<vmem>>, vector<1x32xf32>
    %c8 = arith.constant 8 : index
    %c0_50 = arith.constant 0 : index
    %36 = vector.load %arg9[%c8, %c0_50] : memref<19x32xf32, #tpu.memory_space<vmem>>, vector<1x32xf32>
    %c9 = arith.constant 9 : index
    %c0_51 = arith.constant 0 : index
    %37 = vector.load %arg9[%c9, %c0_51] : memref<19x32xf32, #tpu.memory_space<vmem>>, vector<1x32xf32>
    %c10 = arith.constant 10 : index
    %c0_52 = arith.constant 0 : index
    %38 = vector.load %arg9[%c10, %c0_52] : memref<19x32xf32, #tpu.memory_space<vmem>>, vector<1x32xf32>
    %c11 = arith.constant 11 : index
    %c0_53 = arith.constant 0 : index
    %39 = vector.load %arg9[%c11, %c0_53] : memref<19x32xf32, #tpu.memory_space<vmem>>, vector<1x32xf32>
    %c12 = arith.constant 12 : index
    %c0_54 = arith.constant 0 : index
    %40 = vector.load %arg9[%c12, %c0_54] : memref<19x32xf32, #tpu.memory_space<vmem>>, vector<1x32xf32>
    %c13 = arith.constant 13 : index
    %c0_55 = arith.constant 0 : index
    %41 = vector.load %arg9[%c13, %c0_55] : memref<19x32xf32, #tpu.memory_space<vmem>>, vector<1x32xf32>
    %c14 = arith.constant 14 : index
    %c0_56 = arith.constant 0 : index
    %42 = vector.load %arg9[%c14, %c0_56] : memref<19x32xf32, #tpu.memory_space<vmem>>, vector<1x32xf32>
    %c15 = arith.constant 15 : index
    %c0_57 = arith.constant 0 : index
    %43 = vector.load %arg9[%c15, %c0_57] : memref<19x32xf32, #tpu.memory_space<vmem>>, vector<1x32xf32>
    %c16 = arith.constant 16 : index
    %c0_58 = arith.constant 0 : index
    %44 = vector.load %arg9[%c16, %c0_58] : memref<19x32xf32, #tpu.memory_space<vmem>>, vector<1x32xf32>
    %c17 = arith.constant 17 : index
    %c0_59 = arith.constant 0 : index
    %45 = vector.load %arg9[%c17, %c0_59] : memref<19x32xf32, #tpu.memory_space<vmem>>, vector<1x32xf32>
    %c18 = arith.constant 18 : index
    %c0_60 = arith.constant 0 : index
    %46 = vector.load %arg9[%c18, %c0_60] : memref<19x32xf32, #tpu.memory_space<vmem>>, vector<1x32xf32>
    %c0_61 = arith.constant 0 : index
    %c0_62 = arith.constant 0 : index
    %c0_63 = arith.constant 0 : index
    %47 = vector.load %arg2[%c0_61, %c0_62, %c0_63] : memref<4x8x16xbf16, #tpu.memory_space<vmem>>, vector<4x8x16xbf16>
    %48 = arith.extf %47 : vector<4x8x16xbf16> to vector<4x8x16xf32>
    %49 = tpu.transpose %48, [0, 2, 1] : vector<4x8x16xf32> -> vector<4x16x8xf32>
    %50 = arith.truncf %49 : vector<4x16x8xf32> to vector<4x16x8xbf16>
    %c0_64 = arith.constant 0 : index
    %c0_65 = arith.constant 0 : index
    %c0_66 = arith.constant 0 : index
    %51 = vector.load %arg3[%c0_64, %c0_65, %c0_66] : memref<4x8x2xf32, #tpu.memory_space<vmem>>, vector<4x8x2xf32>
    %c0_67 = arith.constant 0 : index
    %c0_68 = arith.constant 0 : index
    %c0_69 = arith.constant 0 : index
    %52 = vector.load %arg4[%c0_67, %c0_68, %c0_69] : memref<4x16x1xf32, #tpu.memory_space<vmem>>, vector<4x16x1xf32>
    %53 = vector.broadcast %0 : f32 to vector<1x32xf32>
    %54 = arith.mulf %53, %29 : vector<1x32xf32>
    %55 = arith.addf %28, %54 : vector<1x32xf32>
    %56 = arith.addf %55, %30 : vector<1x32xf32>
    %57 = vector.shape_cast %56 : vector<1x32xf32> to vector<1x32xf32>
    %58 = vector.broadcast %57 : vector<1x32xf32> to vector<64x32xf32>
    %cst = arith.constant 0.000000e+00 : f32
    %59 = vector.broadcast %cst : f32 to vector<64x32xf32>
    %60 = vector.extract_strided_slice %51 {offsets = [0, 0, 0], sizes = [4, 8, 1], strides = [1, 1, 1]} : vector<4x8x2xf32> to vector<4x8x1xf32>
    %61 = vector.shape_cast %31 : vector<1x32xf32> to vector<1x1x32xf32>
    %62 = vector.broadcast %60 : vector<4x8x1xf32> to vector<4x8x32xf32>
    %63 = vector.broadcast %61 : vector<1x1x32xf32> to vector<4x8x32xf32>
    %64 = arith.mulf %62, %63 : vector<4x8x32xf32>
    %65 = vector.extract_strided_slice %51 {offsets = [0, 0, 1], sizes = [4, 8, 1], strides = [1, 1, 1]} : vector<4x8x2xf32> to vector<4x8x1xf32>
    %66 = vector.shape_cast %32 : vector<1x32xf32> to vector<1x1x32xf32>
    %67 = vector.broadcast %65 : vector<4x8x1xf32> to vector<4x8x32xf32>
    %68 = vector.broadcast %66 : vector<1x1x32xf32> to vector<4x8x32xf32>
    %69 = arith.mulf %67, %68 : vector<4x8x32xf32>
    %70 = arith.addf %64, %69 : vector<4x8x32xf32>
    %71 = vector.shape_cast %33 : vector<1x32xf32> to vector<1x1x32xf32>
    %72 = vector.broadcast %71 : vector<1x1x32xf32> to vector<4x8x32xf32>
    %73 = arith.addf %70, %72 : vector<4x8x32xf32>
    %74 = vector.shape_cast %73 : vector<4x8x32xf32> to vector<32x32xf32>
    %cst_70 = arith.constant 0.000000e+00 : f32
    %75 = vector.broadcast %cst_70 : f32 to vector<32x32xf32>
    %cst_71 = arith.constant dense<0.000000e+00> : vector<32xf32>
    %76 = vector.multi_reduction <add>, %74, %cst_71 [1] : vector<32x32xf32> to vector<32xf32>
    %77 = vector.shape_cast %76 : vector<32xf32> to vector<32x1xf32>
    %cst_72 = arith.constant 3.200000e+01 : f32
    %78 = vector.broadcast %cst_72 : f32 to vector<32x1xf32>
    %79 = arith.divf %77, %78 : vector<32x1xf32>
    %80 = vector.broadcast %79 : vector<32x1xf32> to vector<32x32xf32>
    %81 = arith.subf %74, %80 : vector<32x32xf32>
    %82 = arith.mulf %81, %81 : vector<32x32xf32>
    %cst_73 = arith.constant dense<0.000000e+00> : vector<32xf32>
    %83 = vector.multi_reduction <add>, %82, %cst_73 [1] : vector<32x32xf32> to vector<32xf32>
    %84 = vector.shape_cast %83 : vector<32xf32> to vector<32x1xf32>
    %cst_74 = arith.constant 3.200000e+01 : f32
    %85 = vector.broadcast %cst_74 : f32 to vector<32x1xf32>
    %86 = arith.divf %84, %85 : vector<32x1xf32>
    %87 = vector.broadcast %79 : vector<32x1xf32> to vector<32x32xf32>
    %88 = arith.subf %74, %87 : vector<32x32xf32>
    %cst_75 = arith.constant 9.99999974E-6 : f32
    %89 = vector.broadcast %cst_75 : f32 to vector<32x1xf32>
    %90 = arith.addf %86, %89 : vector<32x1xf32>
    %91 = math.rsqrt %90 : vector<32x1xf32>
    %92 = vector.broadcast %91 : vector<32x1xf32> to vector<32x32xf32>
    %93 = arith.mulf %88, %92 : vector<32x32xf32>
    %94 = vector.broadcast %42 : vector<1x32xf32> to vector<32x32xf32>
    %95 = arith.mulf %93, %94 : vector<32x32xf32>
    %96 = vector.broadcast %43 : vector<1x32xf32> to vector<32x32xf32>
    %97 = arith.addf %95, %96 : vector<32x32xf32>
    %cst_76 = arith.constant dense<0.000000e+00> : vector<64xf32>
    %98 = vector.multi_reduction <add>, %58, %cst_76 [1] : vector<64x32xf32> to vector<64xf32>
    %99 = vector.shape_cast %98 : vector<64xf32> to vector<64x1xf32>
    %cst_77 = arith.constant 3.200000e+01 : f32
    %100 = vector.broadcast %cst_77 : f32 to vector<64x1xf32>
    %101 = arith.divf %99, %100 : vector<64x1xf32>
    %102 = vector.broadcast %101 : vector<64x1xf32> to vector<64x32xf32>
    %103 = arith.subf %58, %102 : vector<64x32xf32>
    %104 = arith.mulf %103, %103 : vector<64x32xf32>
    %cst_78 = arith.constant dense<0.000000e+00> : vector<64xf32>
    %105 = vector.multi_reduction <add>, %104, %cst_78 [1] : vector<64x32xf32> to vector<64xf32>
    %106 = vector.shape_cast %105 : vector<64xf32> to vector<64x1xf32>
    %cst_79 = arith.constant 3.200000e+01 : f32
    %107 = vector.broadcast %cst_79 : f32 to vector<64x1xf32>
    %108 = arith.divf %106, %107 : vector<64x1xf32>
    %109 = vector.broadcast %101 : vector<64x1xf32> to vector<64x32xf32>
    %110 = arith.subf %58, %109 : vector<64x32xf32>
    %cst_80 = arith.constant 9.99999974E-6 : f32
    %111 = vector.broadcast %cst_80 : f32 to vector<64x1xf32>
    %112 = arith.addf %108, %111 : vector<64x1xf32>
    %113 = math.rsqrt %112 : vector<64x1xf32>
    %114 = vector.broadcast %113 : vector<64x1xf32> to vector<64x32xf32>
    %115 = arith.mulf %110, %114 : vector<64x32xf32>
    %116 = vector.broadcast %40 : vector<1x32xf32> to vector<64x32xf32>
    %117 = arith.mulf %115, %116 : vector<64x32xf32>
    %118 = vector.broadcast %41 : vector<1x32xf32> to vector<64x32xf32>
    %119 = arith.addf %117, %118 : vector<64x32xf32>
    %c0_i32 = arith.constant 0 : i32
    %120 = arith.truncf %97 : vector<32x32xf32> to vector<32x32xbf16>
    %cst_81 = arith.constant dense<0.000000e+00> : vector<32x32xf32>
    %121 = tpu.matmul %120, %9, %cst_81 {dimension_numbers = #tpu.dot_dimension_numbers<[1], [0], [0], [1], [0, 0, 1, 1], [], []>} : vector<32x32xbf16>, vector<32x32xbf16>, vector<32x32xf32> -> vector<32x32xf32>
    %122 = vector.broadcast %37 : vector<1x32xf32> to vector<32x32xf32>
    %123 = arith.addf %121, %122 : vector<32x32xf32>
    %cst_82 = arith.constant 0.000000e+00 : f32
    %124 = vector.broadcast %cst_82 : f32 to vector<32x32xf32>
    %125 = arith.maximumf %123, %124 : vector<32x32xf32>
    %126 = arith.truncf %125 : vector<32x32xf32> to vector<32x32xbf16>
    %cst_83 = arith.constant dense<0.000000e+00> : vector<32x32xf32>
    %127 = tpu.matmul %126, %11, %cst_83 {dimension_numbers = #tpu.dot_dimension_numbers<[1], [0], [0], [1], [0, 0, 1, 1], [], []>} : vector<32x32xbf16>, vector<32x32xbf16>, vector<32x32xf32> -> vector<32x32xf32>
    %128 = vector.broadcast %38 : vector<1x32xf32> to vector<32x32xf32>
    %129 = arith.addf %127, %128 : vector<32x32xf32>
    %cst_84 = arith.constant 0.000000e+00 : f32
    %130 = vector.broadcast %cst_84 : f32 to vector<32x32xf32>
    %131 = arith.maximumf %129, %130 : vector<32x32xf32>
    %132 = arith.truncf %131 : vector<32x32xf32> to vector<32x32xbf16>
    %cst_85 = arith.constant dense<0.000000e+00> : vector<32x32xf32>
    %133 = tpu.matmul %132, %13, %cst_85 {dimension_numbers = #tpu.dot_dimension_numbers<[1], [0], [0], [1], [0, 0, 1, 1], [], []>} : vector<32x32xbf16>, vector<32x32xbf16>, vector<32x32xf32> -> vector<32x32xf32>
    %134 = vector.broadcast %39 : vector<1x32xf32> to vector<32x32xf32>
    %135 = arith.addf %133, %134 : vector<32x32xf32>
    %136 = arith.truncf %135 : vector<32x32xf32> to vector<32x32xbf16>
    %137 = vector.shape_cast %136 : vector<32x32xbf16> to vector<4x8x32xbf16>
    %cst_86 = arith.constant dense<0.000000e+00> : vector<4x16x32xf32>
    %138 = tpu.matmul %50, %137, %cst_86 {dimension_numbers = #tpu.dot_dimension_numbers<[2], [1], [1], [2], [0, 0, 0, 1, 1, 2], [0], [0]>} : vector<4x16x8xbf16>, vector<4x8x32xbf16>, vector<4x16x32xf32> -> vector<4x16x32xf32>
    %139 = vector.shape_cast %138 : vector<4x16x32xf32> to vector<64x32xf32>
    %140 = arith.truncf %139 : vector<64x32xf32> to vector<64x32xbf16>
    %cst_87 = arith.constant dense<0.000000e+00> : vector<64x128xf32>
    %141 = tpu.matmul %140, %19, %cst_87 {dimension_numbers = #tpu.dot_dimension_numbers<[1], [0], [0], [1], [0, 0, 1, 1], [], []>} : vector<64x32xbf16>, vector<32x128xbf16>, vector<64x128xf32> -> vector<64x128xf32>
    %142 = arith.truncf %58 : vector<64x32xf32> to vector<64x32xbf16>
    %cst_88 = arith.constant dense<0.000000e+00> : vector<64x128xf32>
    %143 = tpu.matmul %142, %23, %cst_88 {dimension_numbers = #tpu.dot_dimension_numbers<[1], [0], [0], [1], [0, 0, 1, 1], [], []>} : vector<64x32xbf16>, vector<32x128xbf16>, vector<64x128xf32> -> vector<64x128xf32>
    %144 = arith.addf %141, %143 : vector<64x128xf32>
    %145 = vector.broadcast %26 : vector<1x128xf32> to vector<64x128xf32>
    %146 = arith.addf %144, %145 : vector<64x128xf32>
    %147 = vector.extract_strided_slice %146 {offsets = [0, 0], sizes = [64, 96], strides = [1, 1]} : vector<64x128xf32> to vector<64x96xf32>
    %148 = arith.negf %147 : vector<64x96xf32>
    %149 = math.exp %148 : vector<64x96xf32>
    %cst_89 = arith.constant 1.000000e+00 : f32
    %150 = vector.broadcast %cst_89 : f32 to vector<64x96xf32>
    %151 = arith.addf %150, %149 : vector<64x96xf32>
    %152 = arith.divf %150, %151 : vector<64x96xf32>
    %153 = vector.extract_strided_slice %146 {offsets = [0, 96], sizes = [64, 32], strides = [1, 1]} : vector<64x128xf32> to vector<64x32xf32>
    %154 = math.tanh %153 : vector<64x32xf32>
    %155 = vector.extract_strided_slice %152 {offsets = [0, 0], sizes = [64, 32], strides = [1, 1]} : vector<64x96xf32> to vector<64x32xf32>
    %156 = vector.extract_strided_slice %152 {offsets = [0, 32], sizes = [64, 32], strides = [1, 1]} : vector<64x96xf32> to vector<64x32xf32>
    %157 = vector.extract_strided_slice %152 {offsets = [0, 64], sizes = [64, 32], strides = [1, 1]} : vector<64x96xf32> to vector<64x32xf32>
    %158 = arith.mulf %156, %59 : vector<64x32xf32>
    %159 = arith.mulf %155, %154 : vector<64x32xf32>
    %160 = arith.addf %158, %159 : vector<64x32xf32>
    %161 = math.tanh %160 : vector<64x32xf32>
    %162 = arith.mulf %157, %161 : vector<64x32xf32>
    %cst_90 = arith.constant dense<0.000000e+00> : vector<64xf32>
    %163 = vector.multi_reduction <add>, %162, %cst_90 [1] : vector<64x32xf32> to vector<64xf32>
    %164 = vector.shape_cast %163 : vector<64xf32> to vector<64x1xf32>
    %cst_91 = arith.constant 3.200000e+01 : f32
    %165 = vector.broadcast %cst_91 : f32 to vector<64x1xf32>
    %166 = arith.divf %164, %165 : vector<64x1xf32>
    %167 = vector.broadcast %166 : vector<64x1xf32> to vector<64x32xf32>
    %168 = arith.subf %162, %167 : vector<64x32xf32>
    %169 = arith.mulf %168, %168 : vector<64x32xf32>
    %cst_92 = arith.constant dense<0.000000e+00> : vector<64xf32>
    %170 = vector.multi_reduction <add>, %169, %cst_92 [1] : vector<64x32xf32> to vector<64xf32>
    %171 = vector.shape_cast %170 : vector<64xf32> to vector<64x1xf32>
    %cst_93 = arith.constant 3.200000e+01 : f32
    %172 = vector.broadcast %cst_93 : f32 to vector<64x1xf32>
    %173 = arith.divf %171, %172 : vector<64x1xf32>
    %174 = vector.broadcast %166 : vector<64x1xf32> to vector<64x32xf32>
    %175 = arith.subf %162, %174 : vector<64x32xf32>
    %cst_94 = arith.constant 9.99999974E-6 : f32
    %176 = vector.broadcast %cst_94 : f32 to vector<64x1xf32>
    %177 = arith.addf %173, %176 : vector<64x1xf32>
    %178 = math.rsqrt %177 : vector<64x1xf32>
    %179 = vector.broadcast %178 : vector<64x1xf32> to vector<64x32xf32>
    %180 = arith.mulf %175, %179 : vector<64x32xf32>
    %181 = vector.broadcast %40 : vector<1x32xf32> to vector<64x32xf32>
    %182 = arith.mulf %180, %181 : vector<64x32xf32>
    %183 = vector.broadcast %41 : vector<1x32xf32> to vector<64x32xf32>
    %184 = arith.addf %182, %183 : vector<64x32xf32>
    %185 = arith.truncf %184 : vector<64x32xf32> to vector<64x32xbf16>
    %cst_95 = arith.constant dense<0.000000e+00> : vector<64x32xf32>
    %186 = tpu.matmul %185, %3, %cst_95 {dimension_numbers = #tpu.dot_dimension_numbers<[1], [0], [0], [1], [0, 0, 1, 1], [], []>} : vector<64x32xbf16>, vector<32x32xbf16>, vector<64x32xf32> -> vector<64x32xf32>
    %187 = vector.broadcast %34 : vector<1x32xf32> to vector<64x32xf32>
    %188 = arith.addf %186, %187 : vector<64x32xf32>
    %cst_96 = arith.constant 0.000000e+00 : f32
    %189 = vector.broadcast %cst_96 : f32 to vector<64x32xf32>
    %190 = arith.maximumf %188, %189 : vector<64x32xf32>
    %191 = arith.truncf %190 : vector<64x32xf32> to vector<64x32xbf16>
    %cst_97 = arith.constant dense<0.000000e+00> : vector<64x32xf32>
    %192 = tpu.matmul %191, %5, %cst_97 {dimension_numbers = #tpu.dot_dimension_numbers<[1], [0], [0], [1], [0, 0, 1, 1], [], []>} : vector<64x32xbf16>, vector<32x32xbf16>, vector<64x32xf32> -> vector<64x32xf32>
    %193 = vector.broadcast %35 : vector<1x32xf32> to vector<64x32xf32>
    %194 = arith.addf %192, %193 : vector<64x32xf32>
    %cst_98 = arith.constant 0.000000e+00 : f32
    %195 = vector.broadcast %cst_98 : f32 to vector<64x32xf32>
    %196 = arith.maximumf %194, %195 : vector<64x32xf32>
    %197 = arith.truncf %196 : vector<64x32xf32> to vector<64x32xbf16>
    %cst_99 = arith.constant dense<0.000000e+00> : vector<64x32xf32>
    %198 = tpu.matmul %197, %7, %cst_99 {dimension_numbers = #tpu.dot_dimension_numbers<[1], [0], [0], [1], [0, 0, 1, 1], [], []>} : vector<64x32xbf16>, vector<32x32xbf16>, vector<64x32xf32> -> vector<64x32xf32>
    %199 = vector.broadcast %36 : vector<1x32xf32> to vector<64x32xf32>
    %200 = arith.addf %198, %199 : vector<64x32xf32>
    %201 = arith.truncf %200 : vector<64x32xf32> to vector<64x32xbf16>
    %202 = vector.shape_cast %201 : vector<64x32xbf16> to vector<4x16x32xbf16>
    %cst_100 = arith.constant dense<0.000000e+00> : vector<4x8x32xf32>
    %203 = tpu.matmul %47, %202, %cst_100 {dimension_numbers = #tpu.dot_dimension_numbers<[2], [1], [1], [2], [0, 0, 0, 1, 1, 2], [0], [0]>} : vector<4x8x16xbf16>, vector<4x16x32xbf16>, vector<4x8x32xf32> -> vector<4x8x32xf32>
    %204 = vector.shape_cast %203 : vector<4x8x32xf32> to vector<32x32xf32>
    %205 = arith.truncf %204 : vector<32x32xf32> to vector<32x32xbf16>
    %cst_101 = arith.constant dense<0.000000e+00> : vector<32x128xf32>
    %206 = tpu.matmul %205, %21, %cst_101 {dimension_numbers = #tpu.dot_dimension_numbers<[1], [0], [0], [1], [0, 0, 1, 1], [], []>} : vector<32x32xbf16>, vector<32x128xbf16>, vector<32x128xf32> -> vector<32x128xf32>
    %207 = arith.truncf %74 : vector<32x32xf32> to vector<32x32xbf16>
    %cst_102 = arith.constant dense<0.000000e+00> : vector<32x128xf32>
    %208 = tpu.matmul %207, %25, %cst_102 {dimension_numbers = #tpu.dot_dimension_numbers<[1], [0], [0], [1], [0, 0, 1, 1], [], []>} : vector<32x32xbf16>, vector<32x128xbf16>, vector<32x128xf32> -> vector<32x128xf32>
    %209 = arith.addf %206, %208 : vector<32x128xf32>
    %210 = vector.broadcast %27 : vector<1x128xf32> to vector<32x128xf32>
    %211 = arith.addf %209, %210 : vector<32x128xf32>
    %212 = vector.extract_strided_slice %211 {offsets = [0, 0], sizes = [32, 96], strides = [1, 1]} : vector<32x128xf32> to vector<32x96xf32>
    %213 = arith.negf %212 : vector<32x96xf32>
    %214 = math.exp %213 : vector<32x96xf32>
    %cst_103 = arith.constant 1.000000e+00 : f32
    %215 = vector.broadcast %cst_103 : f32 to vector<32x96xf32>
    %216 = arith.addf %215, %214 : vector<32x96xf32>
    %217 = arith.divf %215, %216 : vector<32x96xf32>
    %218 = vector.extract_strided_slice %211 {offsets = [0, 96], sizes = [32, 32], strides = [1, 1]} : vector<32x128xf32> to vector<32x32xf32>
    %219 = math.tanh %218 : vector<32x32xf32>
    %220 = vector.extract_strided_slice %217 {offsets = [0, 0], sizes = [32, 32], strides = [1, 1]} : vector<32x96xf32> to vector<32x32xf32>
    %221 = vector.extract_strided_slice %217 {offsets = [0, 32], sizes = [32, 32], strides = [1, 1]} : vector<32x96xf32> to vector<32x32xf32>
    %222 = vector.extract_strided_slice %217 {offsets = [0, 64], sizes = [32, 32], strides = [1, 1]} : vector<32x96xf32> to vector<32x32xf32>
    %223 = arith.mulf %221, %75 : vector<32x32xf32>
    %224 = arith.mulf %220, %219 : vector<32x32xf32>
    %225 = arith.addf %223, %224 : vector<32x32xf32>
    %226 = math.tanh %225 : vector<32x32xf32>
    %227 = arith.mulf %222, %226 : vector<32x32xf32>
    %cst_104 = arith.constant dense<0.000000e+00> : vector<32xf32>
    %228 = vector.multi_reduction <add>, %227, %cst_104 [1] : vector<32x32xf32> to vector<32xf32>
    %229 = vector.shape_cast %228 : vector<32xf32> to vector<32x1xf32>
    %cst_105 = arith.constant 3.200000e+01 : f32
    %230 = vector.broadcast %cst_105 : f32 to vector<32x1xf32>
    %231 = arith.divf %229, %230 : vector<32x1xf32>
    %232 = vector.broadcast %231 : vector<32x1xf32> to vector<32x32xf32>
    %233 = arith.subf %227, %232 : vector<32x32xf32>
    %234 = arith.mulf %233, %233 : vector<32x32xf32>
    %cst_106 = arith.constant dense<0.000000e+00> : vector<32xf32>
    %235 = vector.multi_reduction <add>, %234, %cst_106 [1] : vector<32x32xf32> to vector<32xf32>
    %236 = vector.shape_cast %235 : vector<32xf32> to vector<32x1xf32>
    %cst_107 = arith.constant 3.200000e+01 : f32
    %237 = vector.broadcast %cst_107 : f32 to vector<32x1xf32>
    %238 = arith.divf %236, %237 : vector<32x1xf32>
    %239 = vector.broadcast %231 : vector<32x1xf32> to vector<32x32xf32>
    %240 = arith.subf %227, %239 : vector<32x32xf32>
    %cst_108 = arith.constant 9.99999974E-6 : f32
    %241 = vector.broadcast %cst_108 : f32 to vector<32x1xf32>
    %242 = arith.addf %238, %241 : vector<32x1xf32>
    %243 = math.rsqrt %242 : vector<32x1xf32>
    %244 = vector.broadcast %243 : vector<32x1xf32> to vector<32x32xf32>
    %245 = arith.mulf %240, %244 : vector<32x32xf32>
    %246 = vector.broadcast %42 : vector<1x32xf32> to vector<32x32xf32>
    %247 = arith.mulf %245, %246 : vector<32x32xf32>
    %248 = vector.broadcast %43 : vector<1x32xf32> to vector<32x32xf32>
    %249 = arith.addf %247, %248 : vector<32x32xf32>
    %c1_i32 = arith.constant 1 : i32
    %250 = arith.truncf %249 : vector<32x32xf32> to vector<32x32xbf16>
    %cst_109 = arith.constant dense<0.000000e+00> : vector<32x32xf32>
    %251 = tpu.matmul %250, %9, %cst_109 {dimension_numbers = #tpu.dot_dimension_numbers<[1], [0], [0], [1], [0, 0, 1, 1], [], []>} : vector<32x32xbf16>, vector<32x32xbf16>, vector<32x32xf32> -> vector<32x32xf32>
    %252 = vector.broadcast %37 : vector<1x32xf32> to vector<32x32xf32>
    %253 = arith.addf %251, %252 : vector<32x32xf32>
    %cst_110 = arith.constant 0.000000e+00 : f32
    %254 = vector.broadcast %cst_110 : f32 to vector<32x32xf32>
    %255 = arith.maximumf %253, %254 : vector<32x32xf32>
    %256 = arith.truncf %255 : vector<32x32xf32> to vector<32x32xbf16>
    %cst_111 = arith.constant dense<0.000000e+00> : vector<32x32xf32>
    %257 = tpu.matmul %256, %11, %cst_111 {dimension_numbers = #tpu.dot_dimension_numbers<[1], [0], [0], [1], [0, 0, 1, 1], [], []>} : vector<32x32xbf16>, vector<32x32xbf16>, vector<32x32xf32> -> vector<32x32xf32>
    %258 = vector.broadcast %38 : vector<1x32xf32> to vector<32x32xf32>
    %259 = arith.addf %257, %258 : vector<32x32xf32>
    %cst_112 = arith.constant 0.000000e+00 : f32
    %260 = vector.broadcast %cst_112 : f32 to vector<32x32xf32>
    %261 = arith.maximumf %259, %260 : vector<32x32xf32>
    %262 = arith.truncf %261 : vector<32x32xf32> to vector<32x32xbf16>
    %cst_113 = arith.constant dense<0.000000e+00> : vector<32x32xf32>
    %263 = tpu.matmul %262, %13, %cst_113 {dimension_numbers = #tpu.dot_dimension_numbers<[1], [0], [0], [1], [0, 0, 1, 1], [], []>} : vector<32x32xbf16>, vector<32x32xbf16>, vector<32x32xf32> -> vector<32x32xf32>
    %264 = vector.broadcast %39 : vector<1x32xf32> to vector<32x32xf32>
    %265 = arith.addf %263, %264 : vector<32x32xf32>
    %266 = arith.truncf %265 : vector<32x32xf32> to vector<32x32xbf16>
    %267 = vector.shape_cast %266 : vector<32x32xbf16> to vector<4x8x32xbf16>
    %cst_114 = arith.constant dense<0.000000e+00> : vector<4x16x32xf32>
    %268 = tpu.matmul %50, %267, %cst_114 {dimension_numbers = #tpu.dot_dimension_numbers<[2], [1], [1], [2], [0, 0, 0, 1, 1, 2], [0], [0]>} : vector<4x16x8xbf16>, vector<4x8x32xbf16>, vector<4x16x32xf32> -> vector<4x16x32xf32>
    %269 = vector.shape_cast %268 : vector<4x16x32xf32> to vector<64x32xf32>
    %270 = arith.truncf %269 : vector<64x32xf32> to vector<64x32xbf16>
    %cst_115 = arith.constant dense<0.000000e+00> : vector<64x128xf32>
    %271 = tpu.matmul %270, %19, %cst_115 {dimension_numbers = #tpu.dot_dimension_numbers<[1], [0], [0], [1], [0, 0, 1, 1], [], []>} : vector<64x32xbf16>, vector<32x128xbf16>, vector<64x128xf32> -> vector<64x128xf32>
    %272 = arith.truncf %162 : vector<64x32xf32> to vector<64x32xbf16>
    %cst_116 = arith.constant dense<0.000000e+00> : vector<64x128xf32>
    %273 = tpu.matmul %272, %23, %cst_116 {dimension_numbers = #tpu.dot_dimension_numbers<[1], [0], [0], [1], [0, 0, 1, 1], [], []>} : vector<64x32xbf16>, vector<32x128xbf16>, vector<64x128xf32> -> vector<64x128xf32>
    %274 = arith.addf %271, %273 : vector<64x128xf32>
    %275 = vector.broadcast %26 : vector<1x128xf32> to vector<64x128xf32>
    %276 = arith.addf %274, %275 : vector<64x128xf32>
    %277 = vector.extract_strided_slice %276 {offsets = [0, 0], sizes = [64, 96], strides = [1, 1]} : vector<64x128xf32> to vector<64x96xf32>
    %278 = arith.negf %277 : vector<64x96xf32>
    %279 = math.exp %278 : vector<64x96xf32>
    %cst_117 = arith.constant 1.000000e+00 : f32
    %280 = vector.broadcast %cst_117 : f32 to vector<64x96xf32>
    %281 = arith.addf %280, %279 : vector<64x96xf32>
    %282 = arith.divf %280, %281 : vector<64x96xf32>
    %283 = vector.extract_strided_slice %276 {offsets = [0, 96], sizes = [64, 32], strides = [1, 1]} : vector<64x128xf32> to vector<64x32xf32>
    %284 = math.tanh %283 : vector<64x32xf32>
    %285 = vector.extract_strided_slice %282 {offsets = [0, 0], sizes = [64, 32], strides = [1, 1]} : vector<64x96xf32> to vector<64x32xf32>
    %286 = vector.extract_strided_slice %282 {offsets = [0, 32], sizes = [64, 32], strides = [1, 1]} : vector<64x96xf32> to vector<64x32xf32>
    %287 = vector.extract_strided_slice %282 {offsets = [0, 64], sizes = [64, 32], strides = [1, 1]} : vector<64x96xf32> to vector<64x32xf32>
    %288 = arith.mulf %286, %160 : vector<64x32xf32>
    %289 = arith.mulf %285, %284 : vector<64x32xf32>
    %290 = arith.addf %288, %289 : vector<64x32xf32>
    %291 = math.tanh %290 : vector<64x32xf32>
    %292 = arith.mulf %287, %291 : vector<64x32xf32>
    %cst_118 = arith.constant dense<0.000000e+00> : vector<64xf32>
    %293 = vector.multi_reduction <add>, %292, %cst_118 [1] : vector<64x32xf32> to vector<64xf32>
    %294 = vector.shape_cast %293 : vector<64xf32> to vector<64x1xf32>
    %cst_119 = arith.constant 3.200000e+01 : f32
    %295 = vector.broadcast %cst_119 : f32 to vector<64x1xf32>
    %296 = arith.divf %294, %295 : vector<64x1xf32>
    %297 = vector.broadcast %296 : vector<64x1xf32> to vector<64x32xf32>
    %298 = arith.subf %292, %297 : vector<64x32xf32>
    %299 = arith.mulf %298, %298 : vector<64x32xf32>
    %cst_120 = arith.constant dense<0.000000e+00> : vector<64xf32>
    %300 = vector.multi_reduction <add>, %299, %cst_120 [1] : vector<64x32xf32> to vector<64xf32>
    %301 = vector.shape_cast %300 : vector<64xf32> to vector<64x1xf32>
    %cst_121 = arith.constant 3.200000e+01 : f32
    %302 = vector.broadcast %cst_121 : f32 to vector<64x1xf32>
    %303 = arith.divf %301, %302 : vector<64x1xf32>
    %304 = vector.broadcast %296 : vector<64x1xf32> to vector<64x32xf32>
    %305 = arith.subf %292, %304 : vector<64x32xf32>
    %cst_122 = arith.constant 9.99999974E-6 : f32
    %306 = vector.broadcast %cst_122 : f32 to vector<64x1xf32>
    %307 = arith.addf %303, %306 : vector<64x1xf32>
    %308 = math.rsqrt %307 : vector<64x1xf32>
    %309 = vector.broadcast %308 : vector<64x1xf32> to vector<64x32xf32>
    %310 = arith.mulf %305, %309 : vector<64x32xf32>
    %311 = vector.broadcast %40 : vector<1x32xf32> to vector<64x32xf32>
    %312 = arith.mulf %310, %311 : vector<64x32xf32>
    %313 = vector.broadcast %41 : vector<1x32xf32> to vector<64x32xf32>
    %314 = arith.addf %312, %313 : vector<64x32xf32>
    %315 = arith.truncf %314 : vector<64x32xf32> to vector<64x32xbf16>
    %cst_123 = arith.constant dense<0.000000e+00> : vector<64x32xf32>
    %316 = tpu.matmul %315, %3, %cst_123 {dimension_numbers = #tpu.dot_dimension_numbers<[1], [0], [0], [1], [0, 0, 1, 1], [], []>} : vector<64x32xbf16>, vector<32x32xbf16>, vector<64x32xf32> -> vector<64x32xf32>
    %317 = vector.broadcast %34 : vector<1x32xf32> to vector<64x32xf32>
    %318 = arith.addf %316, %317 : vector<64x32xf32>
    %cst_124 = arith.constant 0.000000e+00 : f32
    %319 = vector.broadcast %cst_124 : f32 to vector<64x32xf32>
    %320 = arith.maximumf %318, %319 : vector<64x32xf32>
    %321 = arith.truncf %320 : vector<64x32xf32> to vector<64x32xbf16>
    %cst_125 = arith.constant dense<0.000000e+00> : vector<64x32xf32>
    %322 = tpu.matmul %321, %5, %cst_125 {dimension_numbers = #tpu.dot_dimension_numbers<[1], [0], [0], [1], [0, 0, 1, 1], [], []>} : vector<64x32xbf16>, vector<32x32xbf16>, vector<64x32xf32> -> vector<64x32xf32>
    %323 = vector.broadcast %35 : vector<1x32xf32> to vector<64x32xf32>
    %324 = arith.addf %322, %323 : vector<64x32xf32>
    %cst_126 = arith.constant 0.000000e+00 : f32
    %325 = vector.broadcast %cst_126 : f32 to vector<64x32xf32>
    %326 = arith.maximumf %324, %325 : vector<64x32xf32>
    %327 = arith.truncf %326 : vector<64x32xf32> to vector<64x32xbf16>
    %cst_127 = arith.constant dense<0.000000e+00> : vector<64x32xf32>
    %328 = tpu.matmul %327, %7, %cst_127 {dimension_numbers = #tpu.dot_dimension_numbers<[1], [0], [0], [1], [0, 0, 1, 1], [], []>} : vector<64x32xbf16>, vector<32x32xbf16>, vector<64x32xf32> -> vector<64x32xf32>
    %329 = vector.broadcast %36 : vector<1x32xf32> to vector<64x32xf32>
    %330 = arith.addf %328, %329 : vector<64x32xf32>
    %331 = arith.truncf %330 : vector<64x32xf32> to vector<64x32xbf16>
    %332 = vector.shape_cast %331 : vector<64x32xbf16> to vector<4x16x32xbf16>
    %cst_128 = arith.constant dense<0.000000e+00> : vector<4x8x32xf32>
    %333 = tpu.matmul %47, %332, %cst_128 {dimension_numbers = #tpu.dot_dimension_numbers<[2], [1], [1], [2], [0, 0, 0, 1, 1, 2], [0], [0]>} : vector<4x8x16xbf16>, vector<4x16x32xbf16>, vector<4x8x32xf32> -> vector<4x8x32xf32>
    %334 = vector.shape_cast %333 : vector<4x8x32xf32> to vector<32x32xf32>
    %335 = arith.truncf %334 : vector<32x32xf32> to vector<32x32xbf16>
    %cst_129 = arith.constant dense<0.000000e+00> : vector<32x128xf32>
    %336 = tpu.matmul %335, %21, %cst_129 {dimension_numbers = #tpu.dot_dimension_numbers<[1], [0], [0], [1], [0, 0, 1, 1], [], []>} : vector<32x32xbf16>, vector<32x128xbf16>, vector<32x128xf32> -> vector<32x128xf32>
    %337 = arith.truncf %227 : vector<32x32xf32> to vector<32x32xbf16>
    %cst_130 = arith.constant dense<0.000000e+00> : vector<32x128xf32>
    %338 = tpu.matmul %337, %25, %cst_130 {dimension_numbers = #tpu.dot_dimension_numbers<[1], [0], [0], [1], [0, 0, 1, 1], [], []>} : vector<32x32xbf16>, vector<32x128xbf16>, vector<32x128xf32> -> vector<32x128xf32>
    %339 = arith.addf %336, %338 : vector<32x128xf32>
    %340 = vector.broadcast %27 : vector<1x128xf32> to vector<32x128xf32>
    %341 = arith.addf %339, %340 : vector<32x128xf32>
    %342 = vector.extract_strided_slice %341 {offsets = [0, 0], sizes = [32, 96], strides = [1, 1]} : vector<32x128xf32> to vector<32x96xf32>
    %343 = arith.negf %342 : vector<32x96xf32>
    %344 = math.exp %343 : vector<32x96xf32>
    %cst_131 = arith.constant 1.000000e+00 : f32
    %345 = vector.broadcast %cst_131 : f32 to vector<32x96xf32>
    %346 = arith.addf %345, %344 : vector<32x96xf32>
    %347 = arith.divf %345, %346 : vector<32x96xf32>
    %348 = vector.extract_strided_slice %341 {offsets = [0, 96], sizes = [32, 32], strides = [1, 1]} : vector<32x128xf32> to vector<32x32xf32>
    %349 = math.tanh %348 : vector<32x32xf32>
    %350 = vector.extract_strided_slice %347 {offsets = [0, 0], sizes = [32, 32], strides = [1, 1]} : vector<32x96xf32> to vector<32x32xf32>
    %351 = vector.extract_strided_slice %347 {offsets = [0, 32], sizes = [32, 32], strides = [1, 1]} : vector<32x96xf32> to vector<32x32xf32>
    %352 = vector.extract_strided_slice %347 {offsets = [0, 64], sizes = [32, 32], strides = [1, 1]} : vector<32x96xf32> to vector<32x32xf32>
    %353 = arith.mulf %351, %225 : vector<32x32xf32>
    %354 = arith.mulf %350, %349 : vector<32x32xf32>
    %355 = arith.addf %353, %354 : vector<32x32xf32>
    %356 = math.tanh %355 : vector<32x32xf32>
    %357 = arith.mulf %352, %356 : vector<32x32xf32>
    %cst_132 = arith.constant dense<0.000000e+00> : vector<32xf32>
    %358 = vector.multi_reduction <add>, %357, %cst_132 [1] : vector<32x32xf32> to vector<32xf32>
    %359 = vector.shape_cast %358 : vector<32xf32> to vector<32x1xf32>
    %cst_133 = arith.constant 3.200000e+01 : f32
    %360 = vector.broadcast %cst_133 : f32 to vector<32x1xf32>
    %361 = arith.divf %359, %360 : vector<32x1xf32>
    %362 = vector.broadcast %361 : vector<32x1xf32> to vector<32x32xf32>
    %363 = arith.subf %357, %362 : vector<32x32xf32>
    %364 = arith.mulf %363, %363 : vector<32x32xf32>
    %cst_134 = arith.constant dense<0.000000e+00> : vector<32xf32>
    %365 = vector.multi_reduction <add>, %364, %cst_134 [1] : vector<32x32xf32> to vector<32xf32>
    %366 = vector.shape_cast %365 : vector<32xf32> to vector<32x1xf32>
    %cst_135 = arith.constant 3.200000e+01 : f32
    %367 = vector.broadcast %cst_135 : f32 to vector<32x1xf32>
    %368 = arith.divf %366, %367 : vector<32x1xf32>
    %369 = vector.broadcast %361 : vector<32x1xf32> to vector<32x32xf32>
    %370 = arith.subf %357, %369 : vector<32x32xf32>
    %cst_136 = arith.constant 9.99999974E-6 : f32
    %371 = vector.broadcast %cst_136 : f32 to vector<32x1xf32>
    %372 = arith.addf %368, %371 : vector<32x1xf32>
    %373 = math.rsqrt %372 : vector<32x1xf32>
    %374 = vector.broadcast %373 : vector<32x1xf32> to vector<32x32xf32>
    %375 = arith.mulf %370, %374 : vector<32x32xf32>
    %376 = vector.broadcast %42 : vector<1x32xf32> to vector<32x32xf32>
    %377 = arith.mulf %375, %376 : vector<32x32xf32>
    %378 = vector.broadcast %43 : vector<1x32xf32> to vector<32x32xf32>
    %379 = arith.addf %377, %378 : vector<32x32xf32>
    %c2_i32 = arith.constant 2 : i32
    %380 = arith.truncf %379 : vector<32x32xf32> to vector<32x32xbf16>
    %cst_137 = arith.constant dense<0.000000e+00> : vector<32x32xf32>
    %381 = tpu.matmul %380, %9, %cst_137 {dimension_numbers = #tpu.dot_dimension_numbers<[1], [0], [0], [1], [0, 0, 1, 1], [], []>} : vector<32x32xbf16>, vector<32x32xbf16>, vector<32x32xf32> -> vector<32x32xf32>
    %382 = vector.broadcast %37 : vector<1x32xf32> to vector<32x32xf32>
    %383 = arith.addf %381, %382 : vector<32x32xf32>
    %cst_138 = arith.constant 0.000000e+00 : f32
    %384 = vector.broadcast %cst_138 : f32 to vector<32x32xf32>
    %385 = arith.maximumf %383, %384 : vector<32x32xf32>
    %386 = arith.truncf %385 : vector<32x32xf32> to vector<32x32xbf16>
    %cst_139 = arith.constant dense<0.000000e+00> : vector<32x32xf32>
    %387 = tpu.matmul %386, %11, %cst_139 {dimension_numbers = #tpu.dot_dimension_numbers<[1], [0], [0], [1], [0, 0, 1, 1], [], []>} : vector<32x32xbf16>, vector<32x32xbf16>, vector<32x32xf32> -> vector<32x32xf32>
    %388 = vector.broadcast %38 : vector<1x32xf32> to vector<32x32xf32>
    %389 = arith.addf %387, %388 : vector<32x32xf32>
    %cst_140 = arith.constant 0.000000e+00 : f32
    %390 = vector.broadcast %cst_140 : f32 to vector<32x32xf32>
    %391 = arith.maximumf %389, %390 : vector<32x32xf32>
    %392 = arith.truncf %391 : vector<32x32xf32> to vector<32x32xbf16>
    %cst_141 = arith.constant dense<0.000000e+00> : vector<32x32xf32>
    %393 = tpu.matmul %392, %13, %cst_141 {dimension_numbers = #tpu.dot_dimension_numbers<[1], [0], [0], [1], [0, 0, 1, 1], [], []>} : vector<32x32xbf16>, vector<32x32xbf16>, vector<32x32xf32> -> vector<32x32xf32>
    %394 = vector.broadcast %39 : vector<1x32xf32> to vector<32x32xf32>
    %395 = arith.addf %393, %394 : vector<32x32xf32>
    %396 = arith.truncf %395 : vector<32x32xf32> to vector<32x32xbf16>
    %397 = vector.shape_cast %396 : vector<32x32xbf16> to vector<4x8x32xbf16>
    %cst_142 = arith.constant dense<0.000000e+00> : vector<4x16x32xf32>
    %398 = tpu.matmul %50, %397, %cst_142 {dimension_numbers = #tpu.dot_dimension_numbers<[2], [1], [1], [2], [0, 0, 0, 1, 1, 2], [0], [0]>} : vector<4x16x8xbf16>, vector<4x8x32xbf16>, vector<4x16x32xf32> -> vector<4x16x32xf32>
    %399 = vector.shape_cast %398 : vector<4x16x32xf32> to vector<64x32xf32>
    %400 = arith.truncf %399 : vector<64x32xf32> to vector<64x32xbf16>
    %cst_143 = arith.constant dense<0.000000e+00> : vector<64x128xf32>
    %401 = tpu.matmul %400, %19, %cst_143 {dimension_numbers = #tpu.dot_dimension_numbers<[1], [0], [0], [1], [0, 0, 1, 1], [], []>} : vector<64x32xbf16>, vector<32x128xbf16>, vector<64x128xf32> -> vector<64x128xf32>
    %402 = arith.truncf %292 : vector<64x32xf32> to vector<64x32xbf16>
    %cst_144 = arith.constant dense<0.000000e+00> : vector<64x128xf32>
    %403 = tpu.matmul %402, %23, %cst_144 {dimension_numbers = #tpu.dot_dimension_numbers<[1], [0], [0], [1], [0, 0, 1, 1], [], []>} : vector<64x32xbf16>, vector<32x128xbf16>, vector<64x128xf32> -> vector<64x128xf32>
    %404 = arith.addf %401, %403 : vector<64x128xf32>
    %405 = vector.broadcast %26 : vector<1x128xf32> to vector<64x128xf32>
    %406 = arith.addf %404, %405 : vector<64x128xf32>
    %407 = vector.extract_strided_slice %406 {offsets = [0, 0], sizes = [64, 96], strides = [1, 1]} : vector<64x128xf32> to vector<64x96xf32>
    %408 = arith.negf %407 : vector<64x96xf32>
    %409 = math.exp %408 : vector<64x96xf32>
    %cst_145 = arith.constant 1.000000e+00 : f32
    %410 = vector.broadcast %cst_145 : f32 to vector<64x96xf32>
    %411 = arith.addf %410, %409 : vector<64x96xf32>
    %412 = arith.divf %410, %411 : vector<64x96xf32>
    %413 = vector.extract_strided_slice %406 {offsets = [0, 96], sizes = [64, 32], strides = [1, 1]} : vector<64x128xf32> to vector<64x32xf32>
    %414 = math.tanh %413 : vector<64x32xf32>
    %415 = vector.extract_strided_slice %412 {offsets = [0, 0], sizes = [64, 32], strides = [1, 1]} : vector<64x96xf32> to vector<64x32xf32>
    %416 = vector.extract_strided_slice %412 {offsets = [0, 32], sizes = [64, 32], strides = [1, 1]} : vector<64x96xf32> to vector<64x32xf32>
    %417 = vector.extract_strided_slice %412 {offsets = [0, 64], sizes = [64, 32], strides = [1, 1]} : vector<64x96xf32> to vector<64x32xf32>
    %418 = arith.mulf %416, %290 : vector<64x32xf32>
    %419 = arith.mulf %415, %414 : vector<64x32xf32>
    %420 = arith.addf %418, %419 : vector<64x32xf32>
    %421 = math.tanh %420 : vector<64x32xf32>
    %422 = arith.mulf %417, %421 : vector<64x32xf32>
    %cst_146 = arith.constant dense<0.000000e+00> : vector<64xf32>
    %423 = vector.multi_reduction <add>, %422, %cst_146 [1] : vector<64x32xf32> to vector<64xf32>
    %424 = vector.shape_cast %423 : vector<64xf32> to vector<64x1xf32>
    %cst_147 = arith.constant 3.200000e+01 : f32
    %425 = vector.broadcast %cst_147 : f32 to vector<64x1xf32>
    %426 = arith.divf %424, %425 : vector<64x1xf32>
    %427 = vector.broadcast %426 : vector<64x1xf32> to vector<64x32xf32>
    %428 = arith.subf %422, %427 : vector<64x32xf32>
    %429 = arith.mulf %428, %428 : vector<64x32xf32>
    %cst_148 = arith.constant dense<0.000000e+00> : vector<64xf32>
    %430 = vector.multi_reduction <add>, %429, %cst_148 [1] : vector<64x32xf32> to vector<64xf32>
    %431 = vector.shape_cast %430 : vector<64xf32> to vector<64x1xf32>
    %cst_149 = arith.constant 3.200000e+01 : f32
    %432 = vector.broadcast %cst_149 : f32 to vector<64x1xf32>
    %433 = arith.divf %431, %432 : vector<64x1xf32>
    %434 = vector.broadcast %426 : vector<64x1xf32> to vector<64x32xf32>
    %435 = arith.subf %422, %434 : vector<64x32xf32>
    %cst_150 = arith.constant 9.99999974E-6 : f32
    %436 = vector.broadcast %cst_150 : f32 to vector<64x1xf32>
    %437 = arith.addf %433, %436 : vector<64x1xf32>
    %438 = math.rsqrt %437 : vector<64x1xf32>
    %439 = vector.broadcast %438 : vector<64x1xf32> to vector<64x32xf32>
    %440 = arith.mulf %435, %439 : vector<64x32xf32>
    %441 = vector.broadcast %40 : vector<1x32xf32> to vector<64x32xf32>
    %442 = arith.mulf %440, %441 : vector<64x32xf32>
    %443 = vector.broadcast %41 : vector<1x32xf32> to vector<64x32xf32>
    %444 = arith.addf %442, %443 : vector<64x32xf32>
    %445 = arith.truncf %444 : vector<64x32xf32> to vector<64x32xbf16>
    %cst_151 = arith.constant dense<0.000000e+00> : vector<64x32xf32>
    %446 = tpu.matmul %445, %3, %cst_151 {dimension_numbers = #tpu.dot_dimension_numbers<[1], [0], [0], [1], [0, 0, 1, 1], [], []>} : vector<64x32xbf16>, vector<32x32xbf16>, vector<64x32xf32> -> vector<64x32xf32>
    %447 = vector.broadcast %34 : vector<1x32xf32> to vector<64x32xf32>
    %448 = arith.addf %446, %447 : vector<64x32xf32>
    %cst_152 = arith.constant 0.000000e+00 : f32
    %449 = vector.broadcast %cst_152 : f32 to vector<64x32xf32>
    %450 = arith.maximumf %448, %449 : vector<64x32xf32>
    %451 = arith.truncf %450 : vector<64x32xf32> to vector<64x32xbf16>
    %cst_153 = arith.constant dense<0.000000e+00> : vector<64x32xf32>
    %452 = tpu.matmul %451, %5, %cst_153 {dimension_numbers = #tpu.dot_dimension_numbers<[1], [0], [0], [1], [0, 0, 1, 1], [], []>} : vector<64x32xbf16>, vector<32x32xbf16>, vector<64x32xf32> -> vector<64x32xf32>
    %453 = vector.broadcast %35 : vector<1x32xf32> to vector<64x32xf32>
    %454 = arith.addf %452, %453 : vector<64x32xf32>
    %cst_154 = arith.constant 0.000000e+00 : f32
    %455 = vector.broadcast %cst_154 : f32 to vector<64x32xf32>
    %456 = arith.maximumf %454, %455 : vector<64x32xf32>
    %457 = arith.truncf %456 : vector<64x32xf32> to vector<64x32xbf16>
    %cst_155 = arith.constant dense<0.000000e+00> : vector<64x32xf32>
    %458 = tpu.matmul %457, %7, %cst_155 {dimension_numbers = #tpu.dot_dimension_numbers<[1], [0], [0], [1], [0, 0, 1, 1], [], []>} : vector<64x32xbf16>, vector<32x32xbf16>, vector<64x32xf32> -> vector<64x32xf32>
    %459 = vector.broadcast %36 : vector<1x32xf32> to vector<64x32xf32>
    %460 = arith.addf %458, %459 : vector<64x32xf32>
    %461 = arith.truncf %460 : vector<64x32xf32> to vector<64x32xbf16>
    %462 = vector.shape_cast %461 : vector<64x32xbf16> to vector<4x16x32xbf16>
    %cst_156 = arith.constant dense<0.000000e+00> : vector<4x8x32xf32>
    %463 = tpu.matmul %47, %462, %cst_156 {dimension_numbers = #tpu.dot_dimension_numbers<[2], [1], [1], [2], [0, 0, 0, 1, 1, 2], [0], [0]>} : vector<4x8x16xbf16>, vector<4x16x32xbf16>, vector<4x8x32xf32> -> vector<4x8x32xf32>
    %464 = vector.shape_cast %463 : vector<4x8x32xf32> to vector<32x32xf32>
    %465 = arith.truncf %464 : vector<32x32xf32> to vector<32x32xbf16>
    %cst_157 = arith.constant dense<0.000000e+00> : vector<32x128xf32>
    %466 = tpu.matmul %465, %21, %cst_157 {dimension_numbers = #tpu.dot_dimension_numbers<[1], [0], [0], [1], [0, 0, 1, 1], [], []>} : vector<32x32xbf16>, vector<32x128xbf16>, vector<32x128xf32> -> vector<32x128xf32>
    %467 = arith.truncf %357 : vector<32x32xf32> to vector<32x32xbf16>
    %cst_158 = arith.constant dense<0.000000e+00> : vector<32x128xf32>
    %468 = tpu.matmul %467, %25, %cst_158 {dimension_numbers = #tpu.dot_dimension_numbers<[1], [0], [0], [1], [0, 0, 1, 1], [], []>} : vector<32x32xbf16>, vector<32x128xbf16>, vector<32x128xf32> -> vector<32x128xf32>
    %469 = arith.addf %466, %468 : vector<32x128xf32>
    %470 = vector.broadcast %27 : vector<1x128xf32> to vector<32x128xf32>
    %471 = arith.addf %469, %470 : vector<32x128xf32>
    %472 = vector.extract_strided_slice %471 {offsets = [0, 0], sizes = [32, 96], strides = [1, 1]} : vector<32x128xf32> to vector<32x96xf32>
    %473 = arith.negf %472 : vector<32x96xf32>
    %474 = math.exp %473 : vector<32x96xf32>
    %cst_159 = arith.constant 1.000000e+00 : f32
    %475 = vector.broadcast %cst_159 : f32 to vector<32x96xf32>
    %476 = arith.addf %475, %474 : vector<32x96xf32>
    %477 = arith.divf %475, %476 : vector<32x96xf32>
    %478 = vector.extract_strided_slice %471 {offsets = [0, 96], sizes = [32, 32], strides = [1, 1]} : vector<32x128xf32> to vector<32x32xf32>
    %479 = math.tanh %478 : vector<32x32xf32>
    %480 = vector.extract_strided_slice %477 {offsets = [0, 0], sizes = [32, 32], strides = [1, 1]} : vector<32x96xf32> to vector<32x32xf32>
    %481 = vector.extract_strided_slice %477 {offsets = [0, 32], sizes = [32, 32], strides = [1, 1]} : vector<32x96xf32> to vector<32x32xf32>
    %482 = vector.extract_strided_slice %477 {offsets = [0, 64], sizes = [32, 32], strides = [1, 1]} : vector<32x96xf32> to vector<32x32xf32>
    %483 = arith.mulf %481, %355 : vector<32x32xf32>
    %484 = arith.mulf %480, %479 : vector<32x32xf32>
    %485 = arith.addf %483, %484 : vector<32x32xf32>
    %486 = math.tanh %485 : vector<32x32xf32>
    %487 = arith.mulf %482, %486 : vector<32x32xf32>
    %cst_160 = arith.constant dense<0.000000e+00> : vector<32xf32>
    %488 = vector.multi_reduction <add>, %487, %cst_160 [1] : vector<32x32xf32> to vector<32xf32>
    %489 = vector.shape_cast %488 : vector<32xf32> to vector<32x1xf32>
    %cst_161 = arith.constant 3.200000e+01 : f32
    %490 = vector.broadcast %cst_161 : f32 to vector<32x1xf32>
    %491 = arith.divf %489, %490 : vector<32x1xf32>
    %492 = vector.broadcast %491 : vector<32x1xf32> to vector<32x32xf32>
    %493 = arith.subf %487, %492 : vector<32x32xf32>
    %494 = arith.mulf %493, %493 : vector<32x32xf32>
    %cst_162 = arith.constant dense<0.000000e+00> : vector<32xf32>
    %495 = vector.multi_reduction <add>, %494, %cst_162 [1] : vector<32x32xf32> to vector<32xf32>
    %496 = vector.shape_cast %495 : vector<32xf32> to vector<32x1xf32>
    %cst_163 = arith.constant 3.200000e+01 : f32
    %497 = vector.broadcast %cst_163 : f32 to vector<32x1xf32>
    %498 = arith.divf %496, %497 : vector<32x1xf32>
    %499 = vector.broadcast %491 : vector<32x1xf32> to vector<32x32xf32>
    %500 = arith.subf %487, %499 : vector<32x32xf32>
    %cst_164 = arith.constant 9.99999974E-6 : f32
    %501 = vector.broadcast %cst_164 : f32 to vector<32x1xf32>
    %502 = arith.addf %498, %501 : vector<32x1xf32>
    %503 = math.rsqrt %502 : vector<32x1xf32>
    %504 = vector.broadcast %503 : vector<32x1xf32> to vector<32x32xf32>
    %505 = arith.mulf %500, %504 : vector<32x32xf32>
    %506 = vector.broadcast %42 : vector<1x32xf32> to vector<32x32xf32>
    %507 = arith.mulf %505, %506 : vector<32x32xf32>
    %508 = vector.broadcast %43 : vector<1x32xf32> to vector<32x32xf32>
    %509 = arith.addf %507, %508 : vector<32x32xf32>
    %510 = arith.truncf %444 : vector<64x32xf32> to vector<64x32xbf16>
    %cst_165 = arith.constant dense<0.000000e+00> : vector<64x32xf32>
    %511 = tpu.matmul %510, %15, %cst_165 {dimension_numbers = #tpu.dot_dimension_numbers<[1], [0], [0], [1], [0, 0, 1, 1], [], []>} : vector<64x32xbf16>, vector<32x32xbf16>, vector<64x32xf32> -> vector<64x32xf32>
    %512 = vector.broadcast %44 : vector<1x32xf32> to vector<64x32xf32>
    %513 = arith.addf %511, %512 : vector<64x32xf32>
    %cst_166 = arith.constant 0.000000e+00 : f32
    %514 = vector.broadcast %cst_166 : f32 to vector<64x32xf32>
    %515 = arith.maximumf %513, %514 : vector<64x32xf32>
    %516 = arith.truncf %515 : vector<64x32xf32> to vector<64x32xbf16>
    %cst_167 = arith.constant dense<0.000000e+00> : vector<64x32xf32>
    %517 = tpu.matmul %516, %17, %cst_167 {dimension_numbers = #tpu.dot_dimension_numbers<[1], [0], [0], [1], [0, 0, 1, 1], [], []>} : vector<64x32xbf16>, vector<32x32xbf16>, vector<64x32xf32> -> vector<64x32xf32>
    %518 = vector.broadcast %45 : vector<1x32xf32> to vector<64x32xf32>
    %519 = arith.addf %517, %518 : vector<64x32xf32>
    %cst_168 = arith.constant 0.000000e+00 : f32
    %520 = vector.broadcast %cst_168 : f32 to vector<64x32xf32>
    %521 = arith.maximumf %519, %520 : vector<64x32xf32>
    %522 = vector.shape_cast %521 : vector<64x32xf32> to vector<4x16x32xf32>
    %523 = vector.shape_cast %46 : vector<1x32xf32> to vector<1x1x32xf32>
    %524 = vector.broadcast %523 : vector<1x1x32xf32> to vector<4x16x32xf32>
    %525 = arith.mulf %522, %524 : vector<4x16x32xf32>
    %cst_169 = arith.constant dense<0.000000e+00> : vector<4x16xf32>
    %526 = vector.multi_reduction <add>, %525, %cst_169 [2] : vector<4x16x32xf32> to vector<4x16xf32>
    %527 = vector.shape_cast %526 : vector<4x16xf32> to vector<4x16x1xf32>
    %528 = vector.broadcast %1 : f32 to vector<4x16x1xf32>
    %529 = arith.addf %527, %528 : vector<4x16x1xf32>
    %530 = arith.mulf %529, %52 : vector<4x16x1xf32>
    %cst_170 = arith.constant dense<0.000000e+00> : vector<4x1xf32>
    %531 = vector.multi_reduction <add>, %530, %cst_170 [1] : vector<4x16x1xf32> to vector<4x1xf32>
    %532 = arith.negf %531 : vector<4x1xf32>
    %533 = math.exp %532 : vector<4x1xf32>
    %cst_171 = arith.constant 1.000000e+00 : f32
    %534 = vector.broadcast %cst_171 : f32 to vector<4x1xf32>
    %535 = arith.addf %534, %533 : vector<4x1xf32>
    %536 = arith.divf %534, %535 : vector<4x1xf32>
    %537 = vector.shape_cast %536 : vector<4x1xf32> to vector<4x1x1xf32>
    %c0_172 = arith.constant 0 : index
    %c0_173 = arith.constant 0 : index
    %c0_174 = arith.constant 0 : index
    %538 = vector.load %arg10[%c0_172, %c0_173, %c0_174] : memref<4x1x1xf32, #tpu.memory_space<vmem>>, vector<4x1x1xf32>
    tpu.vector_store %arg10[%c0_172, %c0_173, %c0_174], %537 {strides = array<i32>} : memref<4x1x1xf32, #tpu.memory_space<vmem>>, vector<4x1x1xf32>,
    return
  }
  func.func @transform_0(%arg0: i32) -> i32 {
    %c0_i32 = arith.constant 0 : i32
    %c0_i32_0 = arith.constant 0 : i32
    return %c0_i32 : i32
  }
  func.func @transform_1(%arg0: i32) -> (i32, i32, i32) {
    %c0_i32 = arith.constant 0 : i32
    %c0_i32_0 = arith.constant 0 : i32
    %c0_i32_1 = arith.constant 0 : i32
    return %arg0, %c0_i32, %c0_i32_0 : i32, i32, i32
  }
  func.func @transform_2(%arg0: i32) -> (i32, i32, i32) {
    %c0_i32 = arith.constant 0 : i32
    %c0_i32_0 = arith.constant 0 : i32
    %c0_i32_1 = arith.constant 0 : i32
    return %arg0, %c0_i32, %c0_i32_0 : i32, i32, i32
  }
  func.func @transform_3(%arg0: i32) -> (i32, i32, i32) {
    %c0_i32 = arith.constant 0 : i32
    %c0_i32_0 = arith.constant 0 : i32
    %c0_i32_1 = arith.constant 0 : i32
    return %arg0, %c0_i32, %c0_i32_0 : i32, i32, i32
  }
  func.func @transform_4(%arg0: i32) -> (i32, i32, i32) {
    %c0_i32 = arith.constant 0 : i32
    %c0_i32_0 = arith.constant 0 : i32
    %c0_i32_1 = arith.constant 0 : i32
    %c0_i32_2 = arith.constant 0 : i32
    return %c0_i32, %c0_i32_0, %c0_i32_1 : i32, i32, i32
  }
  func.func @transform_5(%arg0: i32) -> (i32, i32, i32) {
    %c0_i32 = arith.constant 0 : i32
    %c0_i32_0 = arith.constant 0 : i32
    %c0_i32_1 = arith.constant 0 : i32
    %c0_i32_2 = arith.constant 0 : i32
    return %c0_i32, %c0_i32_0, %c0_i32_1 : i32, i32, i32
  }
  func.func @transform_6(%arg0: i32) -> (i32, i32, i32) {
    %c0_i32 = arith.constant 0 : i32
    %c0_i32_0 = arith.constant 0 : i32
    %c0_i32_1 = arith.constant 0 : i32
    %c0_i32_2 = arith.constant 0 : i32
    return %c0_i32, %c0_i32_0, %c0_i32_1 : i32, i32, i32
  }
  func.func @transform_7(%arg0: i32) -> (i32, i32) {
    %c0_i32 = arith.constant 0 : i32
    %c0_i32_0 = arith.constant 0 : i32
    %c0_i32_1 = arith.constant 0 : i32
    return %c0_i32, %c0_i32_0 : i32, i32
  }
  func.func @transform_8(%arg0: i32) -> (i32, i32) {
    %c0_i32 = arith.constant 0 : i32
    %c0_i32_0 = arith.constant 0 : i32
    %c0_i32_1 = arith.constant 0 : i32
    return %c0_i32, %c0_i32_0 : i32, i32
  }
  func.func @transform_9(%arg0: i32) -> (i32, i32, i32) {
    %c0_i32 = arith.constant 0 : i32
    %c0_i32_0 = arith.constant 0 : i32
    %c0_i32_1 = arith.constant 0 : i32
    return %arg0, %c0_i32, %c0_i32_0 : i32, i32, i32
  }
}

</mosaic_0001>

<llo_original>
// kernel: tpu_custom_call.1
$region0: #{tpu_custom_call.1}
  #allocation0 [shape = 'u32[]', space=smem, size = 0x4, offset = 0x4, fixed_abs, tag = 'smem constant byte address 0x4 - core index']
  #allocation1 [shape = 'u32[144,128]{1,0:T(1,128)}', space=vmem, size = 0x12000, scoped, tag = 'internal scratch']
  %s0 = inlined_call_operand.vmem [shape: f32[2], index: 0, kind: input, shape index: {}]
  %s1 = inlined_call_operand.vmem [shape: bf16[4,8,16], index: 1, kind: input, shape index: {}]
  %s2 = inlined_call_operand.vmem [shape: f32[4,8,2], index: 2, kind: input, shape index: {}]
  %s3 = inlined_call_operand.vmem [shape: f32[4,16,1], index: 3, kind: input, shape index: {}]
  %s4 = inlined_call_operand.hbm [shape: bf16[8,32,32], index: 4, kind: input, shape index: {}]
  %s5 = inlined_call_operand.vmem [shape: bf16[2,32,128], index: 5, kind: input, shape index: {}]
  %s6 = inlined_call_operand.vmem [shape: bf16[2,32,128], index: 6, kind: input, shape index: {}]
  %s7 = inlined_call_operand.vmem [shape: f32[2,128], index: 7, kind: input, shape index: {}]
  %s8 = inlined_call_operand.vmem [shape: f32[19,32], index: 8, kind: input, shape index: {}]
  %s9 = inlined_call_operand.vmem [shape: f32[4,1,1], index: 9, kind: output, shape index: {}]
  %s10 = sld [smem:[#allocation0]]
  $region54: #{tpu_custom_call.1} parent=0
    _
  %s12 = ssub.s32 1, %s10
  %s13 = scalar_select 0, %s12, %s10
  $region1: #{tpu_custom_call.1} parent=0
    #allocation2 [shape = 'u8[512]{0}', space=smem, size = 0x200, scoped, tag = 'input window, operand 0, single buffered']
    #allocation3 [shape = 's32[1]{0}', space=sflag, size = 0x4, scoped, tag = 'scoped memory for tpu_custom_call.1']
    #allocation4 [shape = 's32[1]{0}', space=sflag, size = 0x4, scoped, tag = 'scoped memory for tpu_custom_call.1']
    #allocation5 [shape = 'u8[65536]{0}', space=vmem, size = 0x10000, scoped, tag = 'input window, operand 4, single buffered']
    %14 = vsyncpa [#allocation4], 0
    %15 = vsyncpa [#allocation3], 0
    // Predicated region
    $region2: #{tpu_custom_call.1} parent=1 // pred_check
      _
    $region3: #{tpu_custom_call.1} parent=1 // pred_check_branch
      %17 = sbr.rel (0) target = $region5
    $region4: #{tpu_custom_call.1} parent=1 // pred_region
      %s19 = ssub.s32 16, 16
      %20 = vsyncadd [#allocation4], %s19
      %s22 = sshll.u32 %s0, 4
      %s23 = int_to_ptr.vmem [resolvable:$true] %s22
      %25 = dma.vmem_to_smem %s23, 16, [#allocation2], [#allocation4]
    $region5: #{tpu_custom_call.1} parent=1 // pred_fallthru
      _
    // Predicated region
    $region6: #{tpu_custom_call.1} parent=1 // pred_check
      _
    $region7: #{tpu_custom_call.1} parent=1 // pred_check_branch
      %27 = sbr.rel (0) target = $region9
    $region8: #{tpu_custom_call.1} parent=1 // pred_region
      _
    $region9: #{tpu_custom_call.1} parent=1 // pred_fallthru
      _
    // Predicated region
    $region10: #{tpu_custom_call.1} parent=1 // pred_check
      _
    $region11: #{tpu_custom_call.1} parent=1 // pred_check_branch
      %29 = sbr.rel (0) target = $region13
    $region12: #{tpu_custom_call.1} parent=1 // pred_region
      _
    $region13: #{tpu_custom_call.1} parent=1 // pred_fallthru
      _
    // Predicated region
    $region14: #{tpu_custom_call.1} parent=1 // pred_check
      _
    $region15: #{tpu_custom_call.1} parent=1 // pred_check_branch
      %31 = sbr.rel (0) target = $region17
    $region16: #{tpu_custom_call.1} parent=1 // pred_region
      _
    $region17: #{tpu_custom_call.1} parent=1 // pred_fallthru
      _
    // Predicated region
    $region18: #{tpu_custom_call.1} parent=1 // pred_check
      _
    $region19: #{tpu_custom_call.1} parent=1 // pred_check_branch
      %33 = sbr.rel (0) target = $region21
    $region20: #{tpu_custom_call.1} parent=1 // pred_region
      %s35 = ssub.s32 2048, 2048
      %36 = vsyncadd [#allocation3], %s35
      %s37 = sshll.u32 [#allocation5], 4
      %s38 = int_to_ptr.vmem [resolvable:$true] %s37
      %43 = dma.hbm_to_vmem [thread:$0]  %s4, 2048, %s38, [#allocation3], 64, 64, 4
    $region21: #{tpu_custom_call.1} parent=1 // pred_fallthru
      _
    // Predicated region
    $region22: #{tpu_custom_call.1} parent=1 // pred_check
      _
    $region23: #{tpu_custom_call.1} parent=1 // pred_check_branch
      %45 = sbr.rel (0) target = $region25
    $region24: #{tpu_custom_call.1} parent=1 // pred_region
      _
    $region25: #{tpu_custom_call.1} parent=1 // pred_fallthru
      _
    // Predicated region
    $region26: #{tpu_custom_call.1} parent=1 // pred_check
      _
    $region27: #{tpu_custom_call.1} parent=1 // pred_check_branch
      %47 = sbr.rel (0) target = $region29
    $region28: #{tpu_custom_call.1} parent=1 // pred_region
      _
    $region29: #{tpu_custom_call.1} parent=1 // pred_fallthru
      _
    // Predicated region
    $region30: #{tpu_custom_call.1} parent=1 // pred_check
      _
    $region31: #{tpu_custom_call.1} parent=1 // pred_check_branch
      %49 = sbr.rel (0) target = $region33
    $region32: #{tpu_custom_call.1} parent=1 // pred_region
      _
    $region33: #{tpu_custom_call.1} parent=1 // pred_fallthru
      _
    // Predicated region
    $region34: #{tpu_custom_call.1} parent=1 // pred_check
      _
    $region35: #{tpu_custom_call.1} parent=1 // pred_check_branch
      %51 = sbr.rel (0) target = $region37
    $region36: #{tpu_custom_call.1} parent=1 // pred_region
      _
    $region37: #{tpu_custom_call.1} parent=1 // pred_fallthru
      _
    // Predicated region
    $region38: #{tpu_custom_call.1} parent=1 // pred_check
      _
    $region39: #{tpu_custom_call.1} parent=1 // pred_check_branch
      %53 = sbr.rel (0) target = $region41
    $region40: #{tpu_custom_call.1} parent=1 // pred_region
      %54 = dma.done [#allocation4], 16
    $region41: #{tpu_custom_call.1} parent=1 // pred_fallthru
      _
    // Predicated region
    $region42: #{tpu_custom_call.1} parent=1 // pred_check
      _
    $region43: #{tpu_custom_call.1} parent=1 // pred_check_branch
      %56 = sbr.rel (0) target = $region45
    $region44: #{tpu_custom_call.1} parent=1 // pred_region
      %57 = dma.done [#allocation3], 2048
    $region45: #{tpu_custom_call.1} parent=1 // pred_fallthru
      _
    %58 = sfence
    %s60 = sld [smem:[#allocation2]]
    %s61 = sld [smem:[#allocation2 + $0x1]]
    %v62 = vld [vmem:[#allocation5] sm:$0xf]
    %v63 = vld [vmem:[#allocation5 + $0x4] sm:$0xf]
    %v64 = vld [vmem:[#allocation5 + $0x8] sm:$0xf]
    %v65 = vld [vmem:[#allocation5 + $0xc] sm:$0xf]
    %s66 = scalar_lea.vmem [#allocation5], 16
    %v67 = vld [vmem:[%s66] sm:$0xf]
    %v68 = vld [vmem:[%s66 + $0x4] sm:$0xf]
    %v69 = vld [vmem:[%s66 + $0x8] sm:$0xf]
    %v70 = vld [vmem:[%s66 + $0xc] sm:$0xf]
    %s71 = scalar_lea.vmem [#allocation5], 32
    %v72 = vld [vmem:[%s71] sm:$0xf]
    %v73 = vld [vmem:[%s71 + $0x4] sm:$0xf]
    %v74 = vld [vmem:[%s71 + $0x8] sm:$0xf]
    %v75 = vld [vmem:[%s71 + $0xc] sm:$0xf]
    %s76 = scalar_lea.vmem [#allocation5], 48
    %v77 = vld [vmem:[%s76] sm:$0xf]
    %v78 = vld [vmem:[%s76 + $0x4] sm:$0xf]
    %v79 = vld [vmem:[%s76 + $0x8] sm:$0xf]
    %v80 = vld [vmem:[%s76 + $0xc] sm:$0xf]
    %s81 = scalar_lea.vmem [#allocation5], 64
    %v82 = vld [vmem:[%s81] sm:$0xf]
    %v83 = vld [vmem:[%s81 + $0x4] sm:$0xf]
    %v84 = vld [vmem:[%s81 + $0x8] sm:$0xf]
    %v85 = vld [vmem:[%s81 + $0xc] sm:$0xf]
    %s86 = scalar_lea.vmem [#allocation5], 80
    %v87 = vld [vmem:[%s86] sm:$0xf]
    %v88 = vld [vmem:[%s86 + $0x4] sm:$0xf]
    %v89 = vld [vmem:[%s86 + $0x8] sm:$0xf]
    %v90 = vld [vmem:[%s86 + $0xc] sm:$0xf]
    %s91 = scalar_lea.vmem [#allocation5], 96
    %v92 = vld [vmem:[%s91] sm:$0xf]
    %v93 = vld [vmem:[%s91 + $0x4] sm:$0xf]
    %v94 = vld [vmem:[%s91 + $0x8] sm:$0xf]
    %v95 = vld [vmem:[%s91 + $0xc] sm:$0xf]
    %s96 = scalar_lea.vmem [#allocation5], 112
    %v97 = vld [vmem:[%s96] sm:$0xf]
    %v98 = vld [vmem:[%s96 + $0x4] sm:$0xf]
    %v99 = vld [vmem:[%s96 + $0x8] sm:$0xf]
    %v100 = vld [vmem:[%s96 + $0xc] sm:$0xf]
    %v101 = vld [vmem:[%s5] sm:$0xf]
    %v102 = vld [vmem:[%s5 + $0x4] sm:$0xf]
    %v103 = vld [vmem:[%s5 + $0x8] sm:$0xf]
    %v104 = vld [vmem:[%s5 + $0xc] sm:$0xf]
    %s105 = scalar_lea.vmem %s5, 16
    %v106 = vld [vmem:[%s105] sm:$0xf]
    %v107 = vld [vmem:[%s105 + $0x4] sm:$0xf]
    %v108 = vld [vmem:[%s105 + $0x8] sm:$0xf]
    %v109 = vld [vmem:[%s105 + $0xc] sm:$0xf]
    %v110 = vld [vmem:[%s6] sm:$0xf]
    %v111 = vld [vmem:[%s6 + $0x4] sm:$0xf]
    %v112 = vld [vmem:[%s6 + $0x8] sm:$0xf]
    %v113 = vld [vmem:[%s6 + $0xc] sm:$0xf]
    %s114 = scalar_lea.vmem %s6, 16
    %v115 = vld [vmem:[%s114] sm:$0xf]
    %v116 = vld [vmem:[%s114 + $0x4] sm:$0xf]
    %v117 = vld [vmem:[%s114 + $0x8] sm:$0xf]
    %v118 = vld [vmem:[%s114 + $0xc] sm:$0xf]
    %v119 = vld [vmem:[%s7] sm:$0x1]
    %v120 = vld [vmem:[%s7 + $0x1] sm:$0x1]
    %v121 = vld [vmem:[%s8] sm:$0x1]
    %v122 = vld [vmem:[%s8 + $0x1] sm:$0x1]
    %v123 = vld [vmem:[%s8 + $0x2] sm:$0x1]
    %v124 = vld [vmem:[%s8 + $0x3] sm:$0x1]
    %v125 = vld [vmem:[%s8 + $0x4] sm:$0x1]
    %v126 = vld [vmem:[%s8 + $0x5] sm:$0x1]
    %v127 = vld [vmem:[%s8 + $0x6] sm:$0x1]
    %v128 = vld [vmem:[%s8 + $0x7] sm:$0x1]
    %v129 = vld [vmem:[%s8 + $0x8] sm:$0x1]
    %v130 = vld [vmem:[%s8 + $0x9] sm:$0x1]
    %v131 = vld [vmem:[%s8 + $0xa] sm:$0x1]
    %v132 = vld [vmem:[%s8 + $0xb] sm:$0x1]
    %v133 = vld [vmem:[%s8 + $0xc] sm:$0x1]
    %v134 = vld [vmem:[%s8 + $0xd] sm:$0x1]
    %v135 = vld [vmem:[%s8 + $0xe] sm:$0x1]
    %v136 = vld [vmem:[%s8 + $0xf] sm:$0x1]
    %v137 = vld [vmem:[%s8 + $0x10] sm:$0x1]
    %v138 = vld [vmem:[%s8 + $0x11] sm:$0x1]
    %v139 = vld [vmem:[%s8 + $0x12] sm:$0x1]
    %v140 = vld [vmem:[%s1] sm:$0xf]
    %v141 = vld [vmem:[%s1 + $0x4] sm:$0xf]
    %v142 = vld [vmem:[%s1 + $0x8] sm:$0xf]
    %v143 = vld [vmem:[%s1 + $0xc] sm:$0xf]
    %v144 = vunpack.c.l.bf16 %v140
    %v145 = vunpack.c.l.bf16 %v141
    %v146 = vunpack.c.l.bf16 %v142
    %v147 = vunpack.c.l.bf16 %v143
    %148 = vxpose.xlu0.b32.start [1/16] %v144, 128
    %149 = vxpose.xlu0.b32.cont [2/16] 0.0, 128
    %150 = vxpose.xlu0.b32.cont [3/16] 0.0, 128
    %151 = vxpose.xlu0.b32.cont [4/16] 0.0, 128
    %152 = vxpose.xlu0.b32.cont [5/16] 0.0, 128
    %153 = vxpose.xlu0.b32.cont [6/16] 0.0, 128
    %154 = vxpose.xlu0.b32.cont [7/16] 0.0, 128
    %155 = vxpose.xlu0.b32.cont [8/16] 0.0, 128
    %156 = vxpose.xlu0.b32.cont [9/16] 0.0, 128
    %157 = vxpose.xlu0.b32.cont [10/16] 0.0, 128
    %158 = vxpose.xlu0.b32.cont [11/16] 0.0, 128
    %159 = vxpose.xlu0.b32.cont [12/16] 0.0, 128
    %160 = vxpose.xlu0.b32.cont [13/16] 0.0, 128
    %161 = vxpose.xlu0.b32.cont [14/16] 0.0, 128
    %162 = vxpose.xlu0.b32.cont [15/16] 0.0, 128
    %163 = vxpose.xlu0.b32.end [16/16] 0.0, 128
    %v164 = vpop.trf.xlu0
    %v165 = vpop.trf.xlu0
    %v166 = vpop.trf.xlu0
    %v167 = vpop.trf.xlu0
    %v168 = vpop.trf.xlu0
    %v169 = vpop.trf.xlu0
    %v170 = vpop.trf.xlu0
    %v171 = vpop.trf.xlu0
    %v172 = vpop.trf.xlu0
    %v173 = vpop.trf.xlu0
    %v174 = vpop.trf.xlu0
    %v175 = vpop.trf.xlu0
    %v176 = vpop.trf.xlu0
    %v177 = vpop.trf.xlu0
    %v178 = vpop.trf.xlu0
    %v179 = vpop.trf.xlu0
    %180 = vxpose.xlu0.b32.start [1/16] %v145, 128
    %181 = vxpose.xlu0.b32.cont [2/16] 0.0, 128
    %182 = vxpose.xlu0.b32.cont [3/16] 0.0, 128
    %183 = vxpose.xlu0.b32.cont [4/16] 0.0, 128
    %184 = vxpose.xlu0.b32.cont [5/16] 0.0, 128
    %185 = vxpose.xlu0.b32.cont [6/16] 0.0, 128
    %186 = vxpose.xlu0.b32.cont [7/16] 0.0, 128
    %187 = vxpose.xlu0.b32.cont [8/16] 0.0, 128
    %188 = vxpose.xlu0.b32.cont [9/16] 0.0, 128
    %189 = vxpose.xlu0.b32.cont [10/16] 0.0, 128
    %190 = vxpose.xlu0.b32.cont [11/16] 0.0, 128
    %191 = vxpose.xlu0.b32.cont [12/16] 0.0, 128
    %192 = vxpose.xlu0.b32.cont [13/16] 0.0, 128
    %193 = vxpose.xlu0.b32.cont [14/16] 0.0, 128
    %194 = vxpose.xlu0.b32.cont [15/16] 0.0, 128
    %195 = vxpose.xlu0.b32.end [16/16] 0.0, 128
    %v196 = vpop.trf.xlu0
    %v197 = vpop.trf.xlu0
    %v198 = vpop.trf.xlu0
    %v199 = vpop.trf.xlu0
    %v200 = vpop.trf.xlu0
    %v201 = vpop.trf.xlu0
    %v202 = vpop.trf.xlu0
    %v203 = vpop.trf.xlu0
    %v204 = vpop.trf.xlu0
    %v205 = vpop.trf.xlu0
    %v206 = vpop.trf.xlu0
    %v207 = vpop.trf.xlu0
    %v208 = vpop.trf.xlu0
    %v209 = vpop.trf.xlu0
    %v210 = vpop.trf.xlu0
    %v211 = vpop.trf.xlu0
    %212 = vxpose.xlu0.b32.start [1/16] %v146, 128
    %213 = vxpose.xlu0.b32.cont [2/16] 0.0, 128
    %214 = vxpose.xlu0.b32.cont [3/16] 0.0, 128
    %215 = vxpose.xlu0.b32.cont [4/16] 0.0, 128
    %216 = vxpose.xlu0.b32.cont [5/16] 0.0, 128
    %217 = vxpose.xlu0.b32.cont [6/16] 0.0, 128
    %218 = vxpose.xlu0.b32.cont [7/16] 0.0, 128
    %219 = vxpose.xlu0.b32.cont [8/16] 0.0, 128
    %220 = vxpose.xlu0.b32.cont [9/16] 0.0, 128
    %221 = vxpose.xlu0.b32.cont [10/16] 0.0, 128
    %222 = vxpose.xlu0.b32.cont [11/16] 0.0, 128
    %223 = vxpose.xlu0.b32.cont [12/16] 0.0, 128
    %224 = vxpose.xlu0.b32.cont [13/16] 0.0, 128
    %225 = vxpose.xlu0.b32.cont [14/16] 0.0, 128
    %226 = vxpose.xlu0.b32.cont [15/16] 0.0, 128
    %227 = vxpose.xlu0.b32.end [16/16] 0.0, 128
    %v228 = vpop.trf.xlu0
    %v229 = vpop.trf.xlu0
    %v230 = vpop.trf.xlu0
    %v231 = vpop.trf.xlu0
    %v232 = vpop.trf.xlu0
    %v233 = vpop.trf.xlu0
    %v234 = vpop.trf.xlu0
    %v235 = vpop.trf.xlu0
    %v236 = vpop.trf.xlu0
    %v237 = vpop.trf.xlu0
    %v238 = vpop.trf.xlu0
    %v239 = vpop.trf.xlu0
    %v240 = vpop.trf.xlu0
    %v241 = vpop.trf.xlu0
    %v242 = vpop.trf.xlu0
    %v243 = vpop.trf.xlu0
    %244 = vxpose.xlu0.b32.start [1/16] %v147, 128
    %245 = vxpose.xlu0.b32.cont [2/16] 0.0, 128
    %246 = vxpose.xlu0.b32.cont [3/16] 0.0, 128
    %247 = vxpose.xlu0.b32.cont [4/16] 0.0, 128
    %248 = vxpose.xlu0.b32.cont [5/16] 0.0, 128
    %249 = vxpose.xlu0.b32.cont [6/16] 0.0, 128
    %250 = vxpose.xlu0.b32.cont [7/16] 0.0, 128
    %251 = vxpose.xlu0.b32.cont [8/16] 0.0, 128
    %252 = vxpose.xlu0.b32.cont [9/16] 0.0, 128
    %253 = vxpose.xlu0.b32.cont [10/16] 0.0, 128
    %254 = vxpose.xlu0.b32.cont [11/16] 0.0, 128
    %255 = vxpose.xlu0.b32.cont [12/16] 0.0, 128
    %256 = vxpose.xlu0.b32.cont [13/16] 0.0, 128
    %257 = vxpose.xlu0.b32.cont [14/16] 0.0, 128
    %258 = vxpose.xlu0.b32.cont [15/16] 0.0, 128
    %259 = vxpose.xlu0.b32.end [16/16] 0.0, 128
    %v260 = vpop.trf.xlu0
    %v261 = vpop.trf.xlu0
    %v262 = vpop.trf.xlu0
    %v263 = vpop.trf.xlu0
    %v264 = vpop.trf.xlu0
    %v265 = vpop.trf.xlu0
    %v266 = vpop.trf.xlu0
    %v267 = vpop.trf.xlu0
    %v268 = vpop.trf.xlu0
    %v269 = vpop.trf.xlu0
    %v270 = vpop.trf.xlu0
    %v271 = vpop.trf.xlu0
    %v272 = vpop.trf.xlu0
    %v273 = vpop.trf.xlu0
    %v274 = vpop.trf.xlu0
    %v275 = vpop.trf.xlu0
    %v276 = vpack.c.bf16 %v165, %v164
    %v277 = vpack.c.bf16 %v197, %v196
    %v278 = vpack.c.bf16 %v229, %v228
    %v279 = vpack.c.bf16 %v261, %v260
    %v280 = vld [vmem:[%s2] sm:$0xff]
    %v281 = vld [vmem:[%s2 + $0x8] sm:$0xff]
    %v282 = vld [vmem:[%s2 + $0x10] sm:$0xff]
    %v283 = vld [vmem:[%s2 + $0x18] sm:$0xff]
    %v284 = vld [vmem:[%s3] sm:$0xff]
    %v285 = vld [vmem:[%s3 + $0x8] sm:$0xff]
    %v286 = vld [vmem:[%s3 + $0x10] sm:$0xff]
    %v287 = vld [vmem:[%s3 + $0x18] sm:$0xff]
    %v288 = vld [vmem:[%s3 + $0x20] sm:$0xff]
    %v289 = vld [vmem:[%s3 + $0x28] sm:$0xff]
    %v290 = vld [vmem:[%s3 + $0x30] sm:$0xff]
    %v291 = vld [vmem:[%s3 + $0x38] sm:$0xff]
    %v292 = vstv %s60
    %v293 = vmul.f32 %v292, %v122
    %v294 = vadd.f32 %v121, %v293
    %v295 = vadd.f32 %v294, %v123
    %v296 = vlaneseq
    %v297 = vshrl.u32 %v296, 7
    %v298 = vsub.s32 0, %v297
    %v299 = vrot.slane %v295, %v298
    %301 = vset.pattern.permute.xlu0 0
    %302 = vperm.xlu0 %301, %v280
    %v303 = vpop.permute.xlu0 %302
    %306 = vset.pattern.permute.xlu0 0
    %307 = vperm.xlu0 %306, %v281
    %v308 = vpop.permute.xlu0 %307
    %311 = vset.pattern.permute.xlu0 0
    %312 = vperm.xlu0 %311, %v282
    %v313 = vpop.permute.xlu0 %312
    %316 = vset.pattern.permute.xlu0 0
    %317 = vperm.xlu0 %316, %v283
    %v318 = vpop.permute.xlu0 %317
    %v320 = vlaneseq
    %v321 = vshrl.u32 %v320, 7
    %v322 = vsub.s32 0, %v321
    %v323 = vrot.slane %v124, %v322
    %v324 = vmul.f32 %v303, %v323
    %v325 = vmul.f32 %v308, %v323
    %v326 = vmul.f32 %v313, %v323
    %v327 = vmul.f32 %v318, %v323
    %328 = vset.pattern.permute.xlu0 1
    %329 = vperm.xlu0 %328, %v280
    %v330 = vpop.permute.xlu0 %329
    %332 = vset.pattern.permute.xlu0 1
    %333 = vperm.xlu0 %332, %v281
    %v334 = vpop.permute.xlu0 %333
    %336 = vset.pattern.permute.xlu0 1
    %337 = vperm.xlu0 %336, %v282
    %v338 = vpop.permute.xlu0 %337
    %340 = vset.pattern.permute.xlu0 1
    %341 = vperm.xlu0 %340, %v283
    %v342 = vpop.permute.xlu0 %341
    %v344 = vlaneseq
    %v345 = vshrl.u32 %v344, 7
    %v346 = vsub.s32 0, %v345
    %v347 = vrot.slane %v125, %v346
    %v348 = vmul.f32 %v330, %v347
    %v349 = vmul.f32 %v334, %v347
    %v350 = vmul.f32 %v338, %v347
    %v351 = vmul.f32 %v342, %v347
    %v352 = vadd.f32 %v324, %v348
    %v353 = vadd.f32 %v325, %v349
    %v354 = vadd.f32 %v326, %v350
    %v355 = vadd.f32 %v327, %v351
    %v356 = vlaneseq
    %v357 = vshrl.u32 %v356, 7
    %v358 = vsub.s32 0, %v357
    %v359 = vrot.slane %v126, %v358
    %v360 = vadd.f32 %v352, %v359
    %v361 = vadd.f32 %v353, %v359
    %v362 = vadd.f32 %v354, %v359
    %v363 = vadd.f32 %v355, %v359
    %vm364 = vcmask 261120
    %v365 = vsel %vm364, %v360, 0.0
    %366 = vadd.xlane.f32.xlu0 %v365
    %v367 = vpop.xlane.xlu0 %366
    %v368 = vsel %vm364, %v361, 0.0
    %369 = vadd.xlane.f32.xlu0 %v368
    %v370 = vpop.xlane.xlu0 %369
    %v371 = vsel %vm364, %v362, 0.0
    %372 = vadd.xlane.f32.xlu0 %v371
    %v373 = vpop.xlane.xlu0 %372
    %v374 = vsel %vm364, %v363, 0.0
    %375 = vadd.xlane.f32.xlu0 %v374
    %v376 = vpop.xlane.xlu0 %375
    %v377 = vrcp.pop 32.0
    %v378 = vmul.f32 %v367, %v377
    %v379 = vmul.f32 %v370, %v377
    %v380 = vmul.f32 %v373, %v377
    %v381 = vmul.f32 %v376, %v377
    %v382 = vsub.f32 %v360, %v378
    %v383 = vsub.f32 %v361, %v379
    %v384 = vsub.f32 %v362, %v380
    %v385 = vsub.f32 %v363, %v381
    %v386 = vmul.f32 %v382, %v382
    %v387 = vmul.f32 %v383, %v383
    %v388 = vmul.f32 %v384, %v384
    %v389 = vmul.f32 %v385, %v385
    %v390 = vsel %vm364, %v386, 0.0
    %391 = vadd.xlane.f32.xlu0 %v390
    %v392 = vpop.xlane.xlu0 %391
    %v393 = vsel %vm364, %v387, 0.0
    %394 = vadd.xlane.f32.xlu0 %v393
    %v395 = vpop.xlane.xlu0 %394
    %v396 = vsel %vm364, %v388, 0.0
    %397 = vadd.xlane.f32.xlu0 %v396
    %v398 = vpop.xlane.xlu0 %397
    %v399 = vsel %vm364, %v389, 0.0
    %400 = vadd.xlane.f32.xlu0 %v399
    %v401 = vpop.xlane.xlu0 %400
    %v402 = vmul.f32 %v392, %v377
    %v403 = vmul.f32 %v395, %v377
    %v404 = vmul.f32 %v398, %v377
    %v405 = vmul.f32 %v401, %v377
    %v406 = vadd.f32 %v402, 1e-05
    %v407 = vadd.f32 %v403, 1e-05
    %v408 = vadd.f32 %v404, 1e-05
    %v409 = vadd.f32 %v405, 1e-05
    %v410 = vrsqrt.pop %v406
    %v411 = vrsqrt.pop %v407
    %v412 = vrsqrt.pop %v408
    %v413 = vrsqrt.pop %v409
    %v414 = vmul.f32 %v382, %v410
    %v415 = vmul.f32 %v383, %v411
    %v416 = vmul.f32 %v384, %v412
    %v417 = vmul.f32 %v385, %v413
    %v418 = vlaneseq
    %v419 = vshrl.u32 %v418, 7
    %v420 = vsub.s32 0, %v419
    %v421 = vrot.slane %v135, %v420
    %v422 = vmul.f32 %v414, %v421
    %v423 = vmul.f32 %v415, %v421
    %v424 = vmul.f32 %v416, %v421
    %v425 = vmul.f32 %v417, %v421
    %v426 = vlaneseq
    %v427 = vshrl.u32 %v426, 7
    %v428 = vsub.s32 0, %v427
    %v429 = vrot.slane %v136, %v428
    %v430 = vadd.f32 %v422, %v429
    %v431 = vadd.f32 %v423, %v429
    %v432 = vadd.f32 %v424, %v429
    %v433 = vadd.f32 %v425, %v429
    %v434 = vpack.c.bf16 %v431, %v430
    %v435 = vpack.c.bf16 %v433, %v432
    %v436 = vlaneseq
    %v437 = vshrl.u32 %v436, 7
    %v438 = vsub.s32 0, %v437
    %v439 = vrot.slane %v130, %v438
    %v444 = vunpack.c.l.b16 %v77
    %v445 = vunpack.c.l.b16 %v78
    %v446 = vunpack.c.l.b16 %v79
    %v447 = vunpack.c.l.b16 %v80
    %v448 = vpack.c.b16 %v445, %v444
    %v449 = vpack.c.b16 %v447, %v446
    %v453 = vsel %vm364, %v434, 0
    %v456 = vsel %vm364, %v435, 0
    %458 = vmatprep.subr.bf16.mxu0 0
    %459 = vmatpush1.bf16.msra.mxu0 0
    %460 = vmatprep.subr.bf16.mxu0 0
    %461 = vmatpush1.bf16.msra.mxu0 0
    %462 = vmatprep.subr.bf16.mxu0 0
    %463 = vmatpush1.bf16.msra.mxu0 0
    %464 = vmatprep.subr.bf16.mxu0 0
    %465 = vmatpush1.bf16.msra.mxu0 0
    %466 = vmatprep.subr.bf16.mxu0 0
    %467 = vmatpush1.bf16.msra.mxu0 0
    %468 = vmatprep.subr.bf16.mxu0 0
    %469 = vmatpush1.bf16.msra.mxu0 0
    %470 = vmatprep.subr.bf16.mxu0 0
    %471 = vmatpush1.bf16.msra.mxu0 %v449
    %472 = vmatprep.subr.bf16.mxu0 0
    %473 = vmatpush1.bf16.msra.mxu0 %v448
    %474 = vmatprep.subr.bf16.mxu0 0
    %475 = vmatpush2.bf16.msra.mxu0 0
    %476 = vmatprep.subr.bf16.mxu0 0
    %477 = vmatpush2.bf16.msra.mxu0 0
    %478 = vmatprep.subr.bf16.mxu0 0
    %479 = vmatpush2.bf16.msra.mxu0 0
    %480 = vmatprep.subr.bf16.mxu0 0
    %481 = vmatpush2.bf16.msra.mxu0 0
    %482 = vmatprep.subr.bf16.mxu0 0
    %483 = vmatpush2.bf16.msra.mxu0 0
    %484 = vmatprep.subr.bf16.mxu0 0
    %485 = vmatpush2.bf16.msra.mxu0 0
    %486 = vmatprep.subr.bf16.mxu0 0
    %487 = vmatpush2.bf16.msra.mxu0 0
    %488 = vmatprep.subr.bf16.mxu0 0
    %489 = vmatpush2.bf16.msra.mxu0 0
    %490 = vmatprep.mubr.bf16.mxu0 0
    %491 = vmatmul.mubr.bf16.gmra.mxu0 %v453
    %v492 = vpop.f32.mrf.mxu0
    %v493 = vadd.f32 %v439, %v492
    %v494 = vpop.f32.mrf.mxu0
    %v495 = vpop.f32.mrf.mxu0
    %v496 = vadd.f32 %v439, %v495
    %v497 = vpop.f32.mrf.mxu0
    %498 = vmatprep.mubr.bf16.mxu0 0
    %499 = vmatmul.mubr.bf16.gmra.mxu0 %v456
    %v500 = vpop.f32.mrf.mxu0
    %v501 = vadd.f32 %v439, %v500
    %v502 = vpop.f32.mrf.mxu0
    %v503 = vpop.f32.mrf.mxu0
    %v504 = vadd.f32 %v439, %v503
    %v505 = vpop.f32.mrf.mxu0
    %506 = vdwg.mxu0
    %v507 = vmax.f32 %v493, 0.0
    %v508 = vmax.f32 %v496, 0.0
    %v509 = vmax.f32 %v501, 0.0
    %v510 = vmax.f32 %v504, 0.0
    %v511 = vpack.c.bf16 %v508, %v507
    %v512 = vpack.c.bf16 %v510, %v509
    %v513 = vlaneseq
    %v514 = vshrl.u32 %v513, 7
    %v515 = vsub.s32 0, %v514
    %v516 = vrot.slane %v131, %v515
    %v521 = vunpack.c.l.b16 %v82
    %v522 = vunpack.c.l.b16 %v83
    %v523 = vunpack.c.l.b16 %v84
    %v524 = vunpack.c.l.b16 %v85
    %v525 = vpack.c.b16 %v522, %v521
    %v526 = vpack.c.b16 %v524, %v523
    %v530 = vsel %vm364, %v511, 0
    %v533 = vsel %vm364, %v512, 0
    %535 = vmatprep.subr.bf16.mxu0 0
    %536 = vmatpush1.bf16.msra.mxu0 0
    %537 = vmatprep.subr.bf16.mxu0 0
    %538 = vmatpush1.bf16.msra.mxu0 0
    %539 = vmatprep.subr.bf16.mxu0 0
    %540 = vmatpush1.bf16.msra.mxu0 0
    %541 = vmatprep.subr.bf16.mxu0 0
    %542 = vmatpush1.bf16.msra.mxu0 0
    %543 = vmatprep.subr.bf16.mxu0 0
    %544 = vmatpush1.bf16.msra.mxu0 0
    %545 = vmatprep.subr.bf16.mxu0 0
    %546 = vmatpush1.bf16.msra.mxu0 0
    %547 = vmatprep.subr.bf16.mxu0 0
    %548 = vmatpush1.bf16.msra.mxu0 %v526
    %549 = vmatprep.subr.bf16.mxu0 0
    %550 = vmatpush1.bf16.msra.mxu0 %v525
    %551 = vmatprep.subr.bf16.mxu0 0
    %552 = vmatpush2.bf16.msra.mxu0 0
    %553 = vmatprep.subr.bf16.mxu0 0
    %554 = vmatpush2.bf16.msra.mxu0 0
    %555 = vmatprep.subr.bf16.mxu0 0
    %556 = vmatpush2.bf16.msra.mxu0 0
    %557 = vmatprep.subr.bf16.mxu0 0
    %558 = vmatpush2.bf16.msra.mxu0 0
    %559 = vmatprep.subr.bf16.mxu0 0
    %560 = vmatpush2.bf16.msra.mxu0 0
    %561 = vmatprep.subr.bf16.mxu0 0
    %562 = vmatpush2.bf16.msra.mxu0 0
    %563 = vmatprep.subr.bf16.mxu0 0
    %564 = vmatpush2.bf16.msra.mxu0 0
    %565 = vmatprep.subr.bf16.mxu0 0
    %566 = vmatpush2.bf16.msra.mxu0 0
    %567 = vmatprep.mubr.bf16.mxu0 0
    %568 = vmatmul.mubr.bf16.gmra.mxu0 %v530
    %v569 = vpop.f32.mrf.mxu0
    %v570 = vadd.f32 %v516, %v569
    %v571 = vpop.f32.mrf.mxu0
    %v572 = vpop.f32.mrf.mxu0
    %v573 = vadd.f32 %v516, %v572
    %v574 = vpop.f32.mrf.mxu0
    %575 = vmatprep.mubr.bf16.mxu0 0
    %576 = vmatmul.mubr.bf16.gmra.mxu0 %v533
    %v577 = vpop.f32.mrf.mxu0
    %v578 = vadd.f32 %v516, %v577
    %v579 = vpop.f32.mrf.mxu0
    %v580 = vpop.f32.mrf.mxu0
    %v581 = vadd.f32 %v516, %v580
    %v582 = vpop.f32.mrf.mxu0
    %583 = vdwg.mxu0
    %v584 = vmax.f32 %v570, 0.0
    %v585 = vmax.f32 %v573, 0.0
    %v586 = vmax.f32 %v578, 0.0
    %v587 = vmax.f32 %v581, 0.0
    %v588 = vpack.c.bf16 %v585, %v584
    %v589 = vpack.c.bf16 %v587, %v586
    %v590 = vlaneseq
    %v591 = vshrl.u32 %v590, 7
    %v592 = vsub.s32 0, %v591
    %v593 = vrot.slane %v132, %v592
    %v598 = vunpack.c.l.b16 %v87
    %v599 = vunpack.c.l.b16 %v88
    %v600 = vunpack.c.l.b16 %v89
    %v601 = vunpack.c.l.b16 %v90
    %v602 = vpack.c.b16 %v599, %v598
    %v603 = vpack.c.b16 %v601, %v600
    %v607 = vsel %vm364, %v588, 0
    %v610 = vsel %vm364, %v589, 0
    %612 = vmatprep.subr.bf16.mxu0 0
    %613 = vmatpush1.bf16.msra.mxu0 0
    %614 = vmatprep.subr.bf16.mxu0 0
    %615 = vmatpush1.bf16.msra.mxu0 0
    %616 = vmatprep.subr.bf16.mxu0 0
    %617 = vmatpush1.bf16.msra.mxu0 0
    %618 = vmatprep.subr.bf16.mxu0 0
    %619 = vmatpush1.bf16.msra.mxu0 0
    %620 = vmatprep.subr.bf16.mxu0 0
    %621 = vmatpush1.bf16.msra.mxu0 0
    %622 = vmatprep.subr.bf16.mxu0 0
    %623 = vmatpush1.bf16.msra.mxu0 0
    %624 = vmatprep.subr.bf16.mxu0 0
    %625 = vmatpush1.bf16.msra.mxu0 %v603
    %626 = vmatprep.subr.bf16.mxu0 0
    %627 = vmatpush1.bf16.msra.mxu0 %v602
    %628 = vmatprep.subr.bf16.mxu0 0
    %629 = vmatpush2.bf16.msra.mxu0 0
    %630 = vmatprep.subr.bf16.mxu0 0
    %631 = vmatpush2.bf16.msra.mxu0 0
    %632 = vmatprep.subr.bf16.mxu0 0
    %633 = vmatpush2.bf16.msra.mxu0 0
    %634 = vmatprep.subr.bf16.mxu0 0
    %635 = vmatpush2.bf16.msra.mxu0 0
    %636 = vmatprep.subr.bf16.mxu0 0
    %637 = vmatpush2.bf16.msra.mxu0 0
    %638 = vmatprep.subr.bf16.mxu0 0
    %639 = vmatpush2.bf16.msra.mxu0 0
    %640 = vmatprep.subr.bf16.mxu0 0
    %641 = vmatpush2.bf16.msra.mxu0 0
    %642 = vmatprep.subr.bf16.mxu0 0
    %643 = vmatpush2.bf16.msra.mxu0 0
    %644 = vmatprep.mubr.bf16.mxu0 0
    %645 = vmatmul.mubr.bf16.gmra.mxu0 %v607
    %v646 = vpop.f32.mrf.mxu0
    %v647 = vadd.f32 %v593, %v646
    %v648 = vpop.f32.mrf.mxu0
    %v649 = vpop.f32.mrf.mxu0
    %v650 = vadd.f32 %v593, %v649
    %v651 = vpop.f32.mrf.mxu0
    %652 = vmatprep.mubr.bf16.mxu0 0
    %653 = vmatmul.mubr.bf16.gmra.mxu0 %v610
    %v654 = vpop.f32.mrf.mxu0
    %v655 = vadd.f32 %v593, %v654
    %v656 = vpop.f32.mrf.mxu0
    %v657 = vpop.f32.mrf.mxu0
    %v658 = vadd.f32 %v593, %v657
    %v659 = vpop.f32.mrf.mxu0
    %660 = vdwg.mxu0
    %v661 = vpack.c.bf16 %v650, %v647
    %v662 = vpack.c.bf16 %v658, %v655
    %v665 = vunpack.c.l.b16 %v661
    %v666 = vunpack.c.h.b16 %v661
    %v667 = vunpack.c.l.b16 %v662
    %v668 = vunpack.c.h.b16 %v662
    %v669 = vpack.c.b16 %v665, %v665
    %v670 = vpack.c.b16 %v666, %v666
    %v671 = vpack.c.b16 %v667, %v667
    %v672 = vpack.c.b16 %v668, %v668
    %vm673 = vcmask 64512
    %v675 = vsel %vm673, %v276, 0
    %vm677 = vcmask 1043456
    %v679 = vsel %vm677, %v669, 0
    %681 = vmatprep.subr.bf16.mxu0 0
    %682 = vmatpush1.bf16.msra.mxu0 0
    %683 = vmatprep.subr.bf16.mxu0 0
    %684 = vmatpush1.bf16.msra.mxu0 0
    %685 = vmatprep.subr.bf16.mxu0 0
    %686 = vmatpush1.bf16.msra.mxu0 0
    %687 = vmatprep.subr.bf16.mxu0 0
    %688 = vmatpush1.bf16.msra.mxu0 0
    %689 = vmatprep.subr.bf16.mxu0 0
    %690 = vmatpush1.bf16.msra.mxu0 0
    %691 = vmatprep.subr.bf16.mxu0 0
    %692 = vmatpush1.bf16.msra.mxu0 0
    %693 = vmatprep.subr.bf16.mxu0 0
    %694 = vmatpush1.bf16.msra.mxu0 0
    %695 = vmatprep.subr.bf16.mxu0 0
    %696 = vmatpush1.bf16.msra.mxu0 %v679
    %697 = vmatprep.subr.bf16.mxu0 0
    %698 = vmatpush2.bf16.msra.mxu0 0
    %699 = vmatprep.subr.bf16.mxu0 0
    %700 = vmatpush2.bf16.msra.mxu0 0
    %701 = vmatprep.subr.bf16.mxu0 0
    %702 = vmatpush2.bf16.msra.mxu0 0
    %703 = vmatprep.subr.bf16.mxu0 0
    %704 = vmatpush2.bf16.msra.mxu0 0
    %705 = vmatprep.subr.bf16.mxu0 0
    %706 = vmatpush2.bf16.msra.mxu0 0
    %707 = vmatprep.subr.bf16.mxu0 0
    %708 = vmatpush2.bf16.msra.mxu0 0
    %709 = vmatprep.subr.bf16.mxu0 0
    %710 = vmatpush2.bf16.msra.mxu0 0
    %711 = vmatprep.subr.bf16.mxu0 0
    %712 = vmatpush2.bf16.msra.mxu0 0
    %713 = vmatprep.mubr.bf16.mxu0 0
    %714 = vmatmul.mubr.bf16.gmra.mxu0 %v675
    %v715 = vpop.f32.mrf.mxu0
    %v716 = vadd.f32 0.0, %v715
    %v717 = vpop.f32.mrf.mxu0
    %v718 = vpop.f32.mrf.mxu0
    %v719 = vadd.f32 0.0, %v718
    %v720 = vpop.f32.mrf.mxu0
    %721 = vdwg.mxu0
    %v723 = vsel %vm673, %v277, 0
    %v726 = vsel %vm677, %v670, 0
    %728 = vmatprep.subr.bf16.mxu0 0
    %729 = vmatpush1.bf16.msra.mxu0 0
    %730 = vmatprep.subr.bf16.mxu0 0
    %731 = vmatpush1.bf16.msra.mxu0 0
    %732 = vmatprep.subr.bf16.mxu0 0
    %733 = vmatpush1.bf16.msra.mxu0 0
    %734 = vmatprep.subr.bf16.mxu0 0
    %735 = vmatpush1.bf16.msra.mxu0 0
    %736 = vmatprep.subr.bf16.mxu0 0
    %737 = vmatpush1.bf16.msra.mxu0 0
    %738 = vmatprep.subr.bf16.mxu0 0
    %739 = vmatpush1.bf16.msra.mxu0 0
    %740 = vmatprep.subr.bf16.mxu0 0
    %741 = vmatpush1.bf16.msra.mxu0 0
    %742 = vmatprep.subr.bf16.mxu0 0
    %743 = vmatpush1.bf16.msra.mxu0 %v726
    %744 = vmatprep.subr.bf16.mxu0 0
    %745 = vmatpush2.bf16.msra.mxu0 0
    %746 = vmatprep.subr.bf16.mxu0 0
    %747 = vmatpush2.bf16.msra.mxu0 0
    %748 = vmatprep.subr.bf16.mxu0 0
    %749 = vmatpush2.bf16.msra.mxu0 0
    %750 = vmatprep.subr.bf16.mxu0 0
    %751 = vmatpush2.bf16.msra.mxu0 0
    %752 = vmatprep.subr.bf16.mxu0 0
    %753 = vmatpush2.bf16.msra.mxu0 0
    %754 = vmatprep.subr.bf16.mxu0 0
    %755 = vmatpush2.bf16.msra.mxu0 0
    %756 = vmatprep.subr.bf16.mxu0 0
    %757 = vmatpush2.bf16.msra.mxu0 0
    %758 = vmatprep.subr.bf16.mxu0 0
    %759 = vmatpush2.bf16.msra.mxu0 0
    %760 = vmatprep.mubr.bf16.mxu0 0
    %761 = vmatmul.mubr.bf16.gmra.mxu0 %v723
    %v762 = vpop.f32.mrf.mxu0
    %v763 = vadd.f32 0.0, %v762
    %v764 = vpop.f32.mrf.mxu0
    %v765 = vpop.f32.mrf.mxu0
    %v766 = vadd.f32 0.0, %v765
    %v767 = vpop.f32.mrf.mxu0
    %768 = vdwg.mxu0
    %v770 = vsel %vm673, %v278, 0
    %v773 = vsel %vm677, %v671, 0
    %775 = vmatprep.subr.bf16.mxu0 0
    %776 = vmatpush1.bf16.msra.mxu0 0
    %777 = vmatprep.subr.bf16.mxu0 0
    %778 = vmatpush1.bf16.msra.mxu0 0
    %779 = vmatprep.subr.bf16.mxu0 0
    %780 = vmatpush1.bf16.msra.mxu0 0
    %781 = vmatprep.subr.bf16.mxu0 0
    %782 = vmatpush1.bf16.msra.mxu0 0
    %783 = vmatprep.subr.bf16.mxu0 0
    %784 = vmatpush1.bf16.msra.mxu0 0
    %785 = vmatprep.subr.bf16.mxu0 0
    %786 = vmatpush1.bf16.msra.mxu0 0
    %787 = vmatprep.subr.bf16.mxu0 0
    %788 = vmatpush1.bf16.msra.mxu0 0
    %789 = vmatprep.subr.bf16.mxu0 0
    %790 = vmatpush1.bf16.msra.mxu0 %v773
    %791 = vmatprep.subr.bf16.mxu0 0
    %792 = vmatpush2.bf16.msra.mxu0 0
    %793 = vmatprep.subr.bf16.mxu0 0
    %794 = vmatpush2.bf16.msra.mxu0 0
    %795 = vmatprep.subr.bf16.mxu0 0
    %796 = vmatpush2.bf16.msra.mxu0 0
    %797 = vmatprep.subr.bf16.mxu0 0
    %798 = vmatpush2.bf16.msra.mxu0 0
    %799 = vmatprep.subr.bf16.mxu0 0
    %800 = vmatpush2.bf16.msra.mxu0 0
    %801 = vmatprep.subr.bf16.mxu0 0
    %802 = vmatpush2.bf16.msra.mxu0 0
    %803 = vmatprep.subr.bf16.mxu0 0
    %804 = vmatpush2.bf16.msra.mxu0 0
    %805 = vmatprep.subr.bf16.mxu0 0
    %806 = vmatpush2.bf16.msra.mxu0 0
    %807 = vmatprep.mubr.bf16.mxu0 0
    %808 = vmatmul.mubr.bf16.gmra.mxu0 %v770
    %v809 = vpop.f32.mrf.mxu0
    %v810 = vadd.f32 0.0, %v809
    %v811 = vpop.f32.mrf.mxu0
    %v812 = vpop.f32.mrf.mxu0
    %v813 = vadd.f32 0.0, %v812
    %v814 = vpop.f32.mrf.mxu0
    %815 = vdwg.mxu0
    %v817 = vsel %vm673, %v279, 0
    %v820 = vsel %vm677, %v672, 0
    %822 = vmatprep.subr.bf16.mxu0 0
    %823 = vmatpush1.bf16.msra.mxu0 0
    %824 = vmatprep.subr.bf16.mxu0 0
    %825 = vmatpush1.bf16.msra.mxu0 0
    %826 = vmatprep.subr.bf16.mxu0 0
    %827 = vmatpush1.bf16.msra.mxu0 0
    %828 = vmatprep.subr.bf16.mxu0 0
    %829 = vmatpush1.bf16.msra.mxu0 0
    %830 = vmatprep.subr.bf16.mxu0 0
    %831 = vmatpush1.bf16.msra.mxu0 0
    %832 = vmatprep.subr.bf16.mxu0 0
    %833 = vmatpush1.bf16.msra.mxu0 0
    %834 = vmatprep.subr.bf16.mxu0 0
    %835 = vmatpush1.bf16.msra.mxu0 0
    %836 = vmatprep.subr.bf16.mxu0 0
    %837 = vmatpush1.bf16.msra.mxu0 %v820
    %838 = vmatprep.subr.bf16.mxu0 0
    %839 = vmatpush2.bf16.msra.mxu0 0
    %840 = vmatprep.subr.bf16.mxu0 0
    %841 = vmatpush2.bf16.msra.mxu0 0
    %842 = vmatprep.subr.bf16.mxu0 0
    %843 = vmatpush2.bf16.msra.mxu0 0
    %844 = vmatprep.subr.bf16.mxu0 0
    %845 = vmatpush2.bf16.msra.mxu0 0
    %846 = vmatprep.subr.bf16.mxu0 0
    %847 = vmatpush2.bf16.msra.mxu0 0
    %848 = vmatprep.subr.bf16.mxu0 0
    %849 = vmatpush2.bf16.msra.mxu0 0
    %850 = vmatprep.subr.bf16.mxu0 0
    %851 = vmatpush2.bf16.msra.mxu0 0
    %852 = vmatprep.subr.bf16.mxu0 0
    %853 = vmatpush2.bf16.msra.mxu0 0
    %854 = vmatprep.mubr.bf16.mxu0 0
    %855 = vmatmul.mubr.bf16.gmra.mxu0 %v817
    %v856 = vpop.f32.mrf.mxu0
    %v857 = vadd.f32 0.0, %v856
    %v858 = vpop.f32.mrf.mxu0
    %v859 = vpop.f32.mrf.mxu0
    %v860 = vadd.f32 0.0, %v859
    %v861 = vpop.f32.mrf.mxu0
    %862 = vdwg.mxu0
    %v863 = vpack.c.bf16 %v719, %v716
    %v864 = vpack.c.bf16 %v766, %v763
    %v865 = vpack.c.bf16 %v813, %v810
    %v866 = vpack.c.bf16 %v860, %v857
    %v867 = vpack.c.bf16 %v299, %v299
    %v872 = vunpack.c.l.b16 %v110
    %v873 = vunpack.c.l.b16 %v111
    %v874 = vunpack.c.l.b16 %v112
    %v875 = vunpack.c.l.b16 %v113
    %v876 = vpack.c.b16 %v873, %v872
    %v877 = vpack.c.b16 %v875, %v874
    %v881 = vsel %vm364, %v867, 0
    %883 = vmatprep.subr.bf16.mxu0 0
    %884 = vmatpush1.bf16.msra.mxu0 0
    %885 = vmatprep.subr.bf16.mxu0 0
    %886 = vmatpush1.bf16.msra.mxu0 0
    %887 = vmatprep.subr.bf16.mxu0 0
    %888 = vmatpush1.bf16.msra.mxu0 0
    %889 = vmatprep.subr.bf16.mxu0 0
    %890 = vmatpush1.bf16.msra.mxu0 0
    %891 = vmatprep.subr.bf16.mxu0 0
    %892 = vmatpush1.bf16.msra.mxu0 0
    %893 = vmatprep.subr.bf16.mxu0 0
    %894 = vmatpush1.bf16.msra.mxu0 0
    %895 = vmatprep.subr.bf16.mxu0 0
    %896 = vmatpush1.bf16.msra.mxu0 %v877
    %897 = vmatprep.subr.bf16.mxu0 0
    %898 = vmatpush1.bf16.msra.mxu0 %v876
    %899 = vmatprep.subr.bf16.mxu0 0
    %900 = vmatpush2.bf16.msra.mxu0 0
    %901 = vmatprep.subr.bf16.mxu0 0
    %902 = vmatpush2.bf16.msra.mxu0 0
    %903 = vmatprep.subr.bf16.mxu0 0
    %904 = vmatpush2.bf16.msra.mxu0 0
    %905 = vmatprep.subr.bf16.mxu0 0
    %906 = vmatpush2.bf16.msra.mxu0 0
    %907 = vmatprep.subr.bf16.mxu0 0
    %908 = vmatpush2.bf16.msra.mxu0 0
    %909 = vmatprep.subr.bf16.mxu0 0
    %910 = vmatpush2.bf16.msra.mxu0 0
    %911 = vmatprep.subr.bf16.mxu0 0
    %912 = vmatpush2.bf16.msra.mxu0 0
    %913 = vmatprep.subr.bf16.mxu0 0
    %914 = vmatpush2.bf16.msra.mxu0 0
    %915 = vmatprep.mubr.bf16.mxu0 0
    %916 = vmatmul.mubr.bf16.gmra.mxu0 %v881
    %v917 = vpop.f32.mrf.mxu0
    %v918 = vadd.f32 0.0, %v917
    %v919 = vpop.f32.mrf.mxu0
    %v920 = vpop.f32.mrf.mxu0
    %v921 = vadd.f32 0.0, %v920
    %v922 = vpop.f32.mrf.mxu0
    %923 = vmatprep.mubr.bf16.mxu0 0
    %924 = vmatmul.mubr.bf16.gmra.mxu0 %v881
    %v925 = vpop.f32.mrf.mxu0
    %v926 = vadd.f32 0.0, %v925
    %v927 = vpop.f32.mrf.mxu0
    %v928 = vpop.f32.mrf.mxu0
    %v929 = vadd.f32 0.0, %v928
    %v930 = vpop.f32.mrf.mxu0
    %931 = vmatprep.mubr.bf16.mxu0 0
    %932 = vmatmul.mubr.bf16.gmra.mxu0 %v881
    %v933 = vpop.f32.mrf.mxu0
    %v934 = vadd.f32 0.0, %v933
    %v935 = vpop.f32.mrf.mxu0
    %v936 = vpop.f32.mrf.mxu0
    %v937 = vadd.f32 0.0, %v936
    %v938 = vpop.f32.mrf.mxu0
    %939 = vmatprep.mubr.bf16.mxu0 0
    %940 = vmatmul.mubr.bf16.gmra.mxu0 %v881
    %v941 = vpop.f32.mrf.mxu0
    %v942 = vadd.f32 0.0, %v941
    %v943 = vpop.f32.mrf.mxu0
    %v944 = vpop.f32.mrf.mxu0
    %v945 = vadd.f32 0.0, %v944
    %v946 = vpop.f32.mrf.mxu0
    %947 = vdwg.mxu0
    %v952 = vunpack.c.l.b16 %v101
    %v953 = vunpack.c.l.b16 %v102
    %v954 = vunpack.c.l.b16 %v103
    %v955 = vunpack.c.l.b16 %v104
    %v956 = vpack.c.b16 %v953, %v952
    %v957 = vpack.c.b16 %v955, %v954
    %v961 = vsel %vm364, %v863, 0
    %v964 = vsel %vm364, %v864, 0
    %v967 = vsel %vm364, %v865, 0
    %v970 = vsel %vm364, %v866, 0
    %972 = vmatprep.subr.bf16.mxu0 0
    %973 = vmatpush1.bf16.msra.mxu0 0
    %974 = vmatprep.subr.bf16.mxu0 0
    %975 = vmatpush1.bf16.msra.mxu0 0
    %976 = vmatprep.subr.bf16.mxu0 0
    %977 = vmatpush1.bf16.msra.mxu0 0
    %978 = vmatprep.subr.bf16.mxu0 0
    %979 = vmatpush1.bf16.msra.mxu0 0
    %980 = vmatprep.subr.bf16.mxu0 0
    %981 = vmatpush1.bf16.msra.mxu0 0
    %982 = vmatprep.subr.bf16.mxu0 0
    %983 = vmatpush1.bf16.msra.mxu0 0
    %984 = vmatprep.subr.bf16.mxu0 0
    %985 = vmatpush1.bf16.msra.mxu0 %v957
    %986 = vmatprep.subr.bf16.mxu0 0
    %987 = vmatpush1.bf16.msra.mxu0 %v956
    %988 = vmatprep.subr.bf16.mxu0 0
    %989 = vmatpush2.bf16.msra.mxu0 0
    %990 = vmatprep.subr.bf16.mxu0 0
    %991 = vmatpush2.bf16.msra.mxu0 0
    %992 = vmatprep.subr.bf16.mxu0 0
    %993 = vmatpush2.bf16.msra.mxu0 0
    %994 = vmatprep.subr.bf16.mxu0 0
    %995 = vmatpush2.bf16.msra.mxu0 0
    %996 = vmatprep.subr.bf16.mxu0 0
    %997 = vmatpush2.bf16.msra.mxu0 0
    %998 = vmatprep.subr.bf16.mxu0 0
    %999 = vmatpush2.bf16.msra.mxu0 0
    %1000 = vmatprep.subr.bf16.mxu0 0
    %1001 = vmatpush2.bf16.msra.mxu0 0
    %1002 = vmatprep.subr.bf16.mxu0 0
    %1003 = vmatpush2.bf16.msra.mxu0 0
    %1004 = vmatprep.mubr.bf16.mxu0 0
    %1005 = vmatmul.mubr.bf16.gmra.mxu0 %v961
    %v1006 = vpop.f32.mrf.mxu0
    %v1007 = vadd.f32 %v918, %v1006
    %v1008 = vpop.f32.mrf.mxu0
    %v1009 = vpop.f32.mrf.mxu0
    %v1010 = vadd.f32 %v921, %v1009
    %v1011 = vpop.f32.mrf.mxu0
    %1012 = vmatprep.mubr.bf16.mxu0 0
    %1013 = vmatmul.mubr.bf16.gmra.mxu0 %v964
    %v1014 = vpop.f32.mrf.mxu0
    %v1015 = vadd.f32 %v926, %v1014
    %v1016 = vpop.f32.mrf.mxu0
    %v1017 = vpop.f32.mrf.mxu0
    %v1018 = vadd.f32 %v929, %v1017
    %v1019 = vpop.f32.mrf.mxu0
    %1020 = vmatprep.mubr.bf16.mxu0 0
    %1021 = vmatmul.mubr.bf16.gmra.mxu0 %v967
    %v1022 = vpop.f32.mrf.mxu0
    %v1023 = vadd.f32 %v934, %v1022
    %v1024 = vpop.f32.mrf.mxu0
    %v1025 = vpop.f32.mrf.mxu0
    %v1026 = vadd.f32 %v937, %v1025
    %v1027 = vpop.f32.mrf.mxu0
    %1028 = vmatprep.mubr.bf16.mxu0 0
    %1029 = vmatmul.mubr.bf16.gmra.mxu0 %v970
    %v1030 = vpop.f32.mrf.mxu0
    %v1031 = vadd.f32 %v942, %v1030
    %v1032 = vpop.f32.mrf.mxu0
    %v1033 = vpop.f32.mrf.mxu0
    %v1034 = vadd.f32 %v945, %v1033
    %v1035 = vpop.f32.mrf.mxu0
    %1036 = vdwg.mxu0
    %v1037 = vlaneseq
    %v1038 = vshrl.u32 %v1037, 7
    %v1039 = vsub.s32 0, %v1038
    %v1040 = vrot.slane %v119, %v1039
    %v1041 = vadd.f32 %v1007, %v1040
    %v1042 = vadd.f32 %v1010, %v1040
    %v1043 = vadd.f32 %v1015, %v1040
    %v1044 = vadd.f32 %v1018, %v1040
    %v1045 = vadd.f32 %v1023, %v1040
    %v1046 = vadd.f32 %v1026, %v1040
    %v1047 = vadd.f32 %v1031, %v1040
    %v1048 = vadd.f32 %v1034, %v1040
    %v1049 = vxor.u32 %v1041, 2147483648
    %v1050 = vxor.u32 %v1042, 2147483648
    %v1051 = vxor.u32 %v1043, 2147483648
    %v1052 = vxor.u32 %v1044, 2147483648
    %v1053 = vxor.u32 %v1045, 2147483648
    %v1054 = vxor.u32 %v1046, 2147483648
    %v1055 = vxor.u32 %v1047, 2147483648
    %v1056 = vxor.u32 %v1048, 2147483648
    %v1057 = vmul.f32 %v1049, 1.442695
    %v1058 = vpow.pop %v1057
    %v1059 = vmul.f32 %v1050, 1.442695
    %v1060 = vpow.pop %v1059
    %v1061 = vmul.f32 %v1051, 1.442695
    %v1062 = vpow.pop %v1061
    %v1063 = vmul.f32 %v1052, 1.442695
    %v1064 = vpow.pop %v1063
    %v1065 = vmul.f32 %v1053, 1.442695
    %v1066 = vpow.pop %v1065
    %v1067 = vmul.f32 %v1054, 1.442695
    %v1068 = vpow.pop %v1067
    %v1069 = vmul.f32 %v1055, 1.442695
    %v1070 = vpow.pop %v1069
    %v1071 = vmul.f32 %v1056, 1.442695
    %v1072 = vpow.pop %v1071
    %v1073 = vadd.f32 %v1058, 1.0
    %v1074 = vadd.f32 %v1060, 1.0
    %v1075 = vadd.f32 %v1062, 1.0
    %v1076 = vadd.f32 %v1064, 1.0
    %v1077 = vadd.f32 %v1066, 1.0
    %v1078 = vadd.f32 %v1068, 1.0
    %v1079 = vadd.f32 %v1070, 1.0
    %v1080 = vadd.f32 %v1072, 1.0
    %v1081 = vrcp.pop %v1073
    %v1082 = vmul.f32 1.0, %v1081
    %v1083 = vrcp.pop %v1074
    %v1084 = vmul.f32 1.0, %v1083
    %v1085 = vrcp.pop %v1075
    %v1086 = vmul.f32 1.0, %v1085
    %v1087 = vrcp.pop %v1076
    %v1088 = vmul.f32 1.0, %v1087
    %v1089 = vrcp.pop %v1077
    %v1090 = vmul.f32 1.0, %v1089
    %v1091 = vrcp.pop %v1078
    %v1092 = vmul.f32 1.0, %v1091
    %v1093 = vrcp.pop %v1079
    %v1094 = vmul.f32 1.0, %v1093
    %v1095 = vrcp.pop %v1080
    %v1096 = vmul.f32 1.0, %v1095
    %v1097 = vtanh.pop %v1041
    %v1098 = vtanh.pop %v1042
    %v1099 = vtanh.pop %v1043
    %v1100 = vtanh.pop %v1044
    %v1101 = vtanh.pop %v1045
    %v1102 = vtanh.pop %v1046
    %v1103 = vtanh.pop %v1047
    %v1104 = vtanh.pop %v1048
    %v1105 = vmul.f32 %v1082, 0.0
    %v1106 = vmul.f32 %v1084, 0.0
    %v1107 = vmul.f32 %v1086, 0.0
    %v1108 = vmul.f32 %v1088, 0.0
    %v1109 = vmul.f32 %v1090, 0.0
    %v1110 = vmul.f32 %v1092, 0.0
    %v1111 = vmul.f32 %v1094, 0.0
    %v1112 = vmul.f32 %v1096, 0.0
    %1121 = vrot.lane.b32.xlu0 %v1097, 32
    %v1122 = vpop.permute.xlu0 %1121
    %1123 = vrot.lane.b32.xlu0 %v1098, 32
    %v1124 = vpop.permute.xlu0 %1123
    %1125 = vrot.lane.b32.xlu0 %v1099, 32
    %v1126 = vpop.permute.xlu0 %1125
    %1127 = vrot.lane.b32.xlu0 %v1100, 32
    %v1128 = vpop.permute.xlu0 %1127
    %1129 = vrot.lane.b32.xlu0 %v1101, 32
    %v1130 = vpop.permute.xlu0 %1129
    %1131 = vrot.lane.b32.xlu0 %v1102, 32
    %v1132 = vpop.permute.xlu0 %1131
    %1133 = vrot.lane.b32.xlu0 %v1103, 32
    %v1134 = vpop.permute.xlu0 %1133
    %1135 = vrot.lane.b32.xlu0 %v1104, 32
    %v1136 = vpop.permute.xlu0 %1135
    %v1145 = vmul.f32 %v1082, %v1122
    %v1146 = vmul.f32 %v1084, %v1124
    %v1147 = vmul.f32 %v1086, %v1126
    %v1148 = vmul.f32 %v1088, %v1128
    %v1149 = vmul.f32 %v1090, %v1130
    %v1150 = vmul.f32 %v1092, %v1132
    %v1151 = vmul.f32 %v1094, %v1134
    %v1152 = vmul.f32 %v1096, %v1136
    %1161 = vrot.lane.b32.xlu0 %v1145, 32
    %v1162 = vpop.permute.xlu0 %1161
    %1163 = vrot.lane.b32.xlu0 %v1146, 32
    %v1164 = vpop.permute.xlu0 %1163
    %1165 = vrot.lane.b32.xlu0 %v1147, 32
    %v1166 = vpop.permute.xlu0 %1165
    %1167 = vrot.lane.b32.xlu0 %v1148, 32
    %v1168 = vpop.permute.xlu0 %1167
    %1169 = vrot.lane.b32.xlu0 %v1149, 32
    %v1170 = vpop.permute.xlu0 %1169
    %1171 = vrot.lane.b32.xlu0 %v1150, 32
    %v1172 = vpop.permute.xlu0 %1171
    %1173 = vrot.lane.b32.xlu0 %v1151, 32
    %v1174 = vpop.permute.xlu0 %1173
    %1175 = vrot.lane.b32.xlu0 %v1152, 32
    %v1176 = vpop.permute.xlu0 %1175
    %v1185 = vadd.f32 %v1105, %v1162
    %v1186 = vadd.f32 %v1106, %v1164
    %v1187 = vadd.f32 %v1107, %v1166
    %v1188 = vadd.f32 %v1108, %v1168
    %v1189 = vadd.f32 %v1109, %v1170
    %v1190 = vadd.f32 %v1110, %v1172
    %v1191 = vadd.f32 %v1111, %v1174
    %v1192 = vadd.f32 %v1112, %v1176
    %v1193 = vtanh.pop %v1185
    %v1194 = vtanh.pop %v1186
    %v1195 = vtanh.pop %v1187
    %v1196 = vtanh.pop %v1188
    %v1197 = vtanh.pop %v1189
    %v1198 = vtanh.pop %v1190
    %v1199 = vtanh.pop %v1191
    %v1200 = vtanh.pop %v1192
    %1209 = vrot.lane.b32.xlu0 %v1193, 32
    %v1210 = vpop.permute.xlu0 %1209
    %1211 = vrot.lane.b32.xlu0 %v1194, 32
    %v1212 = vpop.permute.xlu0 %1211
    %1213 = vrot.lane.b32.xlu0 %v1195, 32
    %v1214 = vpop.permute.xlu0 %1213
    %1215 = vrot.lane.b32.xlu0 %v1196, 32
    %v1216 = vpop.permute.xlu0 %1215
    %1217 = vrot.lane.b32.xlu0 %v1197, 32
    %v1218 = vpop.permute.xlu0 %1217
    %1219 = vrot.lane.b32.xlu0 %v1198, 32
    %v1220 = vpop.permute.xlu0 %1219
    %1221 = vrot.lane.b32.xlu0 %v1199, 32
    %v1222 = vpop.permute.xlu0 %1221
    %1223 = vrot.lane.b32.xlu0 %v1200, 32
    %v1224 = vpop.permute.xlu0 %1223
    %v1233 = vmul.f32 %v1082, %v1210
    %v1234 = vmul.f32 %v1084, %v1212
    %v1235 = vmul.f32 %v1086, %v1214
    %v1236 = vmul.f32 %v1088, %v1216
    %v1237 = vmul.f32 %v1090, %v1218
    %v1238 = vmul.f32 %v1092, %v1220
    %v1239 = vmul.f32 %v1094, %v1222
    %v1240 = vmul.f32 %v1096, %v1224
    %1249 = vrot.lane.b32.xlu0 %v1233, 64
    %v1250 = vpop.permute.xlu0 %1249
    %1251 = vrot.lane.b32.xlu0 %v1234, 64
    %v1252 = vpop.permute.xlu0 %1251
    %1253 = vrot.lane.b32.xlu0 %v1235, 64
    %v1254 = vpop.permute.xlu0 %1253
    %1255 = vrot.lane.b32.xlu0 %v1236, 64
    %v1256 = vpop.permute.xlu0 %1255
    %1257 = vrot.lane.b32.xlu0 %v1237, 64
    %v1258 = vpop.permute.xlu0 %1257
    %1259 = vrot.lane.b32.xlu0 %v1238, 64
    %v1260 = vpop.permute.xlu0 %1259
    %1261 = vrot.lane.b32.xlu0 %v1239, 64
    %v1262 = vpop.permute.xlu0 %1261
    %1263 = vrot.lane.b32.xlu0 %v1240, 64
    %v1264 = vpop.permute.xlu0 %1263
    %v1273 = vsel %vm364, %v1250, 0.0
    %1274 = vadd.xlane.f32.xlu0 %v1273
    %v1275 = vpop.xlane.xlu0 %1274
    %v1276 = vsel %vm364, %v1252, 0.0
    %1277 = vadd.xlane.f32.xlu0 %v1276
    %v1278 = vpop.xlane.xlu0 %1277
    %v1279 = vsel %vm364, %v1254, 0.0
    %1280 = vadd.xlane.f32.xlu0 %v1279
    %v1281 = vpop.xlane.xlu0 %1280
    %v1282 = vsel %vm364, %v1256, 0.0
    %1283 = vadd.xlane.f32.xlu0 %v1282
    %v1284 = vpop.xlane.xlu0 %1283
    %v1285 = vsel %vm364, %v1258, 0.0
    %1286 = vadd.xlane.f32.xlu0 %v1285
    %v1287 = vpop.xlane.xlu0 %1286
    %v1288 = vsel %vm364, %v1260, 0.0
    %1289 = vadd.xlane.f32.xlu0 %v1288
    %v1290 = vpop.xlane.xlu0 %1289
    %v1291 = vsel %vm364, %v1262, 0.0
    %1292 = vadd.xlane.f32.xlu0 %v1291
    %v1293 = vpop.xlane.xlu0 %1292
    %v1294 = vsel %vm364, %v1264, 0.0
    %1295 = vadd.xlane.f32.xlu0 %v1294
    %v1296 = vpop.xlane.xlu0 %1295
    %v1297 = vmul.f32 %v1275, %v377
    %v1298 = vmul.f32 %v1278, %v377
    %v1299 = vmul.f32 %v1281, %v377
    %v1300 = vmul.f32 %v1284, %v377
    %v1301 = vmul.f32 %v1287, %v377
    %v1302 = vmul.f32 %v1290, %v377
    %v1303 = vmul.f32 %v1293, %v377
    %v1304 = vmul.f32 %v1296, %v377
    %v1305 = vsub.f32 %v1233, %v1297
    %v1306 = vsub.f32 %v1234, %v1298
    %v1307 = vsub.f32 %v1235, %v1299
    %v1308 = vsub.f32 %v1236, %v1300
    %v1309 = vsub.f32 %v1237, %v1301
    %v1310 = vsub.f32 %v1238, %v1302
    %v1311 = vsub.f32 %v1239, %v1303
    %v1312 = vsub.f32 %v1240, %v1304
    %v1313 = vmul.f32 %v1305, %v1305
    %v1314 = vmul.f32 %v1306, %v1306
    %v1315 = vmul.f32 %v1307, %v1307
    %v1316 = vmul.f32 %v1308, %v1308
    %v1317 = vmul.f32 %v1309, %v1309
    %v1318 = vmul.f32 %v1310, %v1310
    %v1319 = vmul.f32 %v1311, %v1311
    %v1320 = vmul.f32 %v1312, %v1312
    %1329 = vrot.lane.b32.xlu0 %v1313, 64
    %v1330 = vpop.permute.xlu0 %1329
    %1331 = vrot.lane.b32.xlu0 %v1314, 64
    %v1332 = vpop.permute.xlu0 %1331
    %1333 = vrot.lane.b32.xlu0 %v1315, 64
    %v1334 = vpop.permute.xlu0 %1333
    %1335 = vrot.lane.b32.xlu0 %v1316, 64
    %v1336 = vpop.permute.xlu0 %1335
    %1337 = vrot.lane.b32.xlu0 %v1317, 64
    %v1338 = vpop.permute.xlu0 %1337
    %1339 = vrot.lane.b32.xlu0 %v1318, 64
    %v1340 = vpop.permute.xlu0 %1339
    %1341 = vrot.lane.b32.xlu0 %v1319, 64
    %v1342 = vpop.permute.xlu0 %1341
    %1343 = vrot.lane.b32.xlu0 %v1320, 64
    %v1344 = vpop.permute.xlu0 %1343
    %v1353 = vsel %vm364, %v1330, 0.0
    %1354 = vadd.xlane.f32.xlu0 %v1353
    %v1355 = vpop.xlane.xlu0 %1354
    %v1356 = vsel %vm364, %v1332, 0.0
    %1357 = vadd.xlane.f32.xlu0 %v1356
    %v1358 = vpop.xlane.xlu0 %1357
    %v1359 = vsel %vm364, %v1334, 0.0
    %1360 = vadd.xlane.f32.xlu0 %v1359
    %v1361 = vpop.xlane.xlu0 %1360
    %v1362 = vsel %vm364, %v1336, 0.0
    %1363 = vadd.xlane.f32.xlu0 %v1362
    %v1364 = vpop.xlane.xlu0 %1363
    %v1365 = vsel %vm364, %v1338, 0.0
    %1366 = vadd.xlane.f32.xlu0 %v1365
    %v1367 = vpop.xlane.xlu0 %1366
    %v1368 = vsel %vm364, %v1340, 0.0
    %1369 = vadd.xlane.f32.xlu0 %v1368
    %v1370 = vpop.xlane.xlu0 %1369
    %v1371 = vsel %vm364, %v1342, 0.0
    %1372 = vadd.xlane.f32.xlu0 %v1371
    %v1373 = vpop.xlane.xlu0 %1372
    %v1374 = vsel %vm364, %v1344, 0.0
    %1375 = vadd.xlane.f32.xlu0 %v1374
    %v1376 = vpop.xlane.xlu0 %1375
    %v1377 = vmul.f32 %v1355, %v377
    %v1378 = vmul.f32 %v1358, %v377
    %v1379 = vmul.f32 %v1361, %v377
    %v1380 = vmul.f32 %v1364, %v377
    %v1381 = vmul.f32 %v1367, %v377
    %v1382 = vmul.f32 %v1370, %v377
    %v1383 = vmul.f32 %v1373, %v377
    %v1384 = vmul.f32 %v1376, %v377
    %v1385 = vadd.f32 %v1377, 1e-05
    %v1386 = vadd.f32 %v1378, 1e-05
    %v1387 = vadd.f32 %v1379, 1e-05
    %v1388 = vadd.f32 %v1380, 1e-05
    %v1389 = vadd.f32 %v1381, 1e-05
    %v1390 = vadd.f32 %v1382, 1e-05
    %v1391 = vadd.f32 %v1383, 1e-05
    %v1392 = vadd.f32 %v1384, 1e-05
    %v1393 = vrsqrt.pop %v1385
    %v1394 = vrsqrt.pop %v1386
    %v1395 = vrsqrt.pop %v1387
    %v1396 = vrsqrt.pop %v1388
    %v1397 = vrsqrt.pop %v1389
    %v1398 = vrsqrt.pop %v1390
    %v1399 = vrsqrt.pop %v1391
    %v1400 = vrsqrt.pop %v1392
    %v1401 = vmul.f32 %v1305, %v1393
    %v1402 = vmul.f32 %v1306, %v1394
    %v1403 = vmul.f32 %v1307, %v1395
    %v1404 = vmul.f32 %v1308, %v1396
    %v1405 = vmul.f32 %v1309, %v1397
    %v1406 = vmul.f32 %v1310, %v1398
    %v1407 = vmul.f32 %v1311, %v1399
    %v1408 = vmul.f32 %v1312, %v1400
    %v1409 = vlaneseq
    %v1410 = vshrl.u32 %v1409, 7
    %v1411 = vsub.s32 0, %v1410
    %v1412 = vrot.slane %v133, %v1411
    %1414 = vrot.lane.b32.xlu0 %v1412, 64
    %v1415 = vpop.permute.xlu0 %1414
    %v1417 = vmul.f32 %v1401, %v1415
    %v1418 = vmul.f32 %v1402, %v1415
    %v1419 = vmul.f32 %v1403, %v1415
    %v1420 = vmul.f32 %v1404, %v1415
    %v1421 = vmul.f32 %v1405, %v1415
    %v1422 = vmul.f32 %v1406, %v1415
    %v1423 = vmul.f32 %v1407, %v1415
    %v1424 = vmul.f32 %v1408, %v1415
    %v1425 = vlaneseq
    %v1426 = vshrl.u32 %v1425, 7
    %v1427 = vsub.s32 0, %v1426
    %v1428 = vrot.slane %v134, %v1427
    %1430 = vrot.lane.b32.xlu0 %v1428, 64
    %v1431 = vpop.permute.xlu0 %1430
    %v1433 = vadd.f32 %v1417, %v1431
    %v1434 = vadd.f32 %v1418, %v1431
    %v1435 = vadd.f32 %v1419, %v1431
    %v1436 = vadd.f32 %v1420, %v1431
    %v1437 = vadd.f32 %v1421, %v1431
    %v1438 = vadd.f32 %v1422, %v1431
    %v1439 = vadd.f32 %v1423, %v1431
    %v1440 = vadd.f32 %v1424, %v1431
    %v1441 = vpack.c.bf16 %v1434, %v1433
    %v1442 = vpack.c.bf16 %v1436, %v1435
    %v1443 = vpack.c.bf16 %v1438, %v1437
    %v1444 = vpack.c.bf16 %v1440, %v1439
    %v1445 = vlaneseq
    %v1446 = vshrl.u32 %v1445, 7
    %v1447 = vsub.s32 0, %v1446
    %v1448 = vrot.slane %v127, %v1447
    %1453 = vrot.lane.b32.xlu0 %v1441, 64
    %v1454 = vpop.permute.xlu0 %1453
    %1455 = vrot.lane.b32.xlu0 %v1442, 64
    %v1456 = vpop.permute.xlu0 %1455
    %1457 = vrot.lane.b32.xlu0 %v1443, 64
    %v1458 = vpop.permute.xlu0 %1457
    %1459 = vrot.lane.b32.xlu0 %v1444, 64
    %v1460 = vpop.permute.xlu0 %1459
    %v1465 = vunpack.c.l.b16 %v62
    %v1466 = vunpack.c.l.b16 %v63
    %v1467 = vunpack.c.l.b16 %v64
    %v1468 = vunpack.c.l.b16 %v65
    %v1469 = vpack.c.b16 %v1466, %v1465
    %v1470 = vpack.c.b16 %v1468, %v1467
    %v1474 = vsel %vm364, %v1454, 0
    %v1477 = vsel %vm364, %v1456, 0
    %v1480 = vsel %vm364, %v1458, 0
    %v1483 = vsel %vm364, %v1460, 0
    %1485 = vmatprep.subr.bf16.mxu0 0
    %1486 = vmatpush1.bf16.msra.mxu0 0
    %1487 = vmatprep.subr.bf16.mxu0 0
    %1488 = vmatpush1.bf16.msra.mxu0 0
    %1489 = vmatprep.subr.bf16.mxu0 0
    %1490 = vmatpush1.bf16.msra.mxu0 0
    %1491 = vmatprep.subr.bf16.mxu0 0
    %1492 = vmatpush1.bf16.msra.mxu0 0
    %1493 = vmatprep.subr.bf16.mxu0 0
    %1494 = vmatpush1.bf16.msra.mxu0 0
    %1495 = vmatprep.subr.bf16.mxu0 0
    %1496 = vmatpush1.bf16.msra.mxu0 0
    %1497 = vmatprep.subr.bf16.mxu0 0
    %1498 = vmatpush1.bf16.msra.mxu0 %v1470
    %1499 = vmatprep.subr.bf16.mxu0 0
    %1500 = vmatpush1.bf16.msra.mxu0 %v1469
    %1501 = vmatprep.subr.bf16.mxu0 0
    %1502 = vmatpush2.bf16.msra.mxu0 0
    %1503 = vmatprep.subr.bf16.mxu0 0
    %1504 = vmatpush2.bf16.msra.mxu0 0
    %1505 = vmatprep.subr.bf16.mxu0 0
    %1506 = vmatpush2.bf16.msra.mxu0 0
    %1507 = vmatprep.subr.bf16.mxu0 0
    %1508 = vmatpush2.bf16.msra.mxu0 0
    %1509 = vmatprep.subr.bf16.mxu0 0
    %1510 = vmatpush2.bf16.msra.mxu0 0
    %1511 = vmatprep.subr.bf16.mxu0 0
    %1512 = vmatpush2.bf16.msra.mxu0 0
    %1513 = vmatprep.subr.bf16.mxu0 0
    %1514 = vmatpush2.bf16.msra.mxu0 0
    %1515 = vmatprep.subr.bf16.mxu0 0
    %1516 = vmatpush2.bf16.msra.mxu0 0
    %1517 = vmatprep.mubr.bf16.mxu0 0
    %1518 = vmatmul.mubr.bf16.gmra.mxu0 %v1474
    %v1519 = vpop.f32.mrf.mxu0
    %v1520 = vadd.f32 %v1448, %v1519
    %v1521 = vpop.f32.mrf.mxu0
    %v1522 = vpop.f32.mrf.mxu0
    %v1523 = vadd.f32 %v1448, %v1522
    %v1524 = vpop.f32.mrf.mxu0
    %1525 = vmatprep.mubr.bf16.mxu0 0
    %1526 = vmatmul.mubr.bf16.gmra.mxu0 %v1477
    %v1527 = vpop.f32.mrf.mxu0
    %v1528 = vadd.f32 %v1448, %v1527
    %v1529 = vpop.f32.mrf.mxu0
    %v1530 = vpop.f32.mrf.mxu0
    %v1531 = vadd.f32 %v1448, %v1530
    %v1532 = vpop.f32.mrf.mxu0
    %1533 = vmatprep.mubr.bf16.mxu0 0
    %1534 = vmatmul.mubr.bf16.gmra.mxu0 %v1480
    %v1535 = vpop.f32.mrf.mxu0
    %v1536 = vadd.f32 %v1448, %v1535
    %v1537 = vpop.f32.mrf.mxu0
    %v1538 = vpop.f32.mrf.mxu0
    %v1539 = vadd.f32 %v1448, %v1538
    %v1540 = vpop.f32.mrf.mxu0
    %1541 = vmatprep.mubr.bf16.mxu0 0
    %1542 = vmatmul.mubr.bf16.gmra.mxu0 %v1483
    %v1543 = vpop.f32.mrf.mxu0
    %v1544 = vadd.f32 %v1448, %v1543
    %v1545 = vpop.f32.mrf.mxu0
    %v1546 = vpop.f32.mrf.mxu0
    %v1547 = vadd.f32 %v1448, %v1546
    %v1548 = vpop.f32.mrf.mxu0
    %1549 = vdwg.mxu0
    %v1550 = vmax.f32 %v1520, 0.0
    %v1551 = vmax.f32 %v1523, 0.0
    %v1552 = vmax.f32 %v1528, 0.0
    %v1553 = vmax.f32 %v1531, 0.0
    %v1554 = vmax.f32 %v1536, 0.0
    %v1555 = vmax.f32 %v1539, 0.0
    %v1556 = vmax.f32 %v1544, 0.0
    %v1557 = vmax.f32 %v1547, 0.0
    %v1558 = vpack.c.bf16 %v1551, %v1550
    %v1559 = vpack.c.bf16 %v1553, %v1552
    %v1560 = vpack.c.bf16 %v1555, %v1554
    %v1561 = vpack.c.bf16 %v1557, %v1556
    %v1562 = vlaneseq
    %v1563 = vshrl.u32 %v1562, 7
    %v1564 = vsub.s32 0, %v1563
    %v1565 = vrot.slane %v128, %v1564
    %v1570 = vunpack.c.l.b16 %v67
    %v1571 = vunpack.c.l.b16 %v68
    %v1572 = vunpack.c.l.b16 %v69
    %v1573 = vunpack.c.l.b16 %v70
    %v1574 = vpack.c.b16 %v1571, %v1570
    %v1575 = vpack.c.b16 %v1573, %v1572
    %v1579 = vsel %vm364, %v1558, 0
    %v1582 = vsel %vm364, %v1559, 0
    %v1585 = vsel %vm364, %v1560, 0
    %v1588 = vsel %vm364, %v1561, 0
    %1590 = vmatprep.subr.bf16.mxu0 0
    %1591 = vmatpush1.bf16.msra.mxu0 0
    %1592 = vmatprep.subr.bf16.mxu0 0
    %1593 = vmatpush1.bf16.msra.mxu0 0
    %1594 = vmatprep.subr.bf16.mxu0 0
    %1595 = vmatpush1.bf16.msra.mxu0 0
    %1596 = vmatprep.subr.bf16.mxu0 0
    %1597 = vmatpush1.bf16.msra.mxu0 0
    %1598 = vmatprep.subr.bf16.mxu0 0
    %1599 = vmatpush1.bf16.msra.mxu0 0
    %1600 = vmatprep.subr.bf16.mxu0 0
    %1601 = vmatpush1.bf16.msra.mxu0 0
    %1602 = vmatprep.subr.bf16.mxu0 0
    %1603 = vmatpush1.bf16.msra.mxu0 %v1575
    %1604 = vmatprep.subr.bf16.mxu0 0
    %1605 = vmatpush1.bf16.msra.mxu0 %v1574
    %1606 = vmatprep.subr.bf16.mxu0 0
    %1607 = vmatpush2.bf16.msra.mxu0 0
    %1608 = vmatprep.subr.bf16.mxu0 0
    %1609 = vmatpush2.bf16.msra.mxu0 0
    %1610 = vmatprep.subr.bf16.mxu0 0
    %1611 = vmatpush2.bf16.msra.mxu0 0
    %1612 = vmatprep.subr.bf16.mxu0 0
    %1613 = vmatpush2.bf16.msra.mxu0 0
    %1614 = vmatprep.subr.bf16.mxu0 0
    %1615 = vmatpush2.bf16.msra.mxu0 0
    %1616 = vmatprep.subr.bf16.mxu0 0
    %1617 = vmatpush2.bf16.msra.mxu0 0
    %1618 = vmatprep.subr.bf16.mxu0 0
    %1619 = vmatpush2.bf16.msra.mxu0 0
    %1620 = vmatprep.subr.bf16.mxu0 0
    %1621 = vmatpush2.bf16.msra.mxu0 0
    %1622 = vmatprep.mubr.bf16.mxu0 0
    %1623 = vmatmul.mubr.bf16.gmra.mxu0 %v1579
    %v1624 = vpop.f32.mrf.mxu0
    %v1625 = vadd.f32 %v1565, %v1624
    %v1626 = vpop.f32.mrf.mxu0
    %v1627 = vpop.f32.mrf.mxu0
    %v1628 = vadd.f32 %v1565, %v1627
    %v1629 = vpop.f32.mrf.mxu0
    %1630 = vmatprep.mubr.bf16.mxu0 0
    %1631 = vmatmul.mubr.bf16.gmra.mxu0 %v1582
    %v1632 = vpop.f32.mrf.mxu0
    %v1633 = vadd.f32 %v1565, %v1632
    %v1634 = vpop.f32.mrf.mxu0
    %v1635 = vpop.f32.mrf.mxu0
    %v1636 = vadd.f32 %v1565, %v1635
    %v1637 = vpop.f32.mrf.mxu0
    %1638 = vmatprep.mubr.bf16.mxu0 0
    %1639 = vmatmul.mubr.bf16.gmra.mxu0 %v1585
    %v1640 = vpop.f32.mrf.mxu0
    %v1641 = vadd.f32 %v1565, %v1640
    %v1642 = vpop.f32.mrf.mxu0
    %v1643 = vpop.f32.mrf.mxu0
    %v1644 = vadd.f32 %v1565, %v1643
    %v1645 = vpop.f32.mrf.mxu0
    %1646 = vmatprep.mubr.bf16.mxu0 0
    %1647 = vmatmul.mubr.bf16.gmra.mxu0 %v1588
    %v1648 = vpop.f32.mrf.mxu0
    %v1649 = vadd.f32 %v1565, %v1648
    %v1650 = vpop.f32.mrf.mxu0
    %v1651 = vpop.f32.mrf.mxu0
    %v1652 = vadd.f32 %v1565, %v1651
    %v1653 = vpop.f32.mrf.mxu0
    %1654 = vdwg.mxu0
    %v1655 = vmax.f32 %v1625, 0.0
    %v1656 = vmax.f32 %v1628, 0.0
    %v1657 = vmax.f32 %v1633, 0.0
    %v1658 = vmax.f32 %v1636, 0.0
    %v1659 = vmax.f32 %v1641, 0.0
    %v1660 = vmax.f32 %v1644, 0.0
    %v1661 = vmax.f32 %v1649, 0.0
    %v1662 = vmax.f32 %v1652, 0.0
    %v1663 = vpack.c.bf16 %v1656, %v1655
    %v1664 = vpack.c.bf16 %v1658, %v1657
    %v1665 = vpack.c.bf16 %v1660, %v1659
    %v1666 = vpack.c.bf16 %v1662, %v1661
    %v1667 = vlaneseq
    %v1668 = vshrl.u32 %v1667, 7
    %v1669 = vsub.s32 0, %v1668
    %v1670 = vrot.slane %v129, %v1669
    %v1675 = vunpack.c.l.b16 %v72
    %v1676 = vunpack.c.l.b16 %v73
    %v1677 = vunpack.c.l.b16 %v74
    %v1678 = vunpack.c.l.b16 %v75
    %v1679 = vpack.c.b16 %v1676, %v1675
    %v1680 = vpack.c.b16 %v1678, %v1677
    %v1684 = vsel %vm364, %v1663, 0
    %v1687 = vsel %vm364, %v1664, 0
    %v1690 = vsel %vm364, %v1665, 0
    %v1693 = vsel %vm364, %v1666, 0
    %1695 = vmatprep.subr.bf16.mxu0 0
    %1696 = vmatpush1.bf16.msra.mxu0 0
    %1697 = vmatprep.subr.bf16.mxu0 0
    %1698 = vmatpush1.bf16.msra.mxu0 0
    %1699 = vmatprep.subr.bf16.mxu0 0
    %1700 = vmatpush1.bf16.msra.mxu0 0
    %1701 = vmatprep.subr.bf16.mxu0 0
    %1702 = vmatpush1.bf16.msra.mxu0 0
    %1703 = vmatprep.subr.bf16.mxu0 0
    %1704 = vmatpush1.bf16.msra.mxu0 0
    %1705 = vmatprep.subr.bf16.mxu0 0
    %1706 = vmatpush1.bf16.msra.mxu0 0
    %1707 = vmatprep.subr.bf16.mxu0 0
    %1708 = vmatpush1.bf16.msra.mxu0 %v1680
    %1709 = vmatprep.subr.bf16.mxu0 0
    %1710 = vmatpush1.bf16.msra.mxu0 %v1679
    %1711 = vmatprep.subr.bf16.mxu0 0
    %1712 = vmatpush2.bf16.msra.mxu0 0
    %1713 = vmatprep.subr.bf16.mxu0 0
    %1714 = vmatpush2.bf16.msra.mxu0 0
    %1715 = vmatprep.subr.bf16.mxu0 0
    %1716 = vmatpush2.bf16.msra.mxu0 0
    %1717 = vmatprep.subr.bf16.mxu0 0
    %1718 = vmatpush2.bf16.msra.mxu0 0
    %1719 = vmatprep.subr.bf16.mxu0 0
    %1720 = vmatpush2.bf16.msra.mxu0 0
    %1721 = vmatprep.subr.bf16.mxu0 0
    %1722 = vmatpush2.bf16.msra.mxu0 0
    %1723 = vmatprep.subr.bf16.mxu0 0
    %1724 = vmatpush2.bf16.msra.mxu0 0
    %1725 = vmatprep.subr.bf16.mxu0 0
    %1726 = vmatpush2.bf16.msra.mxu0 0
    %1727 = vmatprep.mubr.bf16.mxu0 0
    %1728 = vmatmul.mubr.bf16.gmra.mxu0 %v1684
    %v1729 = vpop.f32.mrf.mxu0
    %v1730 = vadd.f32 %v1670, %v1729
    %v1731 = vpop.f32.mrf.mxu0
    %v1732 = vpop.f32.mrf.mxu0
    %v1733 = vadd.f32 %v1670, %v1732
    %v1734 = vpop.f32.mrf.mxu0
    %1735 = vmatprep.mubr.bf16.mxu0 0
    %1736 = vmatmul.mubr.bf16.gmra.mxu0 %v1687
    %v1737 = vpop.f32.mrf.mxu0
    %v1738 = vadd.f32 %v1670, %v1737
    %v1739 = vpop.f32.mrf.mxu0
    %v1740 = vpop.f32.mrf.mxu0
    %v1741 = vadd.f32 %v1670, %v1740
    %v1742 = vpop.f32.mrf.mxu0
    %1743 = vmatprep.mubr.bf16.mxu0 0
    %1744 = vmatmul.mubr.bf16.gmra.mxu0 %v1690
    %v1745 = vpop.f32.mrf.mxu0
    %v1746 = vadd.f32 %v1670, %v1745
    %v1747 = vpop.f32.mrf.mxu0
    %v1748 = vpop.f32.mrf.mxu0
    %v1749 = vadd.f32 %v1670, %v1748
    %v1750 = vpop.f32.mrf.mxu0
    %1751 = vmatprep.mubr.bf16.mxu0 0
    %1752 = vmatmul.mubr.bf16.gmra.mxu0 %v1693
    %v1753 = vpop.f32.mrf.mxu0
    %v1754 = vadd.f32 %v1670, %v1753
    %v1755 = vpop.f32.mrf.mxu0
    %v1756 = vpop.f32.mrf.mxu0
    %v1757 = vadd.f32 %v1670, %v1756
    %v1758 = vpop.f32.mrf.mxu0
    %1759 = vdwg.mxu0
    %v1760 = vpack.c.bf16 %v1733, %v1730
    %v1761 = vpack.c.bf16 %v1741, %v1738
    %v1762 = vpack.c.bf16 %v1749, %v1746
    %v1763 = vpack.c.bf16 %v1757, %v1754
    %vm1764 = vcmask 130048
    %v1766 = vsel %vm1764, %v140, 0
    %1768 = vmatprep.subr.bf16.mxu0 0
    %1769 = vmatpush1.bf16.msra.mxu0 0
    %1770 = vmatprep.subr.bf16.mxu0 0
    %1771 = vmatpush1.bf16.msra.mxu0 0
    %1772 = vmatprep.subr.bf16.mxu0 0
    %1773 = vmatpush1.bf16.msra.mxu0 0
    %1774 = vmatprep.subr.bf16.mxu0 0
    %1775 = vmatpush1.bf16.msra.mxu0 0
    %1776 = vmatprep.subr.bf16.mxu0 0
    %1777 = vmatpush1.bf16.msra.mxu0 0
    %1778 = vmatprep.subr.bf16.mxu0 0
    %1779 = vmatpush1.bf16.msra.mxu0 0
    %1780 = vmatprep.subr.bf16.mxu0 0
    %1781 = vmatpush1.bf16.msra.mxu0 0
    %1782 = vmatprep.subr.bf16.mxu0 0
    %1783 = vmatpush1.bf16.msra.mxu0 %v1760
    %1784 = vmatprep.subr.bf16.mxu0 0
    %1785 = vmatpush2.bf16.msra.mxu0 0
    %1786 = vmatprep.subr.bf16.mxu0 0
    %1787 = vmatpush2.bf16.msra.mxu0 0
    %1788 = vmatprep.subr.bf16.mxu0 0
    %1789 = vmatpush2.bf16.msra.mxu0 0
    %1790 = vmatprep.subr.bf16.mxu0 0
    %1791 = vmatpush2.bf16.msra.mxu0 0
    %1792 = vmatprep.subr.bf16.mxu0 0
    %1793 = vmatpush2.bf16.msra.mxu0 0
    %1794 = vmatprep.subr.bf16.mxu0 0
    %1795 = vmatpush2.bf16.msra.mxu0 0
    %1796 = vmatprep.subr.bf16.mxu0 0
    %1797 = vmatpush2.bf16.msra.mxu0 0
    %1798 = vmatprep.subr.bf16.mxu0 0
    %1799 = vmatpush2.bf16.msra.mxu0 0
    %1800 = vmatprep.mubr.bf16.mxu0 0
    %1801 = vmatmul.mubr.bf16.gmra.mxu0 %v1766
    %v1802 = vpop.f32.mrf.mxu0
    %v1803 = vadd.f32 0.0, %v1802
    %v1804 = vpop.f32.mrf.mxu0
    %v1805 = vpop.f32.mrf.mxu0
    %v1806 = vpop.f32.mrf.mxu0
    %1807 = vdwg.mxu0
    %v1809 = vsel %vm1764, %v141, 0
    %1811 = vmatprep.subr.bf16.mxu0 0
    %1812 = vmatpush1.bf16.msra.mxu0 0
    %1813 = vmatprep.subr.bf16.mxu0 0
    %1814 = vmatpush1.bf16.msra.mxu0 0
    %1815 = vmatprep.subr.bf16.mxu0 0
    %1816 = vmatpush1.bf16.msra.mxu0 0
    %1817 = vmatprep.subr.bf16.mxu0 0
    %1818 = vmatpush1.bf16.msra.mxu0 0
    %1819 = vmatprep.subr.bf16.mxu0 0
    %1820 = vmatpush1.bf16.msra.mxu0 0
    %1821 = vmatprep.subr.bf16.mxu0 0
    %1822 = vmatpush1.bf16.msra.mxu0 0
    %1823 = vmatprep.subr.bf16.mxu0 0
    %1824 = vmatpush1.bf16.msra.mxu0 0
    %1825 = vmatprep.subr.bf16.mxu0 0
    %1826 = vmatpush1.bf16.msra.mxu0 %v1761
    %1827 = vmatprep.subr.bf16.mxu0 0
    %1828 = vmatpush2.bf16.msra.mxu0 0
    %1829 = vmatprep.subr.bf16.mxu0 0
    %1830 = vmatpush2.bf16.msra.mxu0 0
    %1831 = vmatprep.subr.bf16.mxu0 0
    %1832 = vmatpush2.bf16.msra.mxu0 0
    %1833 = vmatprep.subr.bf16.mxu0 0
    %1834 = vmatpush2.bf16.msra.mxu0 0
    %1835 = vmatprep.subr.bf16.mxu0 0
    %1836 = vmatpush2.bf16.msra.mxu0 0
    %1837 = vmatprep.subr.bf16.mxu0 0
    %1838 = vmatpush2.bf16.msra.mxu0 0
    %1839 = vmatprep.subr.bf16.mxu0 0
    %1840 = vmatpush2.bf16.msra.mxu0 0
    %1841 = vmatprep.subr.bf16.mxu0 0
    %1842 = vmatpush2.bf16.msra.mxu0 0
    %1843 = vmatprep.mubr.bf16.mxu0 0
    %1844 = vmatmul.mubr.bf16.gmra.mxu0 %v1809
    %v1845 = vpop.f32.mrf.mxu0
    %v1846 = vadd.f32 0.0, %v1845
    %v1847 = vpop.f32.mrf.mxu0
    %v1848 = vpop.f32.mrf.mxu0
    %v1849 = vpop.f32.mrf.mxu0
    %1850 = vdwg.mxu0
    %v1852 = vsel %vm1764, %v142, 0
    %1854 = vmatprep.subr.bf16.mxu0 0
    %1855 = vmatpush1.bf16.msra.mxu0 0
    %1856 = vmatprep.subr.bf16.mxu0 0
    %1857 = vmatpush1.bf16.msra.mxu0 0
    %1858 = vmatprep.subr.bf16.mxu0 0
    %1859 = vmatpush1.bf16.msra.mxu0 0
    %1860 = vmatprep.subr.bf16.mxu0 0
    %1861 = vmatpush1.bf16.msra.mxu0 0
    %1862 = vmatprep.subr.bf16.mxu0 0
    %1863 = vmatpush1.bf16.msra.mxu0 0
    %1864 = vmatprep.subr.bf16.mxu0 0
    %1865 = vmatpush1.bf16.msra.mxu0 0
    %1866 = vmatprep.subr.bf16.mxu0 0
    %1867 = vmatpush1.bf16.msra.mxu0 0
    %1868 = vmatprep.subr.bf16.mxu0 0
    %1869 = vmatpush1.bf16.msra.mxu0 %v1762
    %1870 = vmatprep.subr.bf16.mxu0 0
    %1871 = vmatpush2.bf16.msra.mxu0 0
    %1872 = vmatprep.subr.bf16.mxu0 0
    %1873 = vmatpush2.bf16.msra.mxu0 0
    %1874 = vmatprep.subr.bf16.mxu0 0
    %1875 = vmatpush2.bf16.msra.mxu0 0
    %1876 = vmatprep.subr.bf16.mxu0 0
    %1877 = vmatpush2.bf16.msra.mxu0 0
    %1878 = vmatprep.subr.bf16.mxu0 0
    %1879 = vmatpush2.bf16.msra.mxu0 0
    %1880 = vmatprep.subr.bf16.mxu0 0
    %1881 = vmatpush2.bf16.msra.mxu0 0
    %1882 = vmatprep.subr.bf16.mxu0 0
    %1883 = vmatpush2.bf16.msra.mxu0 0
    %1884 = vmatprep.subr.bf16.mxu0 0
    %1885 = vmatpush2.bf16.msra.mxu0 0
    %1886 = vmatprep.mubr.bf16.mxu0 0
    %1887 = vmatmul.mubr.bf16.gmra.mxu0 %v1852
    %v1888 = vpop.f32.mrf.mxu0
    %v1889 = vadd.f32 0.0, %v1888
    %v1890 = vpop.f32.mrf.mxu0
    %v1891 = vpop.f32.mrf.mxu0
    %v1892 = vpop.f32.mrf.mxu0
    %1893 = vdwg.mxu0
    %v1895 = vsel %vm1764, %v143, 0
    %1897 = vmatprep.subr.bf16.mxu0 0
    %1898 = vmatpush1.bf16.msra.mxu0 0
    %1899 = vmatprep.subr.bf16.mxu0 0
    %1900 = vmatpush1.bf16.msra.mxu0 0
    %1901 = vmatprep.subr.bf16.mxu0 0
    %1902 = vmatpush1.bf16.msra.mxu0 0
    %1903 = vmatprep.subr.bf16.mxu0 0
    %1904 = vmatpush1.bf16.msra.mxu0 0
    %1905 = vmatprep.subr.bf16.mxu0 0
    %1906 = vmatpush1.bf16.msra.mxu0 0
    %1907 = vmatprep.subr.bf16.mxu0 0
    %1908 = vmatpush1.bf16.msra.mxu0 0
    %1909 = vmatprep.subr.bf16.mxu0 0
    %1910 = vmatpush1.bf16.msra.mxu0 0
    %1911 = vmatprep.subr.bf16.mxu0 0
    %1912 = vmatpush1.bf16.msra.mxu0 %v1763
    %1913 = vmatprep.subr.bf16.mxu0 0
    %1914 = vmatpush2.bf16.msra.mxu0 0
    %1915 = vmatprep.subr.bf16.mxu0 0
    %1916 = vmatpush2.bf16.msra.mxu0 0
    %1917 = vmatprep.subr.bf16.mxu0 0
    %1918 = vmatpush2.bf16.msra.mxu0 0
    %1919 = vmatprep.subr.bf16.mxu0 0
    %1920 = vmatpush2.bf16.msra.mxu0 0
    %1921 = vmatprep.subr.bf16.mxu0 0
    %1922 = vmatpush2.bf16.msra.mxu0 0
    %1923 = vmatprep.subr.bf16.mxu0 0
    %1924 = vmatpush2.bf16.msra.mxu0 0
    %1925 = vmatprep.subr.bf16.mxu0 0
    %1926 = vmatpush2.bf16.msra.mxu0 0
    %1927 = vmatprep.subr.bf16.mxu0 0
    %1928 = vmatpush2.bf16.msra.mxu0 0
    %1929 = vmatprep.mubr.bf16.mxu0 0
    %1930 = vmatmul.mubr.bf16.gmra.mxu0 %v1895
    %v1931 = vpop.f32.mrf.mxu0
    %v1932 = vadd.f32 0.0, %v1931
    %v1933 = vpop.f32.mrf.mxu0
    %v1934 = vpop.f32.mrf.mxu0
    %v1935 = vpop.f32.mrf.mxu0
    %1936 = vdwg.mxu0
    %v1937 = vpack.c.bf16 %v1846, %v1803
    %v1938 = vpack.c.bf16 %v1932, %v1889
    %v1939 = vpack.c.bf16 %v361, %v360
    %v1940 = vpack.c.bf16 %v363, %v362
    %v1945 = vunpack.c.l.b16 %v115
    %v1946 = vunpack.c.l.b16 %v116
    %v1947 = vunpack.c.l.b16 %v117
    %v1948 = vunpack.c.l.b16 %v118
    %v1949 = vpack.c.b16 %v1946, %v1945
    %v1950 = vpack.c.b16 %v1948, %v1947
    %v1954 = vsel %vm364, %v1939, 0
    %v1957 = vsel %vm364, %v1940, 0
    %1959 = vmatprep.subr.bf16.mxu0 0
    %1960 = vmatpush1.bf16.msra.mxu0 0
    %1961 = vmatprep.subr.bf16.mxu0 0
    %1962 = vmatpush1.bf16.msra.mxu0 0
    %1963 = vmatprep.subr.bf16.mxu0 0
    %1964 = vmatpush1.bf16.msra.mxu0 0
    %1965 = vmatprep.subr.bf16.mxu0 0
    %1966 = vmatpush1.bf16.msra.mxu0 0
    %1967 = vmatprep.subr.bf16.mxu0 0
    %1968 = vmatpush1.bf16.msra.mxu0 0
    %1969 = vmatprep.subr.bf16.mxu0 0
    %1970 = vmatpush1.bf16.msra.mxu0 0
    %1971 = vmatprep.subr.bf16.mxu0 0
    %1972 = vmatpush1.bf16.msra.mxu0 %v1950
    %1973 = vmatprep.subr.bf16.mxu0 0
    %1974 = vmatpush1.bf16.msra.mxu0 %v1949
    %1975 = vmatprep.subr.bf16.mxu0 0
    %1976 = vmatpush2.bf16.msra.mxu0 0
    %1977 = vmatprep.subr.bf16.mxu0 0
    %1978 = vmatpush2.bf16.msra.mxu0 0
    %1979 = vmatprep.subr.bf16.mxu0 0
    %1980 = vmatpush2.bf16.msra.mxu0 0
    %1981 = vmatprep.subr.bf16.mxu0 0
    %1982 = vmatpush2.bf16.msra.mxu0 0
    %1983 = vmatprep.subr.bf16.mxu0 0
    %1984 = vmatpush2.bf16.msra.mxu0 0
    %1985 = vmatprep.subr.bf16.mxu0 0
    %1986 = vmatpush2.bf16.msra.mxu0 0
    %1987 = vmatprep.subr.bf16.mxu0 0
    %1988 = vmatpush2.bf16.msra.mxu0 0
    %1989 = vmatprep.subr.bf16.mxu0 0
    %1990 = vmatpush2.bf16.msra.mxu0 0
    %1991 = vmatprep.mubr.bf16.mxu0 0
    %1992 = vmatmul.mubr.bf16.gmra.mxu0 %v1954
    %v1993 = vpop.f32.mrf.mxu0
    %v1994 = vadd.f32 0.0, %v1993
    %v1995 = vpop.f32.mrf.mxu0
    %v1996 = vpop.f32.mrf.mxu0
    %v1997 = vadd.f32 0.0, %v1996
    %v1998 = vpop.f32.mrf.mxu0
    %1999 = vmatprep.mubr.bf16.mxu0 0
    %2000 = vmatmul.mubr.bf16.gmra.mxu0 %v1957
    %v2001 = vpop.f32.mrf.mxu0
    %v2002 = vadd.f32 0.0, %v2001
    %v2003 = vpop.f32.mrf.mxu0
    %v2004 = vpop.f32.mrf.mxu0
    %v2005 = vadd.f32 0.0, %v2004
    %v2006 = vpop.f32.mrf.mxu0
    %2007 = vdwg.mxu0
    %v2012 = vunpack.c.l.b16 %v106
    %v2013 = vunpack.c.l.b16 %v107
    %v2014 = vunpack.c.l.b16 %v108
    %v2015 = vunpack.c.l.b16 %v109
    %v2016 = vpack.c.b16 %v2013, %v2012
    %v2017 = vpack.c.b16 %v2015, %v2014
    %v2021 = vsel %vm364, %v1937, 0
    %v2024 = vsel %vm364, %v1938, 0
    %2026 = vmatprep.subr.bf16.mxu0 0
    %2027 = vmatpush1.bf16.msra.mxu0 0
    %2028 = vmatprep.subr.bf16.mxu0 0
    %2029 = vmatpush1.bf16.msra.mxu0 0
    %2030 = vmatprep.subr.bf16.mxu0 0
    %2031 = vmatpush1.bf16.msra.mxu0 0
    %2032 = vmatprep.subr.bf16.mxu0 0
    %2033 = vmatpush1.bf16.msra.mxu0 0
    %2034 = vmatprep.subr.bf16.mxu0 0
    %2035 = vmatpush1.bf16.msra.mxu0 0
    %2036 = vmatprep.subr.bf16.mxu0 0
    %2037 = vmatpush1.bf16.msra.mxu0 0
    %2038 = vmatprep.subr.bf16.mxu0 0
    %2039 = vmatpush1.bf16.msra.mxu0 %v2017
    %2040 = vmatprep.subr.bf16.mxu0 0
    %2041 = vmatpush1.bf16.msra.mxu0 %v2016
    %2042 = vmatprep.subr.bf16.mxu0 0
    %2043 = vmatpush2.bf16.msra.mxu0 0
    %2044 = vmatprep.subr.bf16.mxu0 0
    %2045 = vmatpush2.bf16.msra.mxu0 0
    %2046 = vmatprep.subr.bf16.mxu0 0
    %2047 = vmatpush2.bf16.msra.mxu0 0
    %2048 = vmatprep.subr.bf16.mxu0 0
    %2049 = vmatpush2.bf16.msra.mxu0 0
    %2050 = vmatprep.subr.bf16.mxu0 0
    %2051 = vmatpush2.bf16.msra.mxu0 0
    %2052 = vmatprep.subr.bf16.mxu0 0
    %2053 = vmatpush2.bf16.msra.mxu0 0
    %2054 = vmatprep.subr.bf16.mxu0 0
    %2055 = vmatpush2.bf16.msra.mxu0 0
    %2056 = vmatprep.subr.bf16.mxu0 0
    %2057 = vmatpush2.bf16.msra.mxu0 0
    %2058 = vmatprep.mubr.bf16.mxu0 0
    %2059 = vmatmul.mubr.bf16.gmra.mxu0 %v2021
    %v2060 = vpop.f32.mrf.mxu0
    %v2061 = vadd.f32 %v1994, %v2060
    %v2062 = vpop.f32.mrf.mxu0
    %v2063 = vpop.f32.mrf.mxu0
    %v2064 = vadd.f32 %v1997, %v2063
    %v2065 = vpop.f32.mrf.mxu0
    %2066 = vmatprep.mubr.bf16.mxu0 0
    %2067 = vmatmul.mubr.bf16.gmra.mxu0 %v2024
    %v2068 = vpop.f32.mrf.mxu0
    %v2069 = vadd.f32 %v2002, %v2068
    %v2070 = vpop.f32.mrf.mxu0
    %v2071 = vpop.f32.mrf.mxu0
    %v2072 = vadd.f32 %v2005, %v2071
    %v2073 = vpop.f32.mrf.mxu0
    %2074 = vdwg.mxu0
    %v2075 = vlaneseq
    %v2076 = vshrl.u32 %v2075, 7
    %v2077 = vsub.s32 0, %v2076
    %v2078 = vrot.slane %v120, %v2077
    %v2079 = vadd.f32 %v2061, %v2078
    %v2080 = vadd.f32 %v2064, %v2078
    %v2081 = vadd.f32 %v2069, %v2078
    %v2082 = vadd.f32 %v2072, %v2078
    %v2083 = vxor.u32 %v2079, 2147483648
    %v2084 = vxor.u32 %v2080, 2147483648
    %v2085 = vxor.u32 %v2081, 2147483648
    %v2086 = vxor.u32 %v2082, 2147483648
    %v2087 = vmul.f32 %v2083, 1.442695
    %v2088 = vpow.pop %v2087
    %v2089 = vmul.f32 %v2084, 1.442695
    %v2090 = vpow.pop %v2089
    %v2091 = vmul.f32 %v2085, 1.442695
    %v2092 = vpow.pop %v2091
    %v2093 = vmul.f32 %v2086, 1.442695
    %v2094 = vpow.pop %v2093
    %v2095 = vadd.f32 %v2088, 1.0
    %v2096 = vadd.f32 %v2090, 1.0
    %v2097 = vadd.f32 %v2092, 1.0
    %v2098 = vadd.f32 %v2094, 1.0
    %v2099 = vrcp.pop %v2095
    %v2100 = vmul.f32 1.0, %v2099
    %v2101 = vrcp.pop %v2096
    %v2102 = vmul.f32 1.0, %v2101
    %v2103 = vrcp.pop %v2097
    %v2104 = vmul.f32 1.0, %v2103
    %v2105 = vrcp.pop %v2098
    %v2106 = vmul.f32 1.0, %v2105
    %v2107 = vtanh.pop %v2079
    %v2108 = vtanh.pop %v2080
    %v2109 = vtanh.pop %v2081
    %v2110 = vtanh.pop %v2082
    %v2111 = vmul.f32 %v2100, 0.0
    %v2112 = vmul.f32 %v2102, 0.0
    %v2113 = vmul.f32 %v2104, 0.0
    %v2114 = vmul.f32 %v2106, 0.0
    %2119 = vrot.lane.b32.xlu0 %v2107, 32
    %v2120 = vpop.permute.xlu0 %2119
    %2121 = vrot.lane.b32.xlu0 %v2108, 32
    %v2122 = vpop.permute.xlu0 %2121
    %2123 = vrot.lane.b32.xlu0 %v2109, 32
    %v2124 = vpop.permute.xlu0 %2123
    %2125 = vrot.lane.b32.xlu0 %v2110, 32
    %v2126 = vpop.permute.xlu0 %2125
    %v2131 = vmul.f32 %v2100, %v2120
    %v2132 = vmul.f32 %v2102, %v2122
    %v2133 = vmul.f32 %v2104, %v2124
    %v2134 = vmul.f32 %v2106, %v2126
    %2139 = vrot.lane.b32.xlu0 %v2131, 32
    %v2140 = vpop.permute.xlu0 %2139
    %2141 = vrot.lane.b32.xlu0 %v2132, 32
    %v2142 = vpop.permute.xlu0 %2141
    %2143 = vrot.lane.b32.xlu0 %v2133, 32
    %v2144 = vpop.permute.xlu0 %2143
    %2145 = vrot.lane.b32.xlu0 %v2134, 32
    %v2146 = vpop.permute.xlu0 %2145
    %v2151 = vadd.f32 %v2111, %v2140
    %v2152 = vadd.f32 %v2112, %v2142
    %v2153 = vadd.f32 %v2113, %v2144
    %v2154 = vadd.f32 %v2114, %v2146
    %v2155 = vtanh.pop %v2151
    %v2156 = vtanh.pop %v2152
    %v2157 = vtanh.pop %v2153
    %v2158 = vtanh.pop %v2154
    %2163 = vrot.lane.b32.xlu0 %v2155, 32
    %v2164 = vpop.permute.xlu0 %2163
    %2165 = vrot.lane.b32.xlu0 %v2156, 32
    %v2166 = vpop.permute.xlu0 %2165
    %2167 = vrot.lane.b32.xlu0 %v2157, 32
    %v2168 = vpop.permute.xlu0 %2167
    %2169 = vrot.lane.b32.xlu0 %v2158, 32
    %v2170 = vpop.permute.xlu0 %2169
    %v2175 = vmul.f32 %v2100, %v2164
    %v2176 = vmul.f32 %v2102, %v2166
    %v2177 = vmul.f32 %v2104, %v2168
    %v2178 = vmul.f32 %v2106, %v2170
    %2183 = vrot.lane.b32.xlu0 %v2175, 64
    %v2184 = vpop.permute.xlu0 %2183
    %2185 = vrot.lane.b32.xlu0 %v2176, 64
    %v2186 = vpop.permute.xlu0 %2185
    %2187 = vrot.lane.b32.xlu0 %v2177, 64
    %v2188 = vpop.permute.xlu0 %2187
    %2189 = vrot.lane.b32.xlu0 %v2178, 64
    %v2190 = vpop.permute.xlu0 %2189
    %v2195 = vsel %vm364, %v2184, 0.0
    %2196 = vadd.xlane.f32.xlu0 %v2195
    %v2197 = vpop.xlane.xlu0 %2196
    %v2198 = vsel %vm364, %v2186, 0.0
    %2199 = vadd.xlane.f32.xlu0 %v2198
    %v2200 = vpop.xlane.xlu0 %2199
    %v2201 = vsel %vm364, %v2188, 0.0
    %2202 = vadd.xlane.f32.xlu0 %v2201
    %v2203 = vpop.xlane.xlu0 %2202
    %v2204 = vsel %vm364, %v2190, 0.0
    %2205 = vadd.xlane.f32.xlu0 %v2204
    %v2206 = vpop.xlane.xlu0 %2205
    %v2207 = vmul.f32 %v2197, %v377
    %v2208 = vmul.f32 %v2200, %v377
    %v2209 = vmul.f32 %v2203, %v377
    %v2210 = vmul.f32 %v2206, %v377
    %v2211 = vsub.f32 %v2175, %v2207
    %v2212 = vsub.f32 %v2176, %v2208
    %v2213 = vsub.f32 %v2177, %v2209
    %v2214 = vsub.f32 %v2178, %v2210
    %v2215 = vmul.f32 %v2211, %v2211
    %v2216 = vmul.f32 %v2212, %v2212
    %v2217 = vmul.f32 %v2213, %v2213
    %v2218 = vmul.f32 %v2214, %v2214
    %2223 = vrot.lane.b32.xlu0 %v2215, 64
    %v2224 = vpop.permute.xlu0 %2223
    %2225 = vrot.lane.b32.xlu0 %v2216, 64
    %v2226 = vpop.permute.xlu0 %2225
    %2227 = vrot.lane.b32.xlu0 %v2217, 64
    %v2228 = vpop.permute.xlu0 %2227
    %2229 = vrot.lane.b32.xlu0 %v2218, 64
    %v2230 = vpop.permute.xlu0 %2229
    %v2235 = vsel %vm364, %v2224, 0.0
    %2236 = vadd.xlane.f32.xlu0 %v2235
    %v2237 = vpop.xlane.xlu0 %2236
    %v2238 = vsel %vm364, %v2226, 0.0
    %2239 = vadd.xlane.f32.xlu0 %v2238
    %v2240 = vpop.xlane.xlu0 %2239
    %v2241 = vsel %vm364, %v2228, 0.0
    %2242 = vadd.xlane.f32.xlu0 %v2241
    %v2243 = vpop.xlane.xlu0 %2242
    %v2244 = vsel %vm364, %v2230, 0.0
    %2245 = vadd.xlane.f32.xlu0 %v2244
    %v2246 = vpop.xlane.xlu0 %2245
    %v2247 = vmul.f32 %v2237, %v377
    %v2248 = vmul.f32 %v2240, %v377
    %v2249 = vmul.f32 %v2243, %v377
    %v2250 = vmul.f32 %v2246, %v377
    %v2251 = vadd.f32 %v2247, 1e-05
    %v2252 = vadd.f32 %v2248, 1e-05
    %v2253 = vadd.f32 %v2249, 1e-05
    %v2254 = vadd.f32 %v2250, 1e-05
    %v2255 = vrsqrt.pop %v2251
    %v2256 = vrsqrt.pop %v2252
    %v2257 = vrsqrt.pop %v2253
    %v2258 = vrsqrt.pop %v2254
    %v2259 = vmul.f32 %v2211, %v2255
    %v2260 = vmul.f32 %v2212, %v2256
    %v2261 = vmul.f32 %v2213, %v2257
    %v2262 = vmul.f32 %v2214, %v2258
    %2264 = vrot.lane.b32.xlu0 %v421, 64
    %v2265 = vpop.permute.xlu0 %2264
    %v2267 = vmul.f32 %v2259, %v2265
    %v2268 = vmul.f32 %v2260, %v2265
    %v2269 = vmul.f32 %v2261, %v2265
    %v2270 = vmul.f32 %v2262, %v2265
    %2272 = vrot.lane.b32.xlu0 %v429, 64
    %v2273 = vpop.permute.xlu0 %2272
    %v2275 = vadd.f32 %v2267, %v2273
    %v2276 = vadd.f32 %v2268, %v2273
    %v2277 = vadd.f32 %v2269, %v2273
    %v2278 = vadd.f32 %v2270, %v2273
    %v2279 = vpack.c.bf16 %v2276, %v2275
    %v2280 = vpack.c.bf16 %v2278, %v2277
    %2283 = vrot.lane.b32.xlu0 %v2279, 64
    %v2284 = vpop.permute.xlu0 %2283
    %2285 = vrot.lane.b32.xlu0 %v2280, 64
    %v2286 = vpop.permute.xlu0 %2285
    %v2288 = vsel %vm364, %v2284, 0
    %v2291 = vsel %vm364, %v2286, 0
    %2293 = vmatprep.subr.bf16.mxu0 0
    %2294 = vmatpush1.bf16.msra.mxu0 0
    %2295 = vmatprep.subr.bf16.mxu0 0
    %2296 = vmatpush1.bf16.msra.mxu0 0
    %2297 = vmatprep.subr.bf16.mxu0 0
    %2298 = vmatpush1.bf16.msra.mxu0 0
    %2299 = vmatprep.subr.bf16.mxu0 0
    %2300 = vmatpush1.bf16.msra.mxu0 0
    %2301 = vmatprep.subr.bf16.mxu0 0
    %2302 = vmatpush1.bf16.msra.mxu0 0
    %2303 = vmatprep.subr.bf16.mxu0 0
    %2304 = vmatpush1.bf16.msra.mxu0 0
    %2305 = vmatprep.subr.bf16.mxu0 0
    %2306 = vmatpush1.bf16.msra.mxu0 %v449
    %2307 = vmatprep.subr.bf16.mxu0 0
    %2308 = vmatpush1.bf16.msra.mxu0 %v448
    %2309 = vmatprep.subr.bf16.mxu0 0
    %2310 = vmatpush2.bf16.msra.mxu0 0
    %2311 = vmatprep.subr.bf16.mxu0 0
    %2312 = vmatpush2.bf16.msra.mxu0 0
    %2313 = vmatprep.subr.bf16.mxu0 0
    %2314 = vmatpush2.bf16.msra.mxu0 0
    %2315 = vmatprep.subr.bf16.mxu0 0
    %2316 = vmatpush2.bf16.msra.mxu0 0
    %2317 = vmatprep.subr.bf16.mxu0 0
    %2318 = vmatpush2.bf16.msra.mxu0 0
    %2319 = vmatprep.subr.bf16.mxu0 0
    %2320 = vmatpush2.bf16.msra.mxu0 0
    %2321 = vmatprep.subr.bf16.mxu0 0
    %2322 = vmatpush2.bf16.msra.mxu0 0
    %2323 = vmatprep.subr.bf16.mxu0 0
    %2324 = vmatpush2.bf16.msra.mxu0 0
    %2325 = vmatprep.mubr.bf16.mxu0 0
    %2326 = vmatmul.mubr.bf16.gmra.mxu0 %v2288
    %v2327 = vpop.f32.mrf.mxu0
    %v2328 = vadd.f32 %v439, %v2327
    %v2329 = vpop.f32.mrf.mxu0
    %v2330 = vpop.f32.mrf.mxu0
    %v2331 = vadd.f32 %v439, %v2330
    %v2332 = vpop.f32.mrf.mxu0
    %2333 = vmatprep.mubr.bf16.mxu0 0
    %2334 = vmatmul.mubr.bf16.gmra.mxu0 %v2291
    %v2335 = vpop.f32.mrf.mxu0
    %v2336 = vadd.f32 %v439, %v2335
    %v2337 = vpop.f32.mrf.mxu0
    %v2338 = vpop.f32.mrf.mxu0
    %v2339 = vadd.f32 %v439, %v2338
    %v2340 = vpop.f32.mrf.mxu0
    %2341 = vdwg.mxu0
    %v2342 = vmax.f32 %v2328, 0.0
    %v2343 = vmax.f32 %v2331, 0.0
    %v2344 = vmax.f32 %v2336, 0.0
    %v2345 = vmax.f32 %v2339, 0.0
    %v2346 = vpack.c.bf16 %v2343, %v2342
    %v2347 = vpack.c.bf16 %v2345, %v2344
    %v2349 = vsel %vm364, %v2346, 0
    %v2352 = vsel %vm364, %v2347, 0
    %2354 = vmatprep.subr.bf16.mxu0 0
    %2355 = vmatpush1.bf16.msra.mxu0 0
    %2356 = vmatprep.subr.bf16.mxu0 0
    %2357 = vmatpush1.bf16.msra.mxu0 0
    %2358 = vmatprep.subr.bf16.mxu0 0
    %2359 = vmatpush1.bf16.msra.mxu0 0
    %2360 = vmatprep.subr.bf16.mxu0 0
    %2361 = vmatpush1.bf16.msra.mxu0 0
    %2362 = vmatprep.subr.bf16.mxu0 0
    %2363 = vmatpush1.bf16.msra.mxu0 0
    %2364 = vmatprep.subr.bf16.mxu0 0
    %2365 = vmatpush1.bf16.msra.mxu0 0
    %2366 = vmatprep.subr.bf16.mxu0 0
    %2367 = vmatpush1.bf16.msra.mxu0 %v526
    %2368 = vmatprep.subr.bf16.mxu0 0
    %2369 = vmatpush1.bf16.msra.mxu0 %v525
    %2370 = vmatprep.subr.bf16.mxu0 0
    %2371 = vmatpush2.bf16.msra.mxu0 0
    %2372 = vmatprep.subr.bf16.mxu0 0
    %2373 = vmatpush2.bf16.msra.mxu0 0
    %2374 = vmatprep.subr.bf16.mxu0 0
    %2375 = vmatpush2.bf16.msra.mxu0 0
    %2376 = vmatprep.subr.bf16.mxu0 0
    %2377 = vmatpush2.bf16.msra.mxu0 0
    %2378 = vmatprep.subr.bf16.mxu0 0
    %2379 = vmatpush2.bf16.msra.mxu0 0
    %2380 = vmatprep.subr.bf16.mxu0 0
    %2381 = vmatpush2.bf16.msra.mxu0 0
    %2382 = vmatprep.subr.bf16.mxu0 0
    %2383 = vmatpush2.bf16.msra.mxu0 0
    %2384 = vmatprep.subr.bf16.mxu0 0
    %2385 = vmatpush2.bf16.msra.mxu0 0
    %2386 = vmatprep.mubr.bf16.mxu0 0
    %2387 = vmatmul.mubr.bf16.gmra.mxu0 %v2349
    %v2388 = vpop.f32.mrf.mxu0
    %v2389 = vadd.f32 %v516, %v2388
    %v2390 = vpop.f32.mrf.mxu0
    %v2391 = vpop.f32.mrf.mxu0
    %v2392 = vadd.f32 %v516, %v2391
    %v2393 = vpop.f32.mrf.mxu0
    %2394 = vmatprep.mubr.bf16.mxu0 0
    %2395 = vmatmul.mubr.bf16.gmra.mxu0 %v2352
    %v2396 = vpop.f32.mrf.mxu0
    %v2397 = vadd.f32 %v516, %v2396
    %v2398 = vpop.f32.mrf.mxu0
    %v2399 = vpop.f32.mrf.mxu0
    %v2400 = vadd.f32 %v516, %v2399
    %v2401 = vpop.f32.mrf.mxu0
    %2402 = vdwg.mxu0
    %v2403 = vmax.f32 %v2389, 0.0
    %v2404 = vmax.f32 %v2392, 0.0
    %v2405 = vmax.f32 %v2397, 0.0
    %v2406 = vmax.f32 %v2400, 0.0
    %v2407 = vpack.c.bf16 %v2404, %v2403
    %v2408 = vpack.c.bf16 %v2406, %v2405
    %v2410 = vsel %vm364, %v2407, 0
    %v2413 = vsel %vm364, %v2408, 0
    %2415 = vmatprep.subr.bf16.mxu0 0
    %2416 = vmatpush1.bf16.msra.mxu0 0
    %2417 = vmatprep.subr.bf16.mxu0 0
    %2418 = vmatpush1.bf16.msra.mxu0 0
    %2419 = vmatprep.subr.bf16.mxu0 0
    %2420 = vmatpush1.bf16.msra.mxu0 0
    %2421 = vmatprep.subr.bf16.mxu0 0
    %2422 = vmatpush1.bf16.msra.mxu0 0
    %2423 = vmatprep.subr.bf16.mxu0 0
    %2424 = vmatpush1.bf16.msra.mxu0 0
    %2425 = vmatprep.subr.bf16.mxu0 0
    %2426 = vmatpush1.bf16.msra.mxu0 0
    %2427 = vmatprep.subr.bf16.mxu0 0
    %2428 = vmatpush1.bf16.msra.mxu0 %v603
    %2429 = vmatprep.subr.bf16.mxu0 0
    %2430 = vmatpush1.bf16.msra.mxu0 %v602
    %2431 = vmatprep.subr.bf16.mxu0 0
    %2432 = vmatpush2.bf16.msra.mxu0 0
    %2433 = vmatprep.subr.bf16.mxu0 0
    %2434 = vmatpush2.bf16.msra.mxu0 0
    %2435 = vmatprep.subr.bf16.mxu0 0
    %2436 = vmatpush2.bf16.msra.mxu0 0
    %2437 = vmatprep.subr.bf16.mxu0 0
    %2438 = vmatpush2.bf16.msra.mxu0 0
    %2439 = vmatprep.subr.bf16.mxu0 0
    %2440 = vmatpush2.bf16.msra.mxu0 0
    %2441 = vmatprep.subr.bf16.mxu0 0
    %2442 = vmatpush2.bf16.msra.mxu0 0
    %2443 = vmatprep.subr.bf16.mxu0 0
    %2444 = vmatpush2.bf16.msra.mxu0 0
    %2445 = vmatprep.subr.bf16.mxu0 0
    %2446 = vmatpush2.bf16.msra.mxu0 0
    %2447 = vmatprep.mubr.bf16.mxu0 0
    %2448 = vmatmul.mubr.bf16.gmra.mxu0 %v2410
    %v2449 = vpop.f32.mrf.mxu0
    %v2450 = vadd.f32 %v593, %v2449
    %v2451 = vpop.f32.mrf.mxu0
    %v2452 = vpop.f32.mrf.mxu0
    %v2453 = vadd.f32 %v593, %v2452
    %v2454 = vpop.f32.mrf.mxu0
    %2455 = vmatprep.mubr.bf16.mxu0 0
    %2456 = vmatmul.mubr.bf16.gmra.mxu0 %v2413
    %v2457 = vpop.f32.mrf.mxu0
    %v2458 = vadd.f32 %v593, %v2457
    %v2459 = vpop.f32.mrf.mxu0
    %v2460 = vpop.f32.mrf.mxu0
    %v2461 = vadd.f32 %v593, %v2460
    %v2462 = vpop.f32.mrf.mxu0
    %2463 = vdwg.mxu0
    %v2464 = vpack.c.bf16 %v2453, %v2450
    %v2465 = vpack.c.bf16 %v2461, %v2458
    %v2468 = vunpack.c.l.b16 %v2464
    %v2469 = vunpack.c.h.b16 %v2464
    %v2470 = vunpack.c.l.b16 %v2465
    %v2471 = vunpack.c.h.b16 %v2465
    %v2472 = vpack.c.b16 %v2468, %v2468
    %v2473 = vpack.c.b16 %v2469, %v2469
    %v2474 = vpack.c.b16 %v2470, %v2470
    %v2475 = vpack.c.b16 %v2471, %v2471
    %v2477 = vsel %vm677, %v2472, 0
    %2479 = vmatprep.subr.bf16.mxu0 0
    %2480 = vmatpush1.bf16.msra.mxu0 0
    %2481 = vmatprep.subr.bf16.mxu0 0
    %2482 = vmatpush1.bf16.msra.mxu0 0
    %2483 = vmatprep.subr.bf16.mxu0 0
    %2484 = vmatpush1.bf16.msra.mxu0 0
    %2485 = vmatprep.subr.bf16.mxu0 0
    %2486 = vmatpush1.bf16.msra.mxu0 0
    %2487 = vmatprep.subr.bf16.mxu0 0
    %2488 = vmatpush1.bf16.msra.mxu0 0
    %2489 = vmatprep.subr.bf16.mxu0 0
    %2490 = vmatpush1.bf16.msra.mxu0 0
    %2491 = vmatprep.subr.bf16.mxu0 0
    %2492 = vmatpush1.bf16.msra.mxu0 0
    %2493 = vmatprep.subr.bf16.mxu0 0
    %2494 = vmatpush1.bf16.msra.mxu0 %v2477
    %2495 = vmatprep.subr.bf16.mxu0 0
    %2496 = vmatpush2.bf16.msra.mxu0 0
    %2497 = vmatprep.subr.bf16.mxu0 0
    %2498 = vmatpush2.bf16.msra.mxu0 0
    %2499 = vmatprep.subr.bf16.mxu0 0
    %2500 = vmatpush2.bf16.msra.mxu0 0
    %2501 = vmatprep.subr.bf16.mxu0 0
    %2502 = vmatpush2.bf16.msra.mxu0 0
    %2503 = vmatprep.subr.bf16.mxu0 0
    %2504 = vmatpush2.bf16.msra.mxu0 0
    %2505 = vmatprep.subr.bf16.mxu0 0
    %2506 = vmatpush2.bf16.msra.mxu0 0
    %2507 = vmatprep.subr.bf16.mxu0 0
    %2508 = vmatpush2.bf16.msra.mxu0 0
    %2509 = vmatprep.subr.bf16.mxu0 0
    %2510 = vmatpush2.bf16.msra.mxu0 0
    %2511 = vmatprep.mubr.bf16.mxu0 0
    %2512 = vmatmul.mubr.bf16.gmra.mxu0 %v675
    %v2513 = vpop.f32.mrf.mxu0
    %v2514 = vadd.f32 0.0, %v2513
    %v2515 = vpop.f32.mrf.mxu0
    %v2516 = vpop.f32.mrf.mxu0
    %v2517 = vadd.f32 0.0, %v2516
    %v2518 = vpop.f32.mrf.mxu0
    %2519 = vdwg.mxu0
    %v2521 = vsel %vm677, %v2473, 0
    %2523 = vmatprep.subr.bf16.mxu0 0
    %2524 = vmatpush1.bf16.msra.mxu0 0
    %2525 = vmatprep.subr.bf16.mxu0 0
    %2526 = vmatpush1.bf16.msra.mxu0 0
    %2527 = vmatprep.subr.bf16.mxu0 0
    %2528 = vmatpush1.bf16.msra.mxu0 0
    %2529 = vmatprep.subr.bf16.mxu0 0
    %2530 = vmatpush1.bf16.msra.mxu0 0
    %2531 = vmatprep.subr.bf16.mxu0 0
    %2532 = vmatpush1.bf16.msra.mxu0 0
    %2533 = vmatprep.subr.bf16.mxu0 0
    %2534 = vmatpush1.bf16.msra.mxu0 0
    %2535 = vmatprep.subr.bf16.mxu0 0
    %2536 = vmatpush1.bf16.msra.mxu0 0
    %2537 = vmatprep.subr.bf16.mxu0 0
    %2538 = vmatpush1.bf16.msra.mxu0 %v2521
    %2539 = vmatprep.subr.bf16.mxu0 0
    %2540 = vmatpush2.bf16.msra.mxu0 0
    %2541 = vmatprep.subr.bf16.mxu0 0
    %2542 = vmatpush2.bf16.msra.mxu0 0
    %2543 = vmatprep.subr.bf16.mxu0 0
    %2544 = vmatpush2.bf16.msra.mxu0 0
    %2545 = vmatprep.subr.bf16.mxu0 0
    %2546 = vmatpush2.bf16.msra.mxu0 0
    %2547 = vmatprep.subr.bf16.mxu0 0
    %2548 = vmatpush2.bf16.msra.mxu0 0
    %2549 = vmatprep.subr.bf16.mxu0 0
    %2550 = vmatpush2.bf16.msra.mxu0 0
    %2551 = vmatprep.subr.bf16.mxu0 0
    %2552 = vmatpush2.bf16.msra.mxu0 0
    %2553 = vmatprep.subr.bf16.mxu0 0
    %2554 = vmatpush2.bf16.msra.mxu0 0
    %2555 = vmatprep.mubr.bf16.mxu0 0
    %2556 = vmatmul.mubr.bf16.gmra.mxu0 %v723
    %v2557 = vpop.f32.mrf.mxu0
    %v2558 = vadd.f32 0.0, %v2557
    %v2559 = vpop.f32.mrf.mxu0
    %v2560 = vpop.f32.mrf.mxu0
    %v2561 = vadd.f32 0.0, %v2560
    %v2562 = vpop.f32.mrf.mxu0
    %2563 = vdwg.mxu0
    %v2565 = vsel %vm677, %v2474, 0
    %2567 = vmatprep.subr.bf16.mxu0 0
    %2568 = vmatpush1.bf16.msra.mxu0 0
    %2569 = vmatprep.subr.bf16.mxu0 0
    %2570 = vmatpush1.bf16.msra.mxu0 0
    %2571 = vmatprep.subr.bf16.mxu0 0
    %2572 = vmatpush1.bf16.msra.mxu0 0
    %2573 = vmatprep.subr.bf16.mxu0 0
    %2574 = vmatpush1.bf16.msra.mxu0 0
    %2575 = vmatprep.subr.bf16.mxu0 0
    %2576 = vmatpush1.bf16.msra.mxu0 0
    %2577 = vmatprep.subr.bf16.mxu0 0
    %2578 = vmatpush1.bf16.msra.mxu0 0
    %2579 = vmatprep.subr.bf16.mxu0 0
    %2580 = vmatpush1.bf16.msra.mxu0 0
    %2581 = vmatprep.subr.bf16.mxu0 0
    %2582 = vmatpush1.bf16.msra.mxu0 %v2565
    %2583 = vmatprep.subr.bf16.mxu0 0
    %2584 = vmatpush2.bf16.msra.mxu0 0
    %2585 = vmatprep.subr.bf16.mxu0 0
    %2586 = vmatpush2.bf16.msra.mxu0 0
    %2587 = vmatprep.subr.bf16.mxu0 0
    %2588 = vmatpush2.bf16.msra.mxu0 0
    %2589 = vmatprep.subr.bf16.mxu0 0
    %2590 = vmatpush2.bf16.msra.mxu0 0
    %2591 = vmatprep.subr.bf16.mxu0 0
    %2592 = vmatpush2.bf16.msra.mxu0 0
    %2593 = vmatprep.subr.bf16.mxu0 0
    %2594 = vmatpush2.bf16.msra.mxu0 0
    %2595 = vmatprep.subr.bf16.mxu0 0
    %2596 = vmatpush2.bf16.msra.mxu0 0
    %2597 = vmatprep.subr.bf16.mxu0 0
    %2598 = vmatpush2.bf16.msra.mxu0 0
    %2599 = vmatprep.mubr.bf16.mxu0 0
    %2600 = vmatmul.mubr.bf16.gmra.mxu0 %v770
    %v2601 = vpop.f32.mrf.mxu0
    %v2602 = vadd.f32 0.0, %v2601
    %v2603 = vpop.f32.mrf.mxu0
    %v2604 = vpop.f32.mrf.mxu0
    %v2605 = vadd.f32 0.0, %v2604
    %v2606 = vpop.f32.mrf.mxu0
    %2607 = vdwg.mxu0
    %v2609 = vsel %vm677, %v2475, 0
    %2611 = vmatprep.subr.bf16.mxu0 0
    %2612 = vmatpush1.bf16.msra.mxu0 0
    %2613 = vmatprep.subr.bf16.mxu0 0
    %2614 = vmatpush1.bf16.msra.mxu0 0
    %2615 = vmatprep.subr.bf16.mxu0 0
    %2616 = vmatpush1.bf16.msra.mxu0 0
    %2617 = vmatprep.subr.bf16.mxu0 0
    %2618 = vmatpush1.bf16.msra.mxu0 0
    %2619 = vmatprep.subr.bf16.mxu0 0
    %2620 = vmatpush1.bf16.msra.mxu0 0
    %2621 = vmatprep.subr.bf16.mxu0 0
    %2622 = vmatpush1.bf16.msra.mxu0 0
    %2623 = vmatprep.subr.bf16.mxu0 0
    %2624 = vmatpush1.bf16.msra.mxu0 0
    %2625 = vmatprep.subr.bf16.mxu0 0
    %2626 = vmatpush1.bf16.msra.mxu0 %v2609
    %2627 = vmatprep.subr.bf16.mxu0 0
    %2628 = vmatpush2.bf16.msra.mxu0 0
    %2629 = vmatprep.subr.bf16.mxu0 0
    %2630 = vmatpush2.bf16.msra.mxu0 0
    %2631 = vmatprep.subr.bf16.mxu0 0
    %2632 = vmatpush2.bf16.msra.mxu0 0
    %2633 = vmatprep.subr.bf16.mxu0 0
    %2634 = vmatpush2.bf16.msra.mxu0 0
    %2635 = vmatprep.subr.bf16.mxu0 0
    %2636 = vmatpush2.bf16.msra.mxu0 0
    %2637 = vmatprep.subr.bf16.mxu0 0
    %2638 = vmatpush2.bf16.msra.mxu0 0
    %2639 = vmatprep.subr.bf16.mxu0 0
    %2640 = vmatpush2.bf16.msra.mxu0 0
    %2641 = vmatprep.subr.bf16.mxu0 0
    %2642 = vmatpush2.bf16.msra.mxu0 0
    %2643 = vmatprep.mubr.bf16.mxu0 0
    %2644 = vmatmul.mubr.bf16.gmra.mxu0 %v817
    %v2645 = vpop.f32.mrf.mxu0
    %v2646 = vadd.f32 0.0, %v2645
    %v2647 = vpop.f32.mrf.mxu0
    %v2648 = vpop.f32.mrf.mxu0
    %v2649 = vadd.f32 0.0, %v2648
    %v2650 = vpop.f32.mrf.mxu0
    %2651 = vdwg.mxu0
    %v2652 = vpack.c.bf16 %v2517, %v2514
    %v2653 = vpack.c.bf16 %v2561, %v2558
    %v2654 = vpack.c.bf16 %v2605, %v2602
    %v2655 = vpack.c.bf16 %v2649, %v2646
    %v2656 = vpack.c.bf16 %v1234, %v1233
    %v2657 = vpack.c.bf16 %v1236, %v1235
    %v2658 = vpack.c.bf16 %v1238, %v1237
    %v2659 = vpack.c.bf16 %v1240, %v1239
    %2664 = vrot.lane.b32.xlu0 %v2656, 64
    %v2665 = vpop.permute.xlu0 %2664
    %2666 = vrot.lane.b32.xlu0 %v2657, 64
    %v2667 = vpop.permute.xlu0 %2666
    %2668 = vrot.lane.b32.xlu0 %v2658, 64
    %v2669 = vpop.permute.xlu0 %2668
    %2670 = vrot.lane.b32.xlu0 %v2659, 64
    %v2671 = vpop.permute.xlu0 %2670
    %v2673 = vsel %vm364, %v2665, 0
    %v2676 = vsel %vm364, %v2667, 0
    %v2679 = vsel %vm364, %v2669, 0
    %v2682 = vsel %vm364, %v2671, 0
    %2684 = vmatprep.subr.bf16.mxu0 0
    %2685 = vmatpush1.bf16.msra.mxu0 0
    %2686 = vmatprep.subr.bf16.mxu0 0
    %2687 = vmatpush1.bf16.msra.mxu0 0
    %2688 = vmatprep.subr.bf16.mxu0 0
    %2689 = vmatpush1.bf16.msra.mxu0 0
    %2690 = vmatprep.subr.bf16.mxu0 0
    %2691 = vmatpush1.bf16.msra.mxu0 0
    %2692 = vmatprep.subr.bf16.mxu0 0
    %2693 = vmatpush1.bf16.msra.mxu0 0
    %2694 = vmatprep.subr.bf16.mxu0 0
    %2695 = vmatpush1.bf16.msra.mxu0 0
    %2696 = vmatprep.subr.bf16.mxu0 0
    %2697 = vmatpush1.bf16.msra.mxu0 %v877
    %2698 = vmatprep.subr.bf16.mxu0 0
    %2699 = vmatpush1.bf16.msra.mxu0 %v876
    %2700 = vmatprep.subr.bf16.mxu0 0
    %2701 = vmatpush2.bf16.msra.mxu0 0
    %2702 = vmatprep.subr.bf16.mxu0 0
    %2703 = vmatpush2.bf16.msra.mxu0 0
    %2704 = vmatprep.subr.bf16.mxu0 0
    %2705 = vmatpush2.bf16.msra.mxu0 0
    %2706 = vmatprep.subr.bf16.mxu0 0
    %2707 = vmatpush2.bf16.msra.mxu0 0
    %2708 = vmatprep.subr.bf16.mxu0 0
    %2709 = vmatpush2.bf16.msra.mxu0 0
    %2710 = vmatprep.subr.bf16.mxu0 0
    %2711 = vmatpush2.bf16.msra.mxu0 0
    %2712 = vmatprep.subr.bf16.mxu0 0
    %2713 = vmatpush2.bf16.msra.mxu0 0
    %2714 = vmatprep.subr.bf16.mxu0 0
    %2715 = vmatpush2.bf16.msra.mxu0 0
    %2716 = vmatprep.mubr.bf16.mxu0 0
    %2717 = vmatmul.mubr.bf16.gmra.mxu0 %v2673
    %v2718 = vpop.f32.mrf.mxu0
    %v2719 = vadd.f32 0.0, %v2718
    %v2720 = vpop.f32.mrf.mxu0
    %v2721 = vpop.f32.mrf.mxu0
    %v2722 = vadd.f32 0.0, %v2721
    %v2723 = vpop.f32.mrf.mxu0
    %2724 = vmatprep.mubr.bf16.mxu0 0
    %2725 = vmatmul.mubr.bf16.gmra.mxu0 %v2676
    %v2726 = vpop.f32.mrf.mxu0
    %v2727 = vadd.f32 0.0, %v2726
    %v2728 = vpop.f32.mrf.mxu0
    %v2729 = vpop.f32.mrf.mxu0
    %v2730 = vadd.f32 0.0, %v2729
    %v2731 = vpop.f32.mrf.mxu0
    %2732 = vmatprep.mubr.bf16.mxu0 0
    %2733 = vmatmul.mubr.bf16.gmra.mxu0 %v2679
    %v2734 = vpop.f32.mrf.mxu0
    %v2735 = vadd.f32 0.0, %v2734
    %v2736 = vpop.f32.mrf.mxu0
    %v2737 = vpop.f32.mrf.mxu0
    %v2738 = vadd.f32 0.0, %v2737
    %v2739 = vpop.f32.mrf.mxu0
    %2740 = vmatprep.mubr.bf16.mxu0 0
    %2741 = vmatmul.mubr.bf16.gmra.mxu0 %v2682
    %v2742 = vpop.f32.mrf.mxu0
    %v2743 = vadd.f32 0.0, %v2742
    %v2744 = vpop.f32.mrf.mxu0
    %v2745 = vpop.f32.mrf.mxu0
    %v2746 = vadd.f32 0.0, %v2745
    %v2747 = vpop.f32.mrf.mxu0
    %2748 = vdwg.mxu0
    %v2750 = vsel %vm364, %v2652, 0
    %v2753 = vsel %vm364, %v2653, 0
    %v2756 = vsel %vm364, %v2654, 0
    %v2759 = vsel %vm364, %v2655, 0
    %2761 = vmatprep.subr.bf16.mxu0 0
    %2762 = vmatpush1.bf16.msra.mxu0 0
    %2763 = vmatprep.subr.bf16.mxu0 0
    %2764 = vmatpush1.bf16.msra.mxu0 0
    %2765 = vmatprep.subr.bf16.mxu0 0
    %2766 = vmatpush1.bf16.msra.mxu0 0
    %2767 = vmatprep.subr.bf16.mxu0 0
    %2768 = vmatpush1.bf16.msra.mxu0 0
    %2769 = vmatprep.subr.bf16.mxu0 0
    %2770 = vmatpush1.bf16.msra.mxu0 0
    %2771 = vmatprep.subr.bf16.mxu0 0
    %2772 = vmatpush1.bf16.msra.mxu0 0
    %2773 = vmatprep.subr.bf16.mxu0 0
    %2774 = vmatpush1.bf16.msra.mxu0 %v957
    %2775 = vmatprep.subr.bf16.mxu0 0
    %2776 = vmatpush1.bf16.msra.mxu0 %v956
    %2777 = vmatprep.subr.bf16.mxu0 0
    %2778 = vmatpush2.bf16.msra.mxu0 0
    %2779 = vmatprep.subr.bf16.mxu0 0
    %2780 = vmatpush2.bf16.msra.mxu0 0
    %2781 = vmatprep.subr.bf16.mxu0 0
    %2782 = vmatpush2.bf16.msra.mxu0 0
    %2783 = vmatprep.subr.bf16.mxu0 0
    %2784 = vmatpush2.bf16.msra.mxu0 0
    %2785 = vmatprep.subr.bf16.mxu0 0
    %2786 = vmatpush2.bf16.msra.mxu0 0
    %2787 = vmatprep.subr.bf16.mxu0 0
    %2788 = vmatpush2.bf16.msra.mxu0 0
    %2789 = vmatprep.subr.bf16.mxu0 0
    %2790 = vmatpush2.bf16.msra.mxu0 0
    %2791 = vmatprep.subr.bf16.mxu0 0
    %2792 = vmatpush2.bf16.msra.mxu0 0
    %2793 = vmatprep.mubr.bf16.mxu0 0
    %2794 = vmatmul.mubr.bf16.gmra.mxu0 %v2750
    %v2795 = vpop.f32.mrf.mxu0
    %v2796 = vadd.f32 %v2719, %v2795
    %v2797 = vpop.f32.mrf.mxu0
    %v2798 = vpop.f32.mrf.mxu0
    %v2799 = vadd.f32 %v2722, %v2798
    %v2800 = vpop.f32.mrf.mxu0
    %2801 = vmatprep.mubr.bf16.mxu0 0
    %2802 = vmatmul.mubr.bf16.gmra.mxu0 %v2753
    %v2803 = vpop.f32.mrf.mxu0
    %v2804 = vadd.f32 %v2727, %v2803
    %v2805 = vpop.f32.mrf.mxu0
    %v2806 = vpop.f32.mrf.mxu0
    %v2807 = vadd.f32 %v2730, %v2806
    %v2808 = vpop.f32.mrf.mxu0
    %2809 = vmatprep.mubr.bf16.mxu0 0
    %2810 = vmatmul.mubr.bf16.gmra.mxu0 %v2756
    %v2811 = vpop.f32.mrf.mxu0
    %v2812 = vadd.f32 %v2735, %v2811
    %v2813 = vpop.f32.mrf.mxu0
    %v2814 = vpop.f32.mrf.mxu0
    %v2815 = vadd.f32 %v2738, %v2814
    %v2816 = vpop.f32.mrf.mxu0
    %2817 = vmatprep.mubr.bf16.mxu0 0
    %2818 = vmatmul.mubr.bf16.gmra.mxu0 %v2759
    %v2819 = vpop.f32.mrf.mxu0
    %v2820 = vadd.f32 %v2743, %v2819
    %v2821 = vpop.f32.mrf.mxu0
    %v2822 = vpop.f32.mrf.mxu0
    %v2823 = vadd.f32 %v2746, %v2822
    %v2824 = vpop.f32.mrf.mxu0
    %2825 = vdwg.mxu0
    %v2826 = vadd.f32 %v2796, %v1040
    %v2827 = vadd.f32 %v2799, %v1040
    %v2828 = vadd.f32 %v2804, %v1040
    %v2829 = vadd.f32 %v2807, %v1040
    %v2830 = vadd.f32 %v2812, %v1040
    %v2831 = vadd.f32 %v2815, %v1040
    %v2832 = vadd.f32 %v2820, %v1040
    %v2833 = vadd.f32 %v2823, %v1040
    %v2834 = vxor.u32 %v2826, 2147483648
    %v2835 = vxor.u32 %v2827, 2147483648
    %v2836 = vxor.u32 %v2828, 2147483648
    %v2837 = vxor.u32 %v2829, 2147483648
    %v2838 = vxor.u32 %v2830, 2147483648
    %v2839 = vxor.u32 %v2831, 2147483648
    %v2840 = vxor.u32 %v2832, 2147483648
    %v2841 = vxor.u32 %v2833, 2147483648
    %v2842 = vmul.f32 %v2834, 1.442695
    %v2843 = vpow.pop %v2842
    %v2844 = vmul.f32 %v2835, 1.442695
    %v2845 = vpow.pop %v2844
    %v2846 = vmul.f32 %v2836, 1.442695
    %v2847 = vpow.pop %v2846
    %v2848 = vmul.f32 %v2837, 1.442695
    %v2849 = vpow.pop %v2848
    %v2850 = vmul.f32 %v2838, 1.442695
    %v2851 = vpow.pop %v2850
    %v2852 = vmul.f32 %v2839, 1.442695
    %v2853 = vpow.pop %v2852
    %v2854 = vmul.f32 %v2840, 1.442695
    %v2855 = vpow.pop %v2854
    %v2856 = vmul.f32 %v2841, 1.442695
    %v2857 = vpow.pop %v2856
    %v2858 = vadd.f32 %v2843, 1.0
    %v2859 = vadd.f32 %v2845, 1.0
    %v2860 = vadd.f32 %v2847, 1.0
    %v2861 = vadd.f32 %v2849, 1.0
    %v2862 = vadd.f32 %v2851, 1.0
    %v2863 = vadd.f32 %v2853, 1.0
    %v2864 = vadd.f32 %v2855, 1.0
    %v2865 = vadd.f32 %v2857, 1.0
    %v2866 = vrcp.pop %v2858
    %v2867 = vmul.f32 1.0, %v2866
    %v2868 = vrcp.pop %v2859
    %v2869 = vmul.f32 1.0, %v2868
    %v2870 = vrcp.pop %v2860
    %v2871 = vmul.f32 1.0, %v2870
    %v2872 = vrcp.pop %v2861
    %v2873 = vmul.f32 1.0, %v2872
    %v2874 = vrcp.pop %v2862
    %v2875 = vmul.f32 1.0, %v2874
    %v2876 = vrcp.pop %v2863
    %v2877 = vmul.f32 1.0, %v2876
    %v2878 = vrcp.pop %v2864
    %v2879 = vmul.f32 1.0, %v2878
    %v2880 = vrcp.pop %v2865
    %v2881 = vmul.f32 1.0, %v2880
    %v2882 = vtanh.pop %v2826
    %v2883 = vtanh.pop %v2827
    %v2884 = vtanh.pop %v2828
    %v2885 = vtanh.pop %v2829
    %v2886 = vtanh.pop %v2830
    %v2887 = vtanh.pop %v2831
    %v2888 = vtanh.pop %v2832
    %v2889 = vtanh.pop %v2833
    %v2890 = vmul.f32 %v2867, %v1185
    %v2891 = vmul.f32 %v2869, %v1186
    %v2892 = vmul.f32 %v2871, %v1187
    %v2893 = vmul.f32 %v2873, %v1188
    %v2894 = vmul.f32 %v2875, %v1189
    %v2895 = vmul.f32 %v2877, %v1190
    %v2896 = vmul.f32 %v2879, %v1191
    %v2897 = vmul.f32 %v2881, %v1192
    %2906 = vrot.lane.b32.xlu0 %v2882, 32
    %v2907 = vpop.permute.xlu0 %2906
    %2908 = vrot.lane.b32.xlu0 %v2883, 32
    %v2909 = vpop.permute.xlu0 %2908
    %2910 = vrot.lane.b32.xlu0 %v2884, 32
    %v2911 = vpop.permute.xlu0 %2910
    %2912 = vrot.lane.b32.xlu0 %v2885, 32
    %v2913 = vpop.permute.xlu0 %2912
    %2914 = vrot.lane.b32.xlu0 %v2886, 32
    %v2915 = vpop.permute.xlu0 %2914
    %2916 = vrot.lane.b32.xlu0 %v2887, 32
    %v2917 = vpop.permute.xlu0 %2916
    %2918 = vrot.lane.b32.xlu0 %v2888, 32
    %v2919 = vpop.permute.xlu0 %2918
    %2920 = vrot.lane.b32.xlu0 %v2889, 32
    %v2921 = vpop.permute.xlu0 %2920
    %v2930 = vmul.f32 %v2867, %v2907
    %v2931 = vmul.f32 %v2869, %v2909
    %v2932 = vmul.f32 %v2871, %v2911
    %v2933 = vmul.f32 %v2873, %v2913
    %v2934 = vmul.f32 %v2875, %v2915
    %v2935 = vmul.f32 %v2877, %v2917
    %v2936 = vmul.f32 %v2879, %v2919
    %v2937 = vmul.f32 %v2881, %v2921
    %2946 = vrot.lane.b32.xlu0 %v2930, 32
    %v2947 = vpop.permute.xlu0 %2946
    %2948 = vrot.lane.b32.xlu0 %v2931, 32
    %v2949 = vpop.permute.xlu0 %2948
    %2950 = vrot.lane.b32.xlu0 %v2932, 32
    %v2951 = vpop.permute.xlu0 %2950
    %2952 = vrot.lane.b32.xlu0 %v2933, 32
    %v2953 = vpop.permute.xlu0 %2952
    %2954 = vrot.lane.b32.xlu0 %v2934, 32
    %v2955 = vpop.permute.xlu0 %2954
    %2956 = vrot.lane.b32.xlu0 %v2935, 32
    %v2957 = vpop.permute.xlu0 %2956
    %2958 = vrot.lane.b32.xlu0 %v2936, 32
    %v2959 = vpop.permute.xlu0 %2958
    %2960 = vrot.lane.b32.xlu0 %v2937, 32
    %v2961 = vpop.permute.xlu0 %2960
    %v2970 = vadd.f32 %v2890, %v2947
    %v2971 = vadd.f32 %v2891, %v2949
    %v2972 = vadd.f32 %v2892, %v2951
    %v2973 = vadd.f32 %v2893, %v2953
    %v2974 = vadd.f32 %v2894, %v2955
    %v2975 = vadd.f32 %v2895, %v2957
    %v2976 = vadd.f32 %v2896, %v2959
    %v2977 = vadd.f32 %v2897, %v2961
    %v2978 = vtanh.pop %v2970
    %v2979 = vtanh.pop %v2971
    %v2980 = vtanh.pop %v2972
    %v2981 = vtanh.pop %v2973
    %v2982 = vtanh.pop %v2974
    %v2983 = vtanh.pop %v2975
    %v2984 = vtanh.pop %v2976
    %v2985 = vtanh.pop %v2977
    %2994 = vrot.lane.b32.xlu0 %v2978, 32
    %v2995 = vpop.permute.xlu0 %2994
    %2996 = vrot.lane.b32.xlu0 %v2979, 32
    %v2997 = vpop.permute.xlu0 %2996
    %2998 = vrot.lane.b32.xlu0 %v2980, 32
    %v2999 = vpop.permute.xlu0 %2998
    %3000 = vrot.lane.b32.xlu0 %v2981, 32
    %v3001 = vpop.permute.xlu0 %3000
    %3002 = vrot.lane.b32.xlu0 %v2982, 32
    %v3003 = vpop.permute.xlu0 %3002
    %3004 = vrot.lane.b32.xlu0 %v2983, 32
    %v3005 = vpop.permute.xlu0 %3004
    %3006 = vrot.lane.b32.xlu0 %v2984, 32
    %v3007 = vpop.permute.xlu0 %3006
    %3008 = vrot.lane.b32.xlu0 %v2985, 32
    %v3009 = vpop.permute.xlu0 %3008
    %v3018 = vmul.f32 %v2867, %v2995
    %v3019 = vmul.f32 %v2869, %v2997
    %v3020 = vmul.f32 %v2871, %v2999
    %v3021 = vmul.f32 %v2873, %v3001
    %v3022 = vmul.f32 %v2875, %v3003
    %v3023 = vmul.f32 %v2877, %v3005
    %v3024 = vmul.f32 %v2879, %v3007
    %v3025 = vmul.f32 %v2881, %v3009
    %3034 = vrot.lane.b32.xlu0 %v3018, 64
    %v3035 = vpop.permute.xlu0 %3034
    %3036 = vrot.lane.b32.xlu0 %v3019, 64
    %v3037 = vpop.permute.xlu0 %3036
    %3038 = vrot.lane.b32.xlu0 %v3020, 64
    %v3039 = vpop.permute.xlu0 %3038
    %3040 = vrot.lane.b32.xlu0 %v3021, 64
    %v3041 = vpop.permute.xlu0 %3040
    %3042 = vrot.lane.b32.xlu0 %v3022, 64
    %v3043 = vpop.permute.xlu0 %3042
    %3044 = vrot.lane.b32.xlu0 %v3023, 64
    %v3045 = vpop.permute.xlu0 %3044
    %3046 = vrot.lane.b32.xlu0 %v3024, 64
    %v3047 = vpop.permute.xlu0 %3046
    %3048 = vrot.lane.b32.xlu0 %v3025, 64
    %v3049 = vpop.permute.xlu0 %3048
    %v3058 = vsel %vm364, %v3035, 0.0
    %3059 = vadd.xlane.f32.xlu0 %v3058
    %v3060 = vpop.xlane.xlu0 %3059
    %v3061 = vsel %vm364, %v3037, 0.0
    %3062 = vadd.xlane.f32.xlu0 %v3061
    %v3063 = vpop.xlane.xlu0 %3062
    %v3064 = vsel %vm364, %v3039, 0.0
    %3065 = vadd.xlane.f32.xlu0 %v3064
    %v3066 = vpop.xlane.xlu0 %3065
    %v3067 = vsel %vm364, %v3041, 0.0
    %3068 = vadd.xlane.f32.xlu0 %v3067
    %v3069 = vpop.xlane.xlu0 %3068
    %v3070 = vsel %vm364, %v3043, 0.0
    %3071 = vadd.xlane.f32.xlu0 %v3070
    %v3072 = vpop.xlane.xlu0 %3071
    %v3073 = vsel %vm364, %v3045, 0.0
    %3074 = vadd.xlane.f32.xlu0 %v3073
    %v3075 = vpop.xlane.xlu0 %3074
    %v3076 = vsel %vm364, %v3047, 0.0
    %3077 = vadd.xlane.f32.xlu0 %v3076
    %v3078 = vpop.xlane.xlu0 %3077
    %v3079 = vsel %vm364, %v3049, 0.0
    %3080 = vadd.xlane.f32.xlu0 %v3079
    %v3081 = vpop.xlane.xlu0 %3080
    %v3082 = vmul.f32 %v3060, %v377
    %v3083 = vmul.f32 %v3063, %v377
    %v3084 = vmul.f32 %v3066, %v377
    %v3085 = vmul.f32 %v3069, %v377
    %v3086 = vmul.f32 %v3072, %v377
    %v3087 = vmul.f32 %v3075, %v377
    %v3088 = vmul.f32 %v3078, %v377
    %v3089 = vmul.f32 %v3081, %v377
    %v3090 = vsub.f32 %v3018, %v3082
    %v3091 = vsub.f32 %v3019, %v3083
    %v3092 = vsub.f32 %v3020, %v3084
    %v3093 = vsub.f32 %v3021, %v3085
    %v3094 = vsub.f32 %v3022, %v3086
    %v3095 = vsub.f32 %v3023, %v3087
    %v3096 = vsub.f32 %v3024, %v3088
    %v3097 = vsub.f32 %v3025, %v3089
    %v3098 = vmul.f32 %v3090, %v3090
    %v3099 = vmul.f32 %v3091, %v3091
    %v3100 = vmul.f32 %v3092, %v3092
    %v3101 = vmul.f32 %v3093, %v3093
    %v3102 = vmul.f32 %v3094, %v3094
    %v3103 = vmul.f32 %v3095, %v3095
    %v3104 = vmul.f32 %v3096, %v3096
    %v3105 = vmul.f32 %v3097, %v3097
    %3114 = vrot.lane.b32.xlu0 %v3098, 64
    %v3115 = vpop.permute.xlu0 %3114
    %3116 = vrot.lane.b32.xlu0 %v3099, 64
    %v3117 = vpop.permute.xlu0 %3116
    %3118 = vrot.lane.b32.xlu0 %v3100, 64
    %v3119 = vpop.permute.xlu0 %3118
    %3120 = vrot.lane.b32.xlu0 %v3101, 64
    %v3121 = vpop.permute.xlu0 %3120
    %3122 = vrot.lane.b32.xlu0 %v3102, 64
    %v3123 = vpop.permute.xlu0 %3122
    %3124 = vrot.lane.b32.xlu0 %v3103, 64
    %v3125 = vpop.permute.xlu0 %3124
    %3126 = vrot.lane.b32.xlu0 %v3104, 64
    %v3127 = vpop.permute.xlu0 %3126
    %3128 = vrot.lane.b32.xlu0 %v3105, 64
    %v3129 = vpop.permute.xlu0 %3128
    %v3138 = vsel %vm364, %v3115, 0.0
    %3139 = vadd.xlane.f32.xlu0 %v3138
    %v3140 = vpop.xlane.xlu0 %3139
    %v3141 = vsel %vm364, %v3117, 0.0
    %3142 = vadd.xlane.f32.xlu0 %v3141
    %v3143 = vpop.xlane.xlu0 %3142
    %v3144 = vsel %vm364, %v3119, 0.0
    %3145 = vadd.xlane.f32.xlu0 %v3144
    %v3146 = vpop.xlane.xlu0 %3145
    %v3147 = vsel %vm364, %v3121, 0.0
    %3148 = vadd.xlane.f32.xlu0 %v3147
    %v3149 = vpop.xlane.xlu0 %3148
    %v3150 = vsel %vm364, %v3123, 0.0
    %3151 = vadd.xlane.f32.xlu0 %v3150
    %v3152 = vpop.xlane.xlu0 %3151
    %v3153 = vsel %vm364, %v3125, 0.0
    %3154 = vadd.xlane.f32.xlu0 %v3153
    %v3155 = vpop.xlane.xlu0 %3154
    %v3156 = vsel %vm364, %v3127, 0.0
    %3157 = vadd.xlane.f32.xlu0 %v3156
    %v3158 = vpop.xlane.xlu0 %3157
    %v3159 = vsel %vm364, %v3129, 0.0
    %3160 = vadd.xlane.f32.xlu0 %v3159
    %v3161 = vpop.xlane.xlu0 %3160
    %v3162 = vmul.f32 %v3140, %v377
    %v3163 = vmul.f32 %v3143, %v377
    %v3164 = vmul.f32 %v3146, %v377
    %v3165 = vmul.f32 %v3149, %v377
    %v3166 = vmul.f32 %v3152, %v377
    %v3167 = vmul.f32 %v3155, %v377
    %v3168 = vmul.f32 %v3158, %v377
    %v3169 = vmul.f32 %v3161, %v377
    %v3170 = vadd.f32 %v3162, 1e-05
    %v3171 = vadd.f32 %v3163, 1e-05
    %v3172 = vadd.f32 %v3164, 1e-05
    %v3173 = vadd.f32 %v3165, 1e-05
    %v3174 = vadd.f32 %v3166, 1e-05
    %v3175 = vadd.f32 %v3167, 1e-05
    %v3176 = vadd.f32 %v3168, 1e-05
    %v3177 = vadd.f32 %v3169, 1e-05
    %v3178 = vrsqrt.pop %v3170
    %v3179 = vrsqrt.pop %v3171
    %v3180 = vrsqrt.pop %v3172
    %v3181 = vrsqrt.pop %v3173
    %v3182 = vrsqrt.pop %v3174
    %v3183 = vrsqrt.pop %v3175
    %v3184 = vrsqrt.pop %v3176
    %v3185 = vrsqrt.pop %v3177
    %v3186 = vmul.f32 %v3090, %v3178
    %v3187 = vmul.f32 %v3091, %v3179
    %v3188 = vmul.f32 %v3092, %v3180
    %v3189 = vmul.f32 %v3093, %v3181
    %v3190 = vmul.f32 %v3094, %v3182
    %v3191 = vmul.f32 %v3095, %v3183
    %v3192 = vmul.f32 %v3096, %v3184
    %v3193 = vmul.f32 %v3097, %v3185
    %v3194 = vmul.f32 %v3186, %v1415
    %v3195 = vmul.f32 %v3187, %v1415
    %v3196 = vmul.f32 %v3188, %v1415
    %v3197 = vmul.f32 %v3189, %v1415
    %v3198 = vmul.f32 %v3190, %v1415
    %v3199 = vmul.f32 %v3191, %v1415
    %v3200 = vmul.f32 %v3192, %v1415
    %v3201 = vmul.f32 %v3193, %v1415
    %v3202 = vadd.f32 %v3194, %v1431
    %v3203 = vadd.f32 %v3195, %v1431
    %v3204 = vadd.f32 %v3196, %v1431
    %v3205 = vadd.f32 %v3197, %v1431
    %v3206 = vadd.f32 %v3198, %v1431
    %v3207 = vadd.f32 %v3199, %v1431
    %v3208 = vadd.f32 %v3200, %v1431
    %v3209 = vadd.f32 %v3201, %v1431
    %v3210 = vpack.c.bf16 %v3203, %v3202
    %v3211 = vpack.c.bf16 %v3205, %v3204
    %v3212 = vpack.c.bf16 %v3207, %v3206
    %v3213 = vpack.c.bf16 %v3209, %v3208
    %3218 = vrot.lane.b32.xlu0 %v3210, 64
    %v3219 = vpop.permute.xlu0 %3218
    %3220 = vrot.lane.b32.xlu0 %v3211, 64
    %v3221 = vpop.permute.xlu0 %3220
    %3222 = vrot.lane.b32.xlu0 %v3212, 64
    %v3223 = vpop.permute.xlu0 %3222
    %3224 = vrot.lane.b32.xlu0 %v3213, 64
    %v3225 = vpop.permute.xlu0 %3224
    %v3227 = vsel %vm364, %v3219, 0
    %v3230 = vsel %vm364, %v3221, 0
    %v3233 = vsel %vm364, %v3223, 0
    %v3236 = vsel %vm364, %v3225, 0
    %3238 = vmatprep.subr.bf16.mxu0 0
    %3239 = vmatpush1.bf16.msra.mxu0 0
    %3240 = vmatprep.subr.bf16.mxu0 0
    %3241 = vmatpush1.bf16.msra.mxu0 0
    %3242 = vmatprep.subr.bf16.mxu0 0
    %3243 = vmatpush1.bf16.msra.mxu0 0
    %3244 = vmatprep.subr.bf16.mxu0 0
    %3245 = vmatpush1.bf16.msra.mxu0 0
    %3246 = vmatprep.subr.bf16.mxu0 0
    %3247 = vmatpush1.bf16.msra.mxu0 0
    %3248 = vmatprep.subr.bf16.mxu0 0
    %3249 = vmatpush1.bf16.msra.mxu0 0
    %3250 = vmatprep.subr.bf16.mxu0 0
    %3251 = vmatpush1.bf16.msra.mxu0 %v1470
    %3252 = vmatprep.subr.bf16.mxu0 0
    %3253 = vmatpush1.bf16.msra.mxu0 %v1469
    %3254 = vmatprep.subr.bf16.mxu0 0
    %3255 = vmatpush2.bf16.msra.mxu0 0
    %3256 = vmatprep.subr.bf16.mxu0 0
    %3257 = vmatpush2.bf16.msra.mxu0 0
    %3258 = vmatprep.subr.bf16.mxu0 0
    %3259 = vmatpush2.bf16.msra.mxu0 0
    %3260 = vmatprep.subr.bf16.mxu0 0
    %3261 = vmatpush2.bf16.msra.mxu0 0
    %3262 = vmatprep.subr.bf16.mxu0 0
    %3263 = vmatpush2.bf16.msra.mxu0 0
    %3264 = vmatprep.subr.bf16.mxu0 0
    %3265 = vmatpush2.bf16.msra.mxu0 0
    %3266 = vmatprep.subr.bf16.mxu0 0
    %3267 = vmatpush2.bf16.msra.mxu0 0
    %3268 = vmatprep.subr.bf16.mxu0 0
    %3269 = vmatpush2.bf16.msra.mxu0 0
    %3270 = vmatprep.mubr.bf16.mxu0 0
    %3271 = vmatmul.mubr.bf16.gmra.mxu0 %v3227
    %v3272 = vpop.f32.mrf.mxu0
    %v3273 = vadd.f32 %v1448, %v3272
    %v3274 = vpop.f32.mrf.mxu0
    %v3275 = vpop.f32.mrf.mxu0
    %v3276 = vadd.f32 %v1448, %v3275
    %v3277 = vpop.f32.mrf.mxu0
    %3278 = vmatprep.mubr.bf16.mxu0 0
    %3279 = vmatmul.mubr.bf16.gmra.mxu0 %v3230
    %v3280 = vpop.f32.mrf.mxu0
    %v3281 = vadd.f32 %v1448, %v3280
    %v3282 = vpop.f32.mrf.mxu0
    %v3283 = vpop.f32.mrf.mxu0
    %v3284 = vadd.f32 %v1448, %v3283
    %v3285 = vpop.f32.mrf.mxu0
    %3286 = vmatprep.mubr.bf16.mxu0 0
    %3287 = vmatmul.mubr.bf16.gmra.mxu0 %v3233
    %v3288 = vpop.f32.mrf.mxu0
    %v3289 = vadd.f32 %v1448, %v3288
    %v3290 = vpop.f32.mrf.mxu0
    %v3291 = vpop.f32.mrf.mxu0
    %v3292 = vadd.f32 %v1448, %v3291
    %v3293 = vpop.f32.mrf.mxu0
    %3294 = vmatprep.mubr.bf16.mxu0 0
    %3295 = vmatmul.mubr.bf16.gmra.mxu0 %v3236
    %v3296 = vpop.f32.mrf.mxu0
    %v3297 = vadd.f32 %v1448, %v3296
    %v3298 = vpop.f32.mrf.mxu0
    %v3299 = vpop.f32.mrf.mxu0
    %v3300 = vadd.f32 %v1448, %v3299
    %v3301 = vpop.f32.mrf.mxu0
    %3302 = vdwg.mxu0
    %v3303 = vmax.f32 %v3273, 0.0
    %v3304 = vmax.f32 %v3276, 0.0
    %v3305 = vmax.f32 %v3281, 0.0
    %v3306 = vmax.f32 %v3284, 0.0
    %v3307 = vmax.f32 %v3289, 0.0
    %v3308 = vmax.f32 %v3292, 0.0
    %v3309 = vmax.f32 %v3297, 0.0
    %v3310 = vmax.f32 %v3300, 0.0
    %v3311 = vpack.c.bf16 %v3304, %v3303
    %v3312 = vpack.c.bf16 %v3306, %v3305
    %v3313 = vpack.c.bf16 %v3308, %v3307
    %v3314 = vpack.c.bf16 %v3310, %v3309
    %v3316 = vsel %vm364, %v3311, 0
    %v3319 = vsel %vm364, %v3312, 0
    %v3322 = vsel %vm364, %v3313, 0
    %v3325 = vsel %vm364, %v3314, 0
    %3327 = vmatprep.subr.bf16.mxu0 0
    %3328 = vmatpush1.bf16.msra.mxu0 0
    %3329 = vmatprep.subr.bf16.mxu0 0
    %3330 = vmatpush1.bf16.msra.mxu0 0
    %3331 = vmatprep.subr.bf16.mxu0 0
    %3332 = vmatpush1.bf16.msra.mxu0 0
    %3333 = vmatprep.subr.bf16.mxu0 0
    %3334 = vmatpush1.bf16.msra.mxu0 0
    %3335 = vmatprep.subr.bf16.mxu0 0
    %3336 = vmatpush1.bf16.msra.mxu0 0
    %3337 = vmatprep.subr.bf16.mxu0 0
    %3338 = vmatpush1.bf16.msra.mxu0 0
    %3339 = vmatprep.subr.bf16.mxu0 0
    %3340 = vmatpush1.bf16.msra.mxu0 %v1575
    %3341 = vmatprep.subr.bf16.mxu0 0
    %3342 = vmatpush1.bf16.msra.mxu0 %v1574
    %3343 = vmatprep.subr.bf16.mxu0 0
    %3344 = vmatpush2.bf16.msra.mxu0 0
    %3345 = vmatprep.subr.bf16.mxu0 0
    %3346 = vmatpush2.bf16.msra.mxu0 0
    %3347 = vmatprep.subr.bf16.mxu0 0
    %3348 = vmatpush2.bf16.msra.mxu0 0
    %3349 = vmatprep.subr.bf16.mxu0 0
    %3350 = vmatpush2.bf16.msra.mxu0 0
    %3351 = vmatprep.subr.bf16.mxu0 0
    %3352 = vmatpush2.bf16.msra.mxu0 0
    %3353 = vmatprep.subr.bf16.mxu0 0
    %3354 = vmatpush2.bf16.msra.mxu0 0
    %3355 = vmatprep.subr.bf16.mxu0 0
    %3356 = vmatpush2.bf16.msra.mxu0 0
    %3357 = vmatprep.subr.bf16.mxu0 0
    %3358 = vmatpush2.bf16.msra.mxu0 0
    %3359 = vmatprep.mubr.bf16.mxu0 0
    %3360 = vmatmul.mubr.bf16.gmra.mxu0 %v3316
    %v3361 = vpop.f32.mrf.mxu0
    %v3362 = vadd.f32 %v1565, %v3361
    %v3363 = vpop.f32.mrf.mxu0
    %v3364 = vpop.f32.mrf.mxu0
    %v3365 = vadd.f32 %v1565, %v3364
    %v3366 = vpop.f32.mrf.mxu0
    %3367 = vmatprep.mubr.bf16.mxu0 0
    %3368 = vmatmul.mubr.bf16.gmra.mxu0 %v3319
    %v3369 = vpop.f32.mrf.mxu0
    %v3370 = vadd.f32 %v1565, %v3369
    %v3371 = vpop.f32.mrf.mxu0
    %v3372 = vpop.f32.mrf.mxu0
    %v3373 = vadd.f32 %v1565, %v3372
    %v3374 = vpop.f32.mrf.mxu0
    %3375 = vmatprep.mubr.bf16.mxu0 0
    %3376 = vmatmul.mubr.bf16.gmra.mxu0 %v3322
    %v3377 = vpop.f32.mrf.mxu0
    %v3378 = vadd.f32 %v1565, %v3377
    %v3379 = vpop.f32.mrf.mxu0
    %v3380 = vpop.f32.mrf.mxu0
    %v3381 = vadd.f32 %v1565, %v3380
    %v3382 = vpop.f32.mrf.mxu0
    %3383 = vmatprep.mubr.bf16.mxu0 0
    %3384 = vmatmul.mubr.bf16.gmra.mxu0 %v3325
    %v3385 = vpop.f32.mrf.mxu0
    %v3386 = vadd.f32 %v1565, %v3385
    %v3387 = vpop.f32.mrf.mxu0
    %v3388 = vpop.f32.mrf.mxu0
    %v3389 = vadd.f32 %v1565, %v3388
    %v3390 = vpop.f32.mrf.mxu0
    %3391 = vdwg.mxu0
    %v3392 = vmax.f32 %v3362, 0.0
    %v3393 = vmax.f32 %v3365, 0.0
    %v3394 = vmax.f32 %v3370, 0.0
    %v3395 = vmax.f32 %v3373, 0.0
    %v3396 = vmax.f32 %v3378, 0.0
    %v3397 = vmax.f32 %v3381, 0.0
    %v3398 = vmax.f32 %v3386, 0.0
    %v3399 = vmax.f32 %v3389, 0.0
    %v3400 = vpack.c.bf16 %v3393, %v3392
    %v3401 = vpack.c.bf16 %v3395, %v3394
    %v3402 = vpack.c.bf16 %v3397, %v3396
    %v3403 = vpack.c.bf16 %v3399, %v3398
    %v3405 = vsel %vm364, %v3400, 0
    %v3408 = vsel %vm364, %v3401, 0
    %v3411 = vsel %vm364, %v3402, 0
    %v3414 = vsel %vm364, %v3403, 0
    %3416 = vmatprep.subr.bf16.mxu0 0
    %3417 = vmatpush1.bf16.msra.mxu0 0
    %3418 = vmatprep.subr.bf16.mxu0 0
    %3419 = vmatpush1.bf16.msra.mxu0 0
    %3420 = vmatprep.subr.bf16.mxu0 0
    %3421 = vmatpush1.bf16.msra.mxu0 0
    %3422 = vmatprep.subr.bf16.mxu0 0
    %3423 = vmatpush1.bf16.msra.mxu0 0
    %3424 = vmatprep.subr.bf16.mxu0 0
    %3425 = vmatpush1.bf16.msra.mxu0 0
    %3426 = vmatprep.subr.bf16.mxu0 0
    %3427 = vmatpush1.bf16.msra.mxu0 0
    %3428 = vmatprep.subr.bf16.mxu0 0
    %3429 = vmatpush1.bf16.msra.mxu0 %v1680
    %3430 = vmatprep.subr.bf16.mxu0 0
    %3431 = vmatpush1.bf16.msra.mxu0 %v1679
    %3432 = vmatprep.subr.bf16.mxu0 0
    %3433 = vmatpush2.bf16.msra.mxu0 0
    %3434 = vmatprep.subr.bf16.mxu0 0
    %3435 = vmatpush2.bf16.msra.mxu0 0
    %3436 = vmatprep.subr.bf16.mxu0 0
    %3437 = vmatpush2.bf16.msra.mxu0 0
    %3438 = vmatprep.subr.bf16.mxu0 0
    %3439 = vmatpush2.bf16.msra.mxu0 0
    %3440 = vmatprep.subr.bf16.mxu0 0
    %3441 = vmatpush2.bf16.msra.mxu0 0
    %3442 = vmatprep.subr.bf16.mxu0 0
    %3443 = vmatpush2.bf16.msra.mxu0 0
    %3444 = vmatprep.subr.bf16.mxu0 0
    %3445 = vmatpush2.bf16.msra.mxu0 0
    %3446 = vmatprep.subr.bf16.mxu0 0
    %3447 = vmatpush2.bf16.msra.mxu0 0
    %3448 = vmatprep.mubr.bf16.mxu0 0
    %3449 = vmatmul.mubr.bf16.gmra.mxu0 %v3405
    %v3450 = vpop.f32.mrf.mxu0
    %v3451 = vadd.f32 %v1670, %v3450
    %v3452 = vpop.f32.mrf.mxu0
    %v3453 = vpop.f32.mrf.mxu0
    %v3454 = vadd.f32 %v1670, %v3453
    %v3455 = vpop.f32.mrf.mxu0
    %3456 = vmatprep.mubr.bf16.mxu0 0
    %3457 = vmatmul.mubr.bf16.gmra.mxu0 %v3408
    %v3458 = vpop.f32.mrf.mxu0
    %v3459 = vadd.f32 %v1670, %v3458
    %v3460 = vpop.f32.mrf.mxu0
    %v3461 = vpop.f32.mrf.mxu0
    %v3462 = vadd.f32 %v1670, %v3461
    %v3463 = vpop.f32.mrf.mxu0
    %3464 = vmatprep.mubr.bf16.mxu0 0
    %3465 = vmatmul.mubr.bf16.gmra.mxu0 %v3411
    %v3466 = vpop.f32.mrf.mxu0
    %v3467 = vadd.f32 %v1670, %v3466
    %v3468 = vpop.f32.mrf.mxu0
    %v3469 = vpop.f32.mrf.mxu0
    %v3470 = vadd.f32 %v1670, %v3469
    %v3471 = vpop.f32.mrf.mxu0
    %3472 = vmatprep.mubr.bf16.mxu0 0
    %3473 = vmatmul.mubr.bf16.gmra.mxu0 %v3414
    %v3474 = vpop.f32.mrf.mxu0
    %v3475 = vadd.f32 %v1670, %v3474
    %v3476 = vpop.f32.mrf.mxu0
    %v3477 = vpop.f32.mrf.mxu0
    %v3478 = vadd.f32 %v1670, %v3477
    %v3479 = vpop.f32.mrf.mxu0
    %3480 = vdwg.mxu0
    %v3481 = vpack.c.bf16 %v3454, %v3451
    %v3482 = vpack.c.bf16 %v3462, %v3459
    %v3483 = vpack.c.bf16 %v3470, %v3467
    %v3484 = vpack.c.bf16 %v3478, %v3475
    %3485 = vmatprep.subr.bf16.mxu0 0
    %3486 = vmatpush1.bf16.msra.mxu0 0
    %3487 = vmatprep.subr.bf16.mxu0 0
    %3488 = vmatpush1.bf16.msra.mxu0 0
    %3489 = vmatprep.subr.bf16.mxu0 0
    %3490 = vmatpush1.bf16.msra.mxu0 0
    %3491 = vmatprep.subr.bf16.mxu0 0
    %3492 = vmatpush1.bf16.msra.mxu0 0
    %3493 = vmatprep.subr.bf16.mxu0 0
    %3494 = vmatpush1.bf16.msra.mxu0 0
    %3495 = vmatprep.subr.bf16.mxu0 0
    %3496 = vmatpush1.bf16.msra.mxu0 0
    %3497 = vmatprep.subr.bf16.mxu0 0
    %3498 = vmatpush1.bf16.msra.mxu0 0
    %3499 = vmatprep.subr.bf16.mxu0 0
    %3500 = vmatpush1.bf16.msra.mxu0 %v3481
    %3501 = vmatprep.subr.bf16.mxu0 0
    %3502 = vmatpush2.bf16.msra.mxu0 0
    %3503 = vmatprep.subr.bf16.mxu0 0
    %3504 = vmatpush2.bf16.msra.mxu0 0
    %3505 = vmatprep.subr.bf16.mxu0 0
    %3506 = vmatpush2.bf16.msra.mxu0 0
    %3507 = vmatprep.subr.bf16.mxu0 0
    %3508 = vmatpush2.bf16.msra.mxu0 0
    %3509 = vmatprep.subr.bf16.mxu0 0
    %3510 = vmatpush2.bf16.msra.mxu0 0
    %3511 = vmatprep.subr.bf16.mxu0 0
    %3512 = vmatpush2.bf16.msra.mxu0 0
    %3513 = vmatprep.subr.bf16.mxu0 0
    %3514 = vmatpush2.bf16.msra.mxu0 0
    %3515 = vmatprep.subr.bf16.mxu0 0
    %3516 = vmatpush2.bf16.msra.mxu0 0
    %3517 = vmatprep.mubr.bf16.mxu0 0
    %3518 = vmatmul.mubr.bf16.gmra.mxu0 %v1766
    %v3519 = vpop.f32.mrf.mxu0
    %v3520 = vadd.f32 0.0, %v3519
    %v3521 = vpop.f32.mrf.mxu0
    %v3522 = vpop.f32.mrf.mxu0
    %v3523 = vpop.f32.mrf.mxu0
    %3524 = vdwg.mxu0
    %3525 = vmatprep.subr.bf16.mxu0 0
    %3526 = vmatpush1.bf16.msra.mxu0 0
    %3527 = vmatprep.subr.bf16.mxu0 0
    %3528 = vmatpush1.bf16.msra.mxu0 0
    %3529 = vmatprep.subr.bf16.mxu0 0
    %3530 = vmatpush1.bf16.msra.mxu0 0
    %3531 = vmatprep.subr.bf16.mxu0 0
    %3532 = vmatpush1.bf16.msra.mxu0 0
    %3533 = vmatprep.subr.bf16.mxu0 0
    %3534 = vmatpush1.bf16.msra.mxu0 0
    %3535 = vmatprep.subr.bf16.mxu0 0
    %3536 = vmatpush1.bf16.msra.mxu0 0
    %3537 = vmatprep.subr.bf16.mxu0 0
    %3538 = vmatpush1.bf16.msra.mxu0 0
    %3539 = vmatprep.subr.bf16.mxu0 0
    %3540 = vmatpush1.bf16.msra.mxu0 %v3482
    %3541 = vmatprep.subr.bf16.mxu0 0
    %3542 = vmatpush2.bf16.msra.mxu0 0
    %3543 = vmatprep.subr.bf16.mxu0 0
    %3544 = vmatpush2.bf16.msra.mxu0 0
    %3545 = vmatprep.subr.bf16.mxu0 0
    %3546 = vmatpush2.bf16.msra.mxu0 0
    %3547 = vmatprep.subr.bf16.mxu0 0
    %3548 = vmatpush2.bf16.msra.mxu0 0
    %3549 = vmatprep.subr.bf16.mxu0 0
    %3550 = vmatpush2.bf16.msra.mxu0 0
    %3551 = vmatprep.subr.bf16.mxu0 0
    %3552 = vmatpush2.bf16.msra.mxu0 0
    %3553 = vmatprep.subr.bf16.mxu0 0
    %3554 = vmatpush2.bf16.msra.mxu0 0
    %3555 = vmatprep.subr.bf16.mxu0 0
    %3556 = vmatpush2.bf16.msra.mxu0 0
    %3557 = vmatprep.mubr.bf16.mxu0 0
    %3558 = vmatmul.mubr.bf16.gmra.mxu0 %v1809
    %v3559 = vpop.f32.mrf.mxu0
    %v3560 = vadd.f32 0.0, %v3559
    %v3561 = vpop.f32.mrf.mxu0
    %v3562 = vpop.f32.mrf.mxu0
    %v3563 = vpop.f32.mrf.mxu0
    %3564 = vdwg.mxu0
    %3565 = vmatprep.subr.bf16.mxu0 0
    %3566 = vmatpush1.bf16.msra.mxu0 0
    %3567 = vmatprep.subr.bf16.mxu0 0
    %3568 = vmatpush1.bf16.msra.mxu0 0
    %3569 = vmatprep.subr.bf16.mxu0 0
    %3570 = vmatpush1.bf16.msra.mxu0 0
    %3571 = vmatprep.subr.bf16.mxu0 0
    %3572 = vmatpush1.bf16.msra.mxu0 0
    %3573 = vmatprep.subr.bf16.mxu0 0
    %3574 = vmatpush1.bf16.msra.mxu0 0
    %3575 = vmatprep.subr.bf16.mxu0 0
    %3576 = vmatpush1.bf16.msra.mxu0 0
    %3577 = vmatprep.subr.bf16.mxu0 0
    %3578 = vmatpush1.bf16.msra.mxu0 0
    %3579 = vmatprep.subr.bf16.mxu0 0
    %3580 = vmatpush1.bf16.msra.mxu0 %v3483
    %3581 = vmatprep.subr.bf16.mxu0 0
    %3582 = vmatpush2.bf16.msra.mxu0 0
    %3583 = vmatprep.subr.bf16.mxu0 0
    %3584 = vmatpush2.bf16.msra.mxu0 0
    %3585 = vmatprep.subr.bf16.mxu0 0
    %3586 = vmatpush2.bf16.msra.mxu0 0
    %3587 = vmatprep.subr.bf16.mxu0 0
    %3588 = vmatpush2.bf16.msra.mxu0 0
    %3589 = vmatprep.subr.bf16.mxu0 0
    %3590 = vmatpush2.bf16.msra.mxu0 0
    %3591 = vmatprep.subr.bf16.mxu0 0
    %3592 = vmatpush2.bf16.msra.mxu0 0
    %3593 = vmatprep.subr.bf16.mxu0 0
    %3594 = vmatpush2.bf16.msra.mxu0 0
    %3595 = vmatprep.subr.bf16.mxu0 0
    %3596 = vmatpush2.bf16.msra.mxu0 0
    %3597 = vmatprep.mubr.bf16.mxu0 0
    %3598 = vmatmul.mubr.bf16.gmra.mxu0 %v1852
    %v3599 = vpop.f32.mrf.mxu0
    %v3600 = vadd.f32 0.0, %v3599
    %v3601 = vpop.f32.mrf.mxu0
    %v3602 = vpop.f32.mrf.mxu0
    %v3603 = vpop.f32.mrf.mxu0
    %3604 = vdwg.mxu0
    %3605 = vmatprep.subr.bf16.mxu0 0
    %3606 = vmatpush1.bf16.msra.mxu0 0
    %3607 = vmatprep.subr.bf16.mxu0 0
    %3608 = vmatpush1.bf16.msra.mxu0 0
    %3609 = vmatprep.subr.bf16.mxu0 0
    %3610 = vmatpush1.bf16.msra.mxu0 0
    %3611 = vmatprep.subr.bf16.mxu0 0
    %3612 = vmatpush1.bf16.msra.mxu0 0
    %3613 = vmatprep.subr.bf16.mxu0 0
    %3614 = vmatpush1.bf16.msra.mxu0 0
    %3615 = vmatprep.subr.bf16.mxu0 0
    %3616 = vmatpush1.bf16.msra.mxu0 0
    %3617 = vmatprep.subr.bf16.mxu0 0
    %3618 = vmatpush1.bf16.msra.mxu0 0
    %3619 = vmatprep.subr.bf16.mxu0 0
    %3620 = vmatpush1.bf16.msra.mxu0 %v3484
    %3621 = vmatprep.subr.bf16.mxu0 0
    %3622 = vmatpush2.bf16.msra.mxu0 0
    %3623 = vmatprep.subr.bf16.mxu0 0
    %3624 = vmatpush2.bf16.msra.mxu0 0
    %3625 = vmatprep.subr.bf16.mxu0 0
    %3626 = vmatpush2.bf16.msra.mxu0 0
    %3627 = vmatprep.subr.bf16.mxu0 0
    %3628 = vmatpush2.bf16.msra.mxu0 0
    %3629 = vmatprep.subr.bf16.mxu0 0
    %3630 = vmatpush2.bf16.msra.mxu0 0
    %3631 = vmatprep.subr.bf16.mxu0 0
    %3632 = vmatpush2.bf16.msra.mxu0 0
    %3633 = vmatprep.subr.bf16.mxu0 0
    %3634 = vmatpush2.bf16.msra.mxu0 0
    %3635 = vmatprep.subr.bf16.mxu0 0
    %3636 = vmatpush2.bf16.msra.mxu0 0
    %3637 = vmatprep.mubr.bf16.mxu0 0
    %3638 = vmatmul.mubr.bf16.gmra.mxu0 %v1895
    %v3639 = vpop.f32.mrf.mxu0
    %v3640 = vadd.f32 0.0, %v3639
    %v3641 = vpop.f32.mrf.mxu0
    %v3642 = vpop.f32.mrf.mxu0
    %v3643 = vpop.f32.mrf.mxu0
    %3644 = vdwg.mxu0
    %v3645 = vpack.c.bf16 %v3560, %v3520
    %v3646 = vpack.c.bf16 %v3640, %v3600
    %v3647 = vpack.c.bf16 %v2176, %v2175
    %v3648 = vpack.c.bf16 %v2178, %v2177
    %3651 = vrot.lane.b32.xlu0 %v3647, 64
    %v3652 = vpop.permute.xlu0 %3651
    %3653 = vrot.lane.b32.xlu0 %v3648, 64
    %v3654 = vpop.permute.xlu0 %3653
    %v3656 = vsel %vm364, %v3652, 0
    %v3659 = vsel %vm364, %v3654, 0
    %3661 = vmatprep.subr.bf16.mxu0 0
    %3662 = vmatpush1.bf16.msra.mxu0 0
    %3663 = vmatprep.subr.bf16.mxu0 0
    %3664 = vmatpush1.bf16.msra.mxu0 0
    %3665 = vmatprep.subr.bf16.mxu0 0
    %3666 = vmatpush1.bf16.msra.mxu0 0
    %3667 = vmatprep.subr.bf16.mxu0 0
    %3668 = vmatpush1.bf16.msra.mxu0 0
    %3669 = vmatprep.subr.bf16.mxu0 0
    %3670 = vmatpush1.bf16.msra.mxu0 0
    %3671 = vmatprep.subr.bf16.mxu0 0
    %3672 = vmatpush1.bf16.msra.mxu0 0
    %3673 = vmatprep.subr.bf16.mxu0 0
    %3674 = vmatpush1.bf16.msra.mxu0 %v1950
    %3675 = vmatprep.subr.bf16.mxu0 0
    %3676 = vmatpush1.bf16.msra.mxu0 %v1949
    %3677 = vmatprep.subr.bf16.mxu0 0
    %3678 = vmatpush2.bf16.msra.mxu0 0
    %3679 = vmatprep.subr.bf16.mxu0 0
    %3680 = vmatpush2.bf16.msra.mxu0 0
    %3681 = vmatprep.subr.bf16.mxu0 0
    %3682 = vmatpush2.bf16.msra.mxu0 0
    %3683 = vmatprep.subr.bf16.mxu0 0
    %3684 = vmatpush2.bf16.msra.mxu0 0
    %3685 = vmatprep.subr.bf16.mxu0 0
    %3686 = vmatpush2.bf16.msra.mxu0 0
    %3687 = vmatprep.subr.bf16.mxu0 0
    %3688 = vmatpush2.bf16.msra.mxu0 0
    %3689 = vmatprep.subr.bf16.mxu0 0
    %3690 = vmatpush2.bf16.msra.mxu0 0
    %3691 = vmatprep.subr.bf16.mxu0 0
    %3692 = vmatpush2.bf16.msra.mxu0 0
    %3693 = vmatprep.mubr.bf16.mxu0 0
    %3694 = vmatmul.mubr.bf16.gmra.mxu0 %v3656
    %v3695 = vpop.f32.mrf.mxu0
    %v3696 = vadd.f32 0.0, %v3695
    %v3697 = vpop.f32.mrf.mxu0
    %v3698 = vpop.f32.mrf.mxu0
    %v3699 = vadd.f32 0.0, %v3698
    %v3700 = vpop.f32.mrf.mxu0
    %3701 = vmatprep.mubr.bf16.mxu0 0
    %3702 = vmatmul.mubr.bf16.gmra.mxu0 %v3659
    %v3703 = vpop.f32.mrf.mxu0
    %v3704 = vadd.f32 0.0, %v3703
    %v3705 = vpop.f32.mrf.mxu0
    %v3706 = vpop.f32.mrf.mxu0
    %v3707 = vadd.f32 0.0, %v3706
    %v3708 = vpop.f32.mrf.mxu0
    %3709 = vdwg.mxu0
    %v3711 = vsel %vm364, %v3645, 0
    %v3714 = vsel %vm364, %v3646, 0
    %3716 = vmatprep.subr.bf16.mxu0 0
    %3717 = vmatpush1.bf16.msra.mxu0 0
    %3718 = vmatprep.subr.bf16.mxu0 0
    %3719 = vmatpush1.bf16.msra.mxu0 0
    %3720 = vmatprep.subr.bf16.mxu0 0
    %3721 = vmatpush1.bf16.msra.mxu0 0
    %3722 = vmatprep.subr.bf16.mxu0 0
    %3723 = vmatpush1.bf16.msra.mxu0 0
    %3724 = vmatprep.subr.bf16.mxu0 0
    %3725 = vmatpush1.bf16.msra.mxu0 0
    %3726 = vmatprep.subr.bf16.mxu0 0
    %3727 = vmatpush1.bf16.msra.mxu0 0
    %3728 = vmatprep.subr.bf16.mxu0 0
    %3729 = vmatpush1.bf16.msra.mxu0 %v2017
    %3730 = vmatprep.subr.bf16.mxu0 0
    %3731 = vmatpush1.bf16.msra.mxu0 %v2016
    %3732 = vmatprep.subr.bf16.mxu0 0
    %3733 = vmatpush2.bf16.msra.mxu0 0
    %3734 = vmatprep.subr.bf16.mxu0 0
    %3735 = vmatpush2.bf16.msra.mxu0 0
    %3736 = vmatprep.subr.bf16.mxu0 0
    %3737 = vmatpush2.bf16.msra.mxu0 0
    %3738 = vmatprep.subr.bf16.mxu0 0
    %3739 = vmatpush2.bf16.msra.mxu0 0
    %3740 = vmatprep.subr.bf16.mxu0 0
    %3741 = vmatpush2.bf16.msra.mxu0 0
    %3742 = vmatprep.subr.bf16.mxu0 0
    %3743 = vmatpush2.bf16.msra.mxu0 0
    %3744 = vmatprep.subr.bf16.mxu0 0
    %3745 = vmatpush2.bf16.msra.mxu0 0
    %3746 = vmatprep.subr.bf16.mxu0 0
    %3747 = vmatpush2.bf16.msra.mxu0 0
    %3748 = vmatprep.mubr.bf16.mxu0 0
    %3749 = vmatmul.mubr.bf16.gmra.mxu0 %v3711
    %v3750 = vpop.f32.mrf.mxu0
    %v3751 = vadd.f32 %v3696, %v3750
    %v3752 = vpop.f32.mrf.mxu0
    %v3753 = vpop.f32.mrf.mxu0
    %v3754 = vadd.f32 %v3699, %v3753
    %v3755 = vpop.f32.mrf.mxu0
    %3756 = vmatprep.mubr.bf16.mxu0 0
    %3757 = vmatmul.mubr.bf16.gmra.mxu0 %v3714
    %v3758 = vpop.f32.mrf.mxu0
    %v3759 = vadd.f32 %v3704, %v3758
    %v3760 = vpop.f32.mrf.mxu0
    %v3761 = vpop.f32.mrf.mxu0
    %v3762 = vadd.f32 %v3707, %v3761
    %v3763 = vpop.f32.mrf.mxu0
    %3764 = vdwg.mxu0
    %v3765 = vadd.f32 %v3751, %v2078
    %v3766 = vadd.f32 %v3754, %v2078
    %v3767 = vadd.f32 %v3759, %v2078
    %v3768 = vadd.f32 %v3762, %v2078
    %v3769 = vxor.u32 %v3765, 2147483648
    %v3770 = vxor.u32 %v3766, 2147483648
    %v3771 = vxor.u32 %v3767, 2147483648
    %v3772 = vxor.u32 %v3768, 2147483648
    %v3773 = vmul.f32 %v3769, 1.442695
    %v3774 = vpow.pop %v3773
    %v3775 = vmul.f32 %v3770, 1.442695
    %v3776 = vpow.pop %v3775
    %v3777 = vmul.f32 %v3771, 1.442695
    %v3778 = vpow.pop %v3777
    %v3779 = vmul.f32 %v3772, 1.442695
    %v3780 = vpow.pop %v3779
    %v3781 = vadd.f32 %v3774, 1.0
    %v3782 = vadd.f32 %v3776, 1.0
    %v3783 = vadd.f32 %v3778, 1.0
    %v3784 = vadd.f32 %v3780, 1.0
    %v3785 = vrcp.pop %v3781
    %v3786 = vmul.f32 1.0, %v3785
    %v3787 = vrcp.pop %v3782
    %v3788 = vmul.f32 1.0, %v3787
    %v3789 = vrcp.pop %v3783
    %v3790 = vmul.f32 1.0, %v3789
    %v3791 = vrcp.pop %v3784
    %v3792 = vmul.f32 1.0, %v3791
    %v3793 = vtanh.pop %v3765
    %v3794 = vtanh.pop %v3766
    %v3795 = vtanh.pop %v3767
    %v3796 = vtanh.pop %v3768
    %v3797 = vmul.f32 %v3786, %v2151
    %v3798 = vmul.f32 %v3788, %v2152
    %v3799 = vmul.f32 %v3790, %v2153
    %v3800 = vmul.f32 %v3792, %v2154
    %3805 = vrot.lane.b32.xlu0 %v3793, 32
    %v3806 = vpop.permute.xlu0 %3805
    %3807 = vrot.lane.b32.xlu0 %v3794, 32
    %v3808 = vpop.permute.xlu0 %3807
    %3809 = vrot.lane.b32.xlu0 %v3795, 32
    %v3810 = vpop.permute.xlu0 %3809
    %3811 = vrot.lane.b32.xlu0 %v3796, 32
    %v3812 = vpop.permute.xlu0 %3811
    %v3817 = vmul.f32 %v3786, %v3806
    %v3818 = vmul.f32 %v3788, %v3808
    %v3819 = vmul.f32 %v3790, %v3810
    %v3820 = vmul.f32 %v3792, %v3812
    %3825 = vrot.lane.b32.xlu0 %v3817, 32
    %v3826 = vpop.permute.xlu0 %3825
    %3827 = vrot.lane.b32.xlu0 %v3818, 32
    %v3828 = vpop.permute.xlu0 %3827
    %3829 = vrot.lane.b32.xlu0 %v3819, 32
    %v3830 = vpop.permute.xlu0 %3829
    %3831 = vrot.lane.b32.xlu0 %v3820, 32
    %v3832 = vpop.permute.xlu0 %3831
    %v3837 = vadd.f32 %v3797, %v3826
    %v3838 = vadd.f32 %v3798, %v3828
    %v3839 = vadd.f32 %v3799, %v3830
    %v3840 = vadd.f32 %v3800, %v3832
    %v3841 = vtanh.pop %v3837
    %v3842 = vtanh.pop %v3838
    %v3843 = vtanh.pop %v3839
    %v3844 = vtanh.pop %v3840
    %3849 = vrot.lane.b32.xlu0 %v3841, 32
    %v3850 = vpop.permute.xlu0 %3849
    %3851 = vrot.lane.b32.xlu0 %v3842, 32
    %v3852 = vpop.permute.xlu0 %3851
    %3853 = vrot.lane.b32.xlu0 %v3843, 32
    %v3854 = vpop.permute.xlu0 %3853
    %3855 = vrot.lane.b32.xlu0 %v3844, 32
    %v3856 = vpop.permute.xlu0 %3855
    %v3861 = vmul.f32 %v3786, %v3850
    %v3862 = vmul.f32 %v3788, %v3852
    %v3863 = vmul.f32 %v3790, %v3854
    %v3864 = vmul.f32 %v3792, %v3856
    %3869 = vrot.lane.b32.xlu0 %v3861, 64
    %v3870 = vpop.permute.xlu0 %3869
    %3871 = vrot.lane.b32.xlu0 %v3862, 64
    %v3872 = vpop.permute.xlu0 %3871
    %3873 = vrot.lane.b32.xlu0 %v3863, 64
    %v3874 = vpop.permute.xlu0 %3873
    %3875 = vrot.lane.b32.xlu0 %v3864, 64
    %v3876 = vpop.permute.xlu0 %3875
    %v3881 = vsel %vm364, %v3870, 0.0
    %3882 = vadd.xlane.f32.xlu0 %v3881
    %v3883 = vpop.xlane.xlu0 %3882
    %v3884 = vsel %vm364, %v3872, 0.0
    %3885 = vadd.xlane.f32.xlu0 %v3884
    %v3886 = vpop.xlane.xlu0 %3885
    %v3887 = vsel %vm364, %v3874, 0.0
    %3888 = vadd.xlane.f32.xlu0 %v3887
    %v3889 = vpop.xlane.xlu0 %3888
    %v3890 = vsel %vm364, %v3876, 0.0
    %3891 = vadd.xlane.f32.xlu0 %v3890
    %v3892 = vpop.xlane.xlu0 %3891
    %v3893 = vmul.f32 %v3883, %v377
    %v3894 = vmul.f32 %v3886, %v377
    %v3895 = vmul.f32 %v3889, %v377
    %v3896 = vmul.f32 %v3892, %v377
    %v3897 = vsub.f32 %v3861, %v3893
    %v3898 = vsub.f32 %v3862, %v3894
    %v3899 = vsub.f32 %v3863, %v3895
    %v3900 = vsub.f32 %v3864, %v3896
    %v3901 = vmul.f32 %v3897, %v3897
    %v3902 = vmul.f32 %v3898, %v3898
    %v3903 = vmul.f32 %v3899, %v3899
    %v3904 = vmul.f32 %v3900, %v3900
    %3909 = vrot.lane.b32.xlu0 %v3901, 64
    %v3910 = vpop.permute.xlu0 %3909
    %3911 = vrot.lane.b32.xlu0 %v3902, 64
    %v3912 = vpop.permute.xlu0 %3911
    %3913 = vrot.lane.b32.xlu0 %v3903, 64
    %v3914 = vpop.permute.xlu0 %3913
    %3915 = vrot.lane.b32.xlu0 %v3904, 64
    %v3916 = vpop.permute.xlu0 %3915
    %v3921 = vsel %vm364, %v3910, 0.0
    %3922 = vadd.xlane.f32.xlu0 %v3921
    %v3923 = vpop.xlane.xlu0 %3922
    %v3924 = vsel %vm364, %v3912, 0.0
    %3925 = vadd.xlane.f32.xlu0 %v3924
    %v3926 = vpop.xlane.xlu0 %3925
    %v3927 = vsel %vm364, %v3914, 0.0
    %3928 = vadd.xlane.f32.xlu0 %v3927
    %v3929 = vpop.xlane.xlu0 %3928
    %v3930 = vsel %vm364, %v3916, 0.0
    %3931 = vadd.xlane.f32.xlu0 %v3930
    %v3932 = vpop.xlane.xlu0 %3931
    %v3933 = vmul.f32 %v3923, %v377
    %v3934 = vmul.f32 %v3926, %v377
    %v3935 = vmul.f32 %v3929, %v377
    %v3936 = vmul.f32 %v3932, %v377
    %v3937 = vadd.f32 %v3933, 1e-05
    %v3938 = vadd.f32 %v3934, 1e-05
    %v3939 = vadd.f32 %v3935, 1e-05
    %v3940 = vadd.f32 %v3936, 1e-05
    %v3941 = vrsqrt.pop %v3937
    %v3942 = vrsqrt.pop %v3938
    %v3943 = vrsqrt.pop %v3939
    %v3944 = vrsqrt.pop %v3940
    %v3945 = vmul.f32 %v3897, %v3941
    %v3946 = vmul.f32 %v3898, %v3942
    %v3947 = vmul.f32 %v3899, %v3943
    %v3948 = vmul.f32 %v3900, %v3944
    %v3949 = vmul.f32 %v3945, %v2265
    %v3950 = vmul.f32 %v3946, %v2265
    %v3951 = vmul.f32 %v3947, %v2265
    %v3952 = vmul.f32 %v3948, %v2265
    %v3953 = vadd.f32 %v3949, %v2273
    %v3954 = vadd.f32 %v3950, %v2273
    %v3955 = vadd.f32 %v3951, %v2273
    %v3956 = vadd.f32 %v3952, %v2273
    %v3957 = vpack.c.bf16 %v3954, %v3953
    %v3958 = vpack.c.bf16 %v3956, %v3955
    %3961 = vrot.lane.b32.xlu0 %v3957, 64
    %v3962 = vpop.permute.xlu0 %3961
    %3963 = vrot.lane.b32.xlu0 %v3958, 64
    %v3964 = vpop.permute.xlu0 %3963
    %v3966 = vsel %vm364, %v3962, 0
    %v3969 = vsel %vm364, %v3964, 0
    %3971 = vmatprep.subr.bf16.mxu0 0
    %3972 = vmatpush1.bf16.msra.mxu0 0
    %3973 = vmatprep.subr.bf16.mxu0 0
    %3974 = vmatpush1.bf16.msra.mxu0 0
    %3975 = vmatprep.subr.bf16.mxu0 0
    %3976 = vmatpush1.bf16.msra.mxu0 0
    %3977 = vmatprep.subr.bf16.mxu0 0
    %3978 = vmatpush1.bf16.msra.mxu0 0
    %3979 = vmatprep.subr.bf16.mxu0 0
    %3980 = vmatpush1.bf16.msra.mxu0 0
    %3981 = vmatprep.subr.bf16.mxu0 0
    %3982 = vmatpush1.bf16.msra.mxu0 0
    %3983 = vmatprep.subr.bf16.mxu0 0
    %3984 = vmatpush1.bf16.msra.mxu0 %v449
    %3985 = vmatprep.subr.bf16.mxu0 0
    %3986 = vmatpush1.bf16.msra.mxu0 %v448
    %3987 = vmatprep.subr.bf16.mxu0 0
    %3988 = vmatpush2.bf16.msra.mxu0 0
    %3989 = vmatprep.subr.bf16.mxu0 0
    %3990 = vmatpush2.bf16.msra.mxu0 0
    %3991 = vmatprep.subr.bf16.mxu0 0
    %3992 = vmatpush2.bf16.msra.mxu0 0
    %3993 = vmatprep.subr.bf16.mxu0 0
    %3994 = vmatpush2.bf16.msra.mxu0 0
    %3995 = vmatprep.subr.bf16.mxu0 0
    %3996 = vmatpush2.bf16.msra.mxu0 0
    %3997 = vmatprep.subr.bf16.mxu0 0
    %3998 = vmatpush2.bf16.msra.mxu0 0
    %3999 = vmatprep.subr.bf16.mxu0 0
    %4000 = vmatpush2.bf16.msra.mxu0 0
    %4001 = vmatprep.subr.bf16.mxu0 0
    %4002 = vmatpush2.bf16.msra.mxu0 0
    %4003 = vmatprep.mubr.bf16.mxu0 0
    %4004 = vmatmul.mubr.bf16.gmra.mxu0 %v3966
    %v4005 = vpop.f32.mrf.mxu0
    %v4006 = vadd.f32 %v439, %v4005
    %v4007 = vpop.f32.mrf.mxu0
    %v4008 = vpop.f32.mrf.mxu0
    %v4009 = vadd.f32 %v439, %v4008
    %v4010 = vpop.f32.mrf.mxu0
    %4011 = vmatprep.mubr.bf16.mxu0 0
    %4012 = vmatmul.mubr.bf16.gmra.mxu0 %v3969
    %v4013 = vpop.f32.mrf.mxu0
    %v4014 = vadd.f32 %v439, %v4013
    %v4015 = vpop.f32.mrf.mxu0
    %v4016 = vpop.f32.mrf.mxu0
    %v4017 = vadd.f32 %v439, %v4016
    %v4018 = vpop.f32.mrf.mxu0
    %4019 = vdwg.mxu0
    %v4020 = vmax.f32 %v4006, 0.0
    %v4021 = vmax.f32 %v4009, 0.0
    %v4022 = vmax.f32 %v4014, 0.0
    %v4023 = vmax.f32 %v4017, 0.0
    %v4024 = vpack.c.bf16 %v4021, %v4020
    %v4025 = vpack.c.bf16 %v4023, %v4022
    %v4027 = vsel %vm364, %v4024, 0
    %v4030 = vsel %vm364, %v4025, 0
    %4032 = vmatprep.subr.bf16.mxu0 0
    %4033 = vmatpush1.bf16.msra.mxu0 0
    %4034 = vmatprep.subr.bf16.mxu0 0
    %4035 = vmatpush1.bf16.msra.mxu0 0
    %4036 = vmatprep.subr.bf16.mxu0 0
    %4037 = vmatpush1.bf16.msra.mxu0 0
    %4038 = vmatprep.subr.bf16.mxu0 0
    %4039 = vmatpush1.bf16.msra.mxu0 0
    %4040 = vmatprep.subr.bf16.mxu0 0
    %4041 = vmatpush1.bf16.msra.mxu0 0
    %4042 = vmatprep.subr.bf16.mxu0 0
    %4043 = vmatpush1.bf16.msra.mxu0 0
    %4044 = vmatprep.subr.bf16.mxu0 0
    %4045 = vmatpush1.bf16.msra.mxu0 %v526
    %4046 = vmatprep.subr.bf16.mxu0 0
    %4047 = vmatpush1.bf16.msra.mxu0 %v525
    %4048 = vmatprep.subr.bf16.mxu0 0
    %4049 = vmatpush2.bf16.msra.mxu0 0
    %4050 = vmatprep.subr.bf16.mxu0 0
    %4051 = vmatpush2.bf16.msra.mxu0 0
    %4052 = vmatprep.subr.bf16.mxu0 0
    %4053 = vmatpush2.bf16.msra.mxu0 0
    %4054 = vmatprep.subr.bf16.mxu0 0
    %4055 = vmatpush2.bf16.msra.mxu0 0
    %4056 = vmatprep.subr.bf16.mxu0 0
    %4057 = vmatpush2.bf16.msra.mxu0 0
    %4058 = vmatprep.subr.bf16.mxu0 0
    %4059 = vmatpush2.bf16.msra.mxu0 0
    %4060 = vmatprep.subr.bf16.mxu0 0
    %4061 = vmatpush2.bf16.msra.mxu0 0
    %4062 = vmatprep.subr.bf16.mxu0 0
    %4063 = vmatpush2.bf16.msra.mxu0 0
    %4064 = vmatprep.mubr.bf16.mxu0 0
    %4065 = vmatmul.mubr.bf16.gmra.mxu0 %v4027
    %v4066 = vpop.f32.mrf.mxu0
    %v4067 = vadd.f32 %v516, %v4066
    %v4068 = vpop.f32.mrf.mxu0
    %v4069 = vpop.f32.mrf.mxu0
    %v4070 = vadd.f32 %v516, %v4069
    %v4071 = vpop.f32.mrf.mxu0
    %4072 = vmatprep.mubr.bf16.mxu0 0
    %4073 = vmatmul.mubr.bf16.gmra.mxu0 %v4030
    %v4074 = vpop.f32.mrf.mxu0
    %v4075 = vadd.f32 %v516, %v4074
    %v4076 = vpop.f32.mrf.mxu0
    %v4077 = vpop.f32.mrf.mxu0
    %v4078 = vadd.f32 %v516, %v4077
    %v4079 = vpop.f32.mrf.mxu0
    %4080 = vdwg.mxu0
    %v4081 = vmax.f32 %v4067, 0.0
    %v4082 = vmax.f32 %v4070, 0.0
    %v4083 = vmax.f32 %v4075, 0.0
    %v4084 = vmax.f32 %v4078, 0.0
    %v4085 = vpack.c.bf16 %v4082, %v4081
    %v4086 = vpack.c.bf16 %v4084, %v4083
    %v4088 = vsel %vm364, %v4085, 0
    %v4091 = vsel %vm364, %v4086, 0
    %4093 = vmatprep.subr.bf16.mxu0 0
    %4094 = vmatpush1.bf16.msra.mxu0 0
    %4095 = vmatprep.subr.bf16.mxu0 0
    %4096 = vmatpush1.bf16.msra.mxu0 0
    %4097 = vmatprep.subr.bf16.mxu0 0
    %4098 = vmatpush1.bf16.msra.mxu0 0
    %4099 = vmatprep.subr.bf16.mxu0 0
    %4100 = vmatpush1.bf16.msra.mxu0 0
    %4101 = vmatprep.subr.bf16.mxu0 0
    %4102 = vmatpush1.bf16.msra.mxu0 0
    %4103 = vmatprep.subr.bf16.mxu0 0
    %4104 = vmatpush1.bf16.msra.mxu0 0
    %4105 = vmatprep.subr.bf16.mxu0 0
    %4106 = vmatpush1.bf16.msra.mxu0 %v603
    %4107 = vmatprep.subr.bf16.mxu0 0
    %4108 = vmatpush1.bf16.msra.mxu0 %v602
    %4109 = vmatprep.subr.bf16.mxu0 0
    %4110 = vmatpush2.bf16.msra.mxu0 0
    %4111 = vmatprep.subr.bf16.mxu0 0
    %4112 = vmatpush2.bf16.msra.mxu0 0
    %4113 = vmatprep.subr.bf16.mxu0 0
    %4114 = vmatpush2.bf16.msra.mxu0 0
    %4115 = vmatprep.subr.bf16.mxu0 0
    %4116 = vmatpush2.bf16.msra.mxu0 0
    %4117 = vmatprep.subr.bf16.mxu0 0
    %4118 = vmatpush2.bf16.msra.mxu0 0
    %4119 = vmatprep.subr.bf16.mxu0 0
    %4120 = vmatpush2.bf16.msra.mxu0 0
    %4121 = vmatprep.subr.bf16.mxu0 0
    %4122 = vmatpush2.bf16.msra.mxu0 0
    %4123 = vmatprep.subr.bf16.mxu0 0
    %4124 = vmatpush2.bf16.msra.mxu0 0
    %4125 = vmatprep.mubr.bf16.mxu0 0
    %4126 = vmatmul.mubr.bf16.gmra.mxu0 %v4088
    %v4127 = vpop.f32.mrf.mxu0
    %v4128 = vadd.f32 %v593, %v4127
    %v4129 = vpop.f32.mrf.mxu0
    %v4130 = vpop.f32.mrf.mxu0
    %v4131 = vadd.f32 %v593, %v4130
    %v4132 = vpop.f32.mrf.mxu0
    %4133 = vmatprep.mubr.bf16.mxu0 0
    %4134 = vmatmul.mubr.bf16.gmra.mxu0 %v4091
    %v4135 = vpop.f32.mrf.mxu0
    %v4136 = vadd.f32 %v593, %v4135
    %v4137 = vpop.f32.mrf.mxu0
    %v4138 = vpop.f32.mrf.mxu0
    %v4139 = vadd.f32 %v593, %v4138
    %v4140 = vpop.f32.mrf.mxu0
    %4141 = vdwg.mxu0
    %v4142 = vpack.c.bf16 %v4131, %v4128
    %v4143 = vpack.c.bf16 %v4139, %v4136
    %v4146 = vunpack.c.l.b16 %v4142
    %v4147 = vunpack.c.h.b16 %v4142
    %v4148 = vunpack.c.l.b16 %v4143
    %v4149 = vunpack.c.h.b16 %v4143
    %v4150 = vpack.c.b16 %v4146, %v4146
    %v4151 = vpack.c.b16 %v4147, %v4147
    %v4152 = vpack.c.b16 %v4148, %v4148
    %v4153 = vpack.c.b16 %v4149, %v4149
    %v4155 = vsel %vm677, %v4150, 0
    %4157 = vmatprep.subr.bf16.mxu0 0
    %4158 = vmatpush1.bf16.msra.mxu0 0
    %4159 = vmatprep.subr.bf16.mxu0 0
    %4160 = vmatpush1.bf16.msra.mxu0 0
    %4161 = vmatprep.subr.bf16.mxu0 0
    %4162 = vmatpush1.bf16.msra.mxu0 0
    %4163 = vmatprep.subr.bf16.mxu0 0
    %4164 = vmatpush1.bf16.msra.mxu0 0
    %4165 = vmatprep.subr.bf16.mxu0 0
    %4166 = vmatpush1.bf16.msra.mxu0 0
    %4167 = vmatprep.subr.bf16.mxu0 0
    %4168 = vmatpush1.bf16.msra.mxu0 0
    %4169 = vmatprep.subr.bf16.mxu0 0
    %4170 = vmatpush1.bf16.msra.mxu0 0
    %4171 = vmatprep.subr.bf16.mxu0 0
    %4172 = vmatpush1.bf16.msra.mxu0 %v4155
    %4173 = vmatprep.subr.bf16.mxu0 0
    %4174 = vmatpush2.bf16.msra.mxu0 0
    %4175 = vmatprep.subr.bf16.mxu0 0
    %4176 = vmatpush2.bf16.msra.mxu0 0
    %4177 = vmatprep.subr.bf16.mxu0 0
    %4178 = vmatpush2.bf16.msra.mxu0 0
    %4179 = vmatprep.subr.bf16.mxu0 0
    %4180 = vmatpush2.bf16.msra.mxu0 0
    %4181 = vmatprep.subr.bf16.mxu0 0
    %4182 = vmatpush2.bf16.msra.mxu0 0
    %4183 = vmatprep.subr.bf16.mxu0 0
    %4184 = vmatpush2.bf16.msra.mxu0 0
    %4185 = vmatprep.subr.bf16.mxu0 0
    %4186 = vmatpush2.bf16.msra.mxu0 0
    %4187 = vmatprep.subr.bf16.mxu0 0
    %4188 = vmatpush2.bf16.msra.mxu0 0
    %4189 = vmatprep.mubr.bf16.mxu0 0
    %4190 = vmatmul.mubr.bf16.gmra.mxu0 %v675
    %v4191 = vpop.f32.mrf.mxu0
    %v4192 = vadd.f32 0.0, %v4191
    %v4193 = vpop.f32.mrf.mxu0
    %v4194 = vpop.f32.mrf.mxu0
    %v4195 = vadd.f32 0.0, %v4194
    %v4196 = vpop.f32.mrf.mxu0
    %4197 = vdwg.mxu0
    %v4199 = vsel %vm677, %v4151, 0
    %4201 = vmatprep.subr.bf16.mxu0 0
    %4202 = vmatpush1.bf16.msra.mxu0 0
    %4203 = vmatprep.subr.bf16.mxu0 0
    %4204 = vmatpush1.bf16.msra.mxu0 0
    %4205 = vmatprep.subr.bf16.mxu0 0
    %4206 = vmatpush1.bf16.msra.mxu0 0
    %4207 = vmatprep.subr.bf16.mxu0 0
    %4208 = vmatpush1.bf16.msra.mxu0 0
    %4209 = vmatprep.subr.bf16.mxu0 0
    %4210 = vmatpush1.bf16.msra.mxu0 0
    %4211 = vmatprep.subr.bf16.mxu0 0
    %4212 = vmatpush1.bf16.msra.mxu0 0
    %4213 = vmatprep.subr.bf16.mxu0 0
    %4214 = vmatpush1.bf16.msra.mxu0 0
    %4215 = vmatprep.subr.bf16.mxu0 0
    %4216 = vmatpush1.bf16.msra.mxu0 %v4199
    %4217 = vmatprep.subr.bf16.mxu0 0
    %4218 = vmatpush2.bf16.msra.mxu0 0
    %4219 = vmatprep.subr.bf16.mxu0 0
    %4220 = vmatpush2.bf16.msra.mxu0 0
    %4221 = vmatprep.subr.bf16.mxu0 0
    %4222 = vmatpush2.bf16.msra.mxu0 0
    %4223 = vmatprep.subr.bf16.mxu0 0
    %4224 = vmatpush2.bf16.msra.mxu0 0
    %4225 = vmatprep.subr.bf16.mxu0 0
    %4226 = vmatpush2.bf16.msra.mxu0 0
    %4227 = vmatprep.subr.bf16.mxu0 0
    %4228 = vmatpush2.bf16.msra.mxu0 0
    %4229 = vmatprep.subr.bf16.mxu0 0
    %4230 = vmatpush2.bf16.msra.mxu0 0
    %4231 = vmatprep.subr.bf16.mxu0 0
    %4232 = vmatpush2.bf16.msra.mxu0 0
    %4233 = vmatprep.mubr.bf16.mxu0 0
    %4234 = vmatmul.mubr.bf16.gmra.mxu0 %v723
    %v4235 = vpop.f32.mrf.mxu0
    %v4236 = vadd.f32 0.0, %v4235
    %v4237 = vpop.f32.mrf.mxu0
    %v4238 = vpop.f32.mrf.mxu0
    %v4239 = vadd.f32 0.0, %v4238
    %v4240 = vpop.f32.mrf.mxu0
    %4241 = vdwg.mxu0
    %v4243 = vsel %vm677, %v4152, 0
    %4245 = vmatprep.subr.bf16.mxu0 0
    %4246 = vmatpush1.bf16.msra.mxu0 0
    %4247 = vmatprep.subr.bf16.mxu0 0
    %4248 = vmatpush1.bf16.msra.mxu0 0
    %4249 = vmatprep.subr.bf16.mxu0 0
    %4250 = vmatpush1.bf16.msra.mxu0 0
    %4251 = vmatprep.subr.bf16.mxu0 0
    %4252 = vmatpush1.bf16.msra.mxu0 0
    %4253 = vmatprep.subr.bf16.mxu0 0
    %4254 = vmatpush1.bf16.msra.mxu0 0
    %4255 = vmatprep.subr.bf16.mxu0 0
    %4256 = vmatpush1.bf16.msra.mxu0 0
    %4257 = vmatprep.subr.bf16.mxu0 0
    %4258 = vmatpush1.bf16.msra.mxu0 0
    %4259 = vmatprep.subr.bf16.mxu0 0
    %4260 = vmatpush1.bf16.msra.mxu0 %v4243
    %4261 = vmatprep.subr.bf16.mxu0 0
    %4262 = vmatpush2.bf16.msra.mxu0 0
    %4263 = vmatprep.subr.bf16.mxu0 0
    %4264 = vmatpush2.bf16.msra.mxu0 0
    %4265 = vmatprep.subr.bf16.mxu0 0
    %4266 = vmatpush2.bf16.msra.mxu0 0
    %4267 = vmatprep.subr.bf16.mxu0 0
    %4268 = vmatpush2.bf16.msra.mxu0 0
    %4269 = vmatprep.subr.bf16.mxu0 0
    %4270 = vmatpush2.bf16.msra.mxu0 0
    %4271 = vmatprep.subr.bf16.mxu0 0
    %4272 = vmatpush2.bf16.msra.mxu0 0
    %4273 = vmatprep.subr.bf16.mxu0 0
    %4274 = vmatpush2.bf16.msra.mxu0 0
    %4275 = vmatprep.subr.bf16.mxu0 0
    %4276 = vmatpush2.bf16.msra.mxu0 0
    %4277 = vmatprep.mubr.bf16.mxu0 0
    %4278 = vmatmul.mubr.bf16.gmra.mxu0 %v770
    %v4279 = vpop.f32.mrf.mxu0
    %v4280 = vadd.f32 0.0, %v4279
    %v4281 = vpop.f32.mrf.mxu0
    %v4282 = vpop.f32.mrf.mxu0
    %v4283 = vadd.f32 0.0, %v4282
    %v4284 = vpop.f32.mrf.mxu0
    %4285 = vdwg.mxu0
    %v4287 = vsel %vm677, %v4153, 0
    %4289 = vmatprep.subr.bf16.mxu0 0
    %4290 = vmatpush1.bf16.msra.mxu0 0
    %4291 = vmatprep.subr.bf16.mxu0 0
    %4292 = vmatpush1.bf16.msra.mxu0 0
    %4293 = vmatprep.subr.bf16.mxu0 0
    %4294 = vmatpush1.bf16.msra.mxu0 0
    %4295 = vmatprep.subr.bf16.mxu0 0
    %4296 = vmatpush1.bf16.msra.mxu0 0
    %4297 = vmatprep.subr.bf16.mxu0 0
    %4298 = vmatpush1.bf16.msra.mxu0 0
    %4299 = vmatprep.subr.bf16.mxu0 0
    %4300 = vmatpush1.bf16.msra.mxu0 0
    %4301 = vmatprep.subr.bf16.mxu0 0
    %4302 = vmatpush1.bf16.msra.mxu0 0
    %4303 = vmatprep.subr.bf16.mxu0 0
    %4304 = vmatpush1.bf16.msra.mxu0 %v4287
    %4305 = vmatprep.subr.bf16.mxu0 0
    %4306 = vmatpush2.bf16.msra.mxu0 0
    %4307 = vmatprep.subr.bf16.mxu0 0
    %4308 = vmatpush2.bf16.msra.mxu0 0
    %4309 = vmatprep.subr.bf16.mxu0 0
    %4310 = vmatpush2.bf16.msra.mxu0 0
    %4311 = vmatprep.subr.bf16.mxu0 0
    %4312 = vmatpush2.bf16.msra.mxu0 0
    %4313 = vmatprep.subr.bf16.mxu0 0
    %4314 = vmatpush2.bf16.msra.mxu0 0
    %4315 = vmatprep.subr.bf16.mxu0 0
    %4316 = vmatpush2.bf16.msra.mxu0 0
    %4317 = vmatprep.subr.bf16.mxu0 0
    %4318 = vmatpush2.bf16.msra.mxu0 0
    %4319 = vmatprep.subr.bf16.mxu0 0
    %4320 = vmatpush2.bf16.msra.mxu0 0
    %4321 = vmatprep.mubr.bf16.mxu0 0
    %4322 = vmatmul.mubr.bf16.gmra.mxu0 %v817
    %v4323 = vpop.f32.mrf.mxu0
    %v4324 = vadd.f32 0.0, %v4323
    %v4325 = vpop.f32.mrf.mxu0
    %v4326 = vpop.f32.mrf.mxu0
    %v4327 = vadd.f32 0.0, %v4326
    %v4328 = vpop.f32.mrf.mxu0
    %4329 = vdwg.mxu0
    %v4330 = vpack.c.bf16 %v4195, %v4192
    %v4331 = vpack.c.bf16 %v4239, %v4236
    %v4332 = vpack.c.bf16 %v4283, %v4280
    %v4333 = vpack.c.bf16 %v4327, %v4324
    %v4334 = vpack.c.bf16 %v3019, %v3018
    %v4335 = vpack.c.bf16 %v3021, %v3020
    %v4336 = vpack.c.bf16 %v3023, %v3022
    %v4337 = vpack.c.bf16 %v3025, %v3024
    %4342 = vrot.lane.b32.xlu0 %v4334, 64
    %v4343 = vpop.permute.xlu0 %4342
    %4344 = vrot.lane.b32.xlu0 %v4335, 64
    %v4345 = vpop.permute.xlu0 %4344
    %4346 = vrot.lane.b32.xlu0 %v4336, 64
    %v4347 = vpop.permute.xlu0 %4346
    %4348 = vrot.lane.b32.xlu0 %v4337, 64
    %v4349 = vpop.permute.xlu0 %4348
    %v4351 = vsel %vm364, %v4343, 0
    %v4354 = vsel %vm364, %v4345, 0
    %v4357 = vsel %vm364, %v4347, 0
    %v4360 = vsel %vm364, %v4349, 0
    %4362 = vmatprep.subr.bf16.mxu0 0
    %4363 = vmatpush1.bf16.msra.mxu0 0
    %4364 = vmatprep.subr.bf16.mxu0 0
    %4365 = vmatpush1.bf16.msra.mxu0 0
    %4366 = vmatprep.subr.bf16.mxu0 0
    %4367 = vmatpush1.bf16.msra.mxu0 0
    %4368 = vmatprep.subr.bf16.mxu0 0
    %4369 = vmatpush1.bf16.msra.mxu0 0
    %4370 = vmatprep.subr.bf16.mxu0 0
    %4371 = vmatpush1.bf16.msra.mxu0 0
    %4372 = vmatprep.subr.bf16.mxu0 0
    %4373 = vmatpush1.bf16.msra.mxu0 0
    %4374 = vmatprep.subr.bf16.mxu0 0
    %4375 = vmatpush1.bf16.msra.mxu0 %v877
    %4376 = vmatprep.subr.bf16.mxu0 0
    %4377 = vmatpush1.bf16.msra.mxu0 %v876
    %4378 = vmatprep.subr.bf16.mxu0 0
    %4379 = vmatpush2.bf16.msra.mxu0 0
    %4380 = vmatprep.subr.bf16.mxu0 0
    %4381 = vmatpush2.bf16.msra.mxu0 0
    %4382 = vmatprep.subr.bf16.mxu0 0
    %4383 = vmatpush2.bf16.msra.mxu0 0
    %4384 = vmatprep.subr.bf16.mxu0 0
    %4385 = vmatpush2.bf16.msra.mxu0 0
    %4386 = vmatprep.subr.bf16.mxu0 0
    %4387 = vmatpush2.bf16.msra.mxu0 0
    %4388 = vmatprep.subr.bf16.mxu0 0
    %4389 = vmatpush2.bf16.msra.mxu0 0
    %4390 = vmatprep.subr.bf16.mxu0 0
    %4391 = vmatpush2.bf16.msra.mxu0 0
    %4392 = vmatprep.subr.bf16.mxu0 0
    %4393 = vmatpush2.bf16.msra.mxu0 0
    %4394 = vmatprep.mubr.bf16.mxu0 0
    %4395 = vmatmul.mubr.bf16.gmra.mxu0 %v4351
    %v4396 = vpop.f32.mrf.mxu0
    %v4397 = vadd.f32 0.0, %v4396
    %v4398 = vpop.f32.mrf.mxu0
    %v4399 = vpop.f32.mrf.mxu0
    %v4400 = vadd.f32 0.0, %v4399
    %v4401 = vpop.f32.mrf.mxu0
    %4402 = vmatprep.mubr.bf16.mxu0 0
    %4403 = vmatmul.mubr.bf16.gmra.mxu0 %v4354
    %v4404 = vpop.f32.mrf.mxu0
    %v4405 = vadd.f32 0.0, %v4404
    %v4406 = vpop.f32.mrf.mxu0
    %v4407 = vpop.f32.mrf.mxu0
    %v4408 = vadd.f32 0.0, %v4407
    %v4409 = vpop.f32.mrf.mxu0
    %4410 = vmatprep.mubr.bf16.mxu0 0
    %4411 = vmatmul.mubr.bf16.gmra.mxu0 %v4357
    %v4412 = vpop.f32.mrf.mxu0
    %v4413 = vadd.f32 0.0, %v4412
    %v4414 = vpop.f32.mrf.mxu0
    %v4415 = vpop.f32.mrf.mxu0
    %v4416 = vadd.f32 0.0, %v4415
    %v4417 = vpop.f32.mrf.mxu0
    %4418 = vmatprep.mubr.bf16.mxu0 0
    %4419 = vmatmul.mubr.bf16.gmra.mxu0 %v4360
    %v4420 = vpop.f32.mrf.mxu0
    %v4421 = vadd.f32 0.0, %v4420
    %v4422 = vpop.f32.mrf.mxu0
    %v4423 = vpop.f32.mrf.mxu0
    %v4424 = vadd.f32 0.0, %v4423
    %v4425 = vpop.f32.mrf.mxu0
    %4426 = vdwg.mxu0
    %v4428 = vsel %vm364, %v4330, 0
    %v4431 = vsel %vm364, %v4331, 0
    %v4434 = vsel %vm364, %v4332, 0
    %v4437 = vsel %vm364, %v4333, 0
    %4439 = vmatprep.subr.bf16.mxu0 0
    %4440 = vmatpush1.bf16.msra.mxu0 0
    %4441 = vmatprep.subr.bf16.mxu0 0
    %4442 = vmatpush1.bf16.msra.mxu0 0
    %4443 = vmatprep.subr.bf16.mxu0 0
    %4444 = vmatpush1.bf16.msra.mxu0 0
    %4445 = vmatprep.subr.bf16.mxu0 0
    %4446 = vmatpush1.bf16.msra.mxu0 0
    %4447 = vmatprep.subr.bf16.mxu0 0
    %4448 = vmatpush1.bf16.msra.mxu0 0
    %4449 = vmatprep.subr.bf16.mxu0 0
    %4450 = vmatpush1.bf16.msra.mxu0 0
    %4451 = vmatprep.subr.bf16.mxu0 0
    %4452 = vmatpush1.bf16.msra.mxu0 %v957
    %4453 = vmatprep.subr.bf16.mxu0 0
    %4454 = vmatpush1.bf16.msra.mxu0 %v956
    %4455 = vmatprep.subr.bf16.mxu0 0
    %4456 = vmatpush2.bf16.msra.mxu0 0
    %4457 = vmatprep.subr.bf16.mxu0 0
    %4458 = vmatpush2.bf16.msra.mxu0 0
    %4459 = vmatprep.subr.bf16.mxu0 0
    %4460 = vmatpush2.bf16.msra.mxu0 0
    %4461 = vmatprep.subr.bf16.mxu0 0
    %4462 = vmatpush2.bf16.msra.mxu0 0
    %4463 = vmatprep.subr.bf16.mxu0 0
    %4464 = vmatpush2.bf16.msra.mxu0 0
    %4465 = vmatprep.subr.bf16.mxu0 0
    %4466 = vmatpush2.bf16.msra.mxu0 0
    %4467 = vmatprep.subr.bf16.mxu0 0
    %4468 = vmatpush2.bf16.msra.mxu0 0
    %4469 = vmatprep.subr.bf16.mxu0 0
    %4470 = vmatpush2.bf16.msra.mxu0 0
    %4471 = vmatprep.mubr.bf16.mxu0 0
    %4472 = vmatmul.mubr.bf16.gmra.mxu0 %v4428
    %v4473 = vpop.f32.mrf.mxu0
    %v4474 = vadd.f32 %v4397, %v4473
    %v4475 = vpop.f32.mrf.mxu0
    %v4476 = vpop.f32.mrf.mxu0
    %v4477 = vadd.f32 %v4400, %v4476
    %v4478 = vpop.f32.mrf.mxu0
    %4479 = vmatprep.mubr.bf16.mxu0 0
    %4480 = vmatmul.mubr.bf16.gmra.mxu0 %v4431
    %v4481 = vpop.f32.mrf.mxu0
    %v4482 = vadd.f32 %v4405, %v4481
    %v4483 = vpop.f32.mrf.mxu0
    %v4484 = vpop.f32.mrf.mxu0
    %v4485 = vadd.f32 %v4408, %v4484
    %v4486 = vpop.f32.mrf.mxu0
    %4487 = vmatprep.mubr.bf16.mxu0 0
    %4488 = vmatmul.mubr.bf16.gmra.mxu0 %v4434
    %v4489 = vpop.f32.mrf.mxu0
    %v4490 = vadd.f32 %v4413, %v4489
    %v4491 = vpop.f32.mrf.mxu0
    %v4492 = vpop.f32.mrf.mxu0
    %v4493 = vadd.f32 %v4416, %v4492
    %v4494 = vpop.f32.mrf.mxu0
    %4495 = vmatprep.mubr.bf16.mxu0 0
    %4496 = vmatmul.mubr.bf16.gmra.mxu0 %v4437
    %v4497 = vpop.f32.mrf.mxu0
    %v4498 = vadd.f32 %v4421, %v4497
    %v4499 = vpop.f32.mrf.mxu0
    %v4500 = vpop.f32.mrf.mxu0
    %v4501 = vadd.f32 %v4424, %v4500
    %v4502 = vpop.f32.mrf.mxu0
    %4503 = vdwg.mxu0
    %v4504 = vadd.f32 %v4474, %v1040
    %v4505 = vadd.f32 %v4477, %v1040
    %v4506 = vadd.f32 %v4482, %v1040
    %v4507 = vadd.f32 %v4485, %v1040
    %v4508 = vadd.f32 %v4490, %v1040
    %v4509 = vadd.f32 %v4493, %v1040
    %v4510 = vadd.f32 %v4498, %v1040
    %v4511 = vadd.f32 %v4501, %v1040
    %v4512 = vxor.u32 %v4504, 2147483648
    %v4513 = vxor.u32 %v4505, 2147483648
    %v4514 = vxor.u32 %v4506, 2147483648
    %v4515 = vxor.u32 %v4507, 2147483648
    %v4516 = vxor.u32 %v4508, 2147483648
    %v4517 = vxor.u32 %v4509, 2147483648
    %v4518 = vxor.u32 %v4510, 2147483648
    %v4519 = vxor.u32 %v4511, 2147483648
    %v4520 = vmul.f32 %v4512, 1.442695
    %v4521 = vpow.pop %v4520
    %v4522 = vmul.f32 %v4513, 1.442695
    %v4523 = vpow.pop %v4522
    %v4524 = vmul.f32 %v4514, 1.442695
    %v4525 = vpow.pop %v4524
    %v4526 = vmul.f32 %v4515, 1.442695
    %v4527 = vpow.pop %v4526
    %v4528 = vmul.f32 %v4516, 1.442695
    %v4529 = vpow.pop %v4528
    %v4530 = vmul.f32 %v4517, 1.442695
    %v4531 = vpow.pop %v4530
    %v4532 = vmul.f32 %v4518, 1.442695
    %v4533 = vpow.pop %v4532
    %v4534 = vmul.f32 %v4519, 1.442695
    %v4535 = vpow.pop %v4534
    %v4536 = vadd.f32 %v4521, 1.0
    %v4537 = vadd.f32 %v4523, 1.0
    %v4538 = vadd.f32 %v4525, 1.0
    %v4539 = vadd.f32 %v4527, 1.0
    %v4540 = vadd.f32 %v4529, 1.0
    %v4541 = vadd.f32 %v4531, 1.0
    %v4542 = vadd.f32 %v4533, 1.0
    %v4543 = vadd.f32 %v4535, 1.0
    %v4544 = vrcp.pop %v4536
    %v4545 = vmul.f32 1.0, %v4544
    %v4546 = vrcp.pop %v4537
    %v4547 = vmul.f32 1.0, %v4546
    %v4548 = vrcp.pop %v4538
    %v4549 = vmul.f32 1.0, %v4548
    %v4550 = vrcp.pop %v4539
    %v4551 = vmul.f32 1.0, %v4550
    %v4552 = vrcp.pop %v4540
    %v4553 = vmul.f32 1.0, %v4552
    %v4554 = vrcp.pop %v4541
    %v4555 = vmul.f32 1.0, %v4554
    %v4556 = vrcp.pop %v4542
    %v4557 = vmul.f32 1.0, %v4556
    %v4558 = vrcp.pop %v4543
    %v4559 = vmul.f32 1.0, %v4558
    %v4560 = vtanh.pop %v4504
    %v4561 = vtanh.pop %v4505
    %v4562 = vtanh.pop %v4506
    %v4563 = vtanh.pop %v4507
    %v4564 = vtanh.pop %v4508
    %v4565 = vtanh.pop %v4509
    %v4566 = vtanh.pop %v4510
    %v4567 = vtanh.pop %v4511
    %v4568 = vmul.f32 %v4545, %v2970
    %v4569 = vmul.f32 %v4547, %v2971
    %v4570 = vmul.f32 %v4549, %v2972
    %v4571 = vmul.f32 %v4551, %v2973
    %v4572 = vmul.f32 %v4553, %v2974
    %v4573 = vmul.f32 %v4555, %v2975
    %v4574 = vmul.f32 %v4557, %v2976
    %v4575 = vmul.f32 %v4559, %v2977
    %4584 = vrot.lane.b32.xlu0 %v4560, 32
    %v4585 = vpop.permute.xlu0 %4584
    %4586 = vrot.lane.b32.xlu0 %v4561, 32
    %v4587 = vpop.permute.xlu0 %4586
    %4588 = vrot.lane.b32.xlu0 %v4562, 32
    %v4589 = vpop.permute.xlu0 %4588
    %4590 = vrot.lane.b32.xlu0 %v4563, 32
    %v4591 = vpop.permute.xlu0 %4590
    %4592 = vrot.lane.b32.xlu0 %v4564, 32
    %v4593 = vpop.permute.xlu0 %4592
    %4594 = vrot.lane.b32.xlu0 %v4565, 32
    %v4595 = vpop.permute.xlu0 %4594
    %4596 = vrot.lane.b32.xlu0 %v4566, 32
    %v4597 = vpop.permute.xlu0 %4596
    %4598 = vrot.lane.b32.xlu0 %v4567, 32
    %v4599 = vpop.permute.xlu0 %4598
    %v4608 = vmul.f32 %v4545, %v4585
    %v4609 = vmul.f32 %v4547, %v4587
    %v4610 = vmul.f32 %v4549, %v4589
    %v4611 = vmul.f32 %v4551, %v4591
    %v4612 = vmul.f32 %v4553, %v4593
    %v4613 = vmul.f32 %v4555, %v4595
    %v4614 = vmul.f32 %v4557, %v4597
    %v4615 = vmul.f32 %v4559, %v4599
    %4624 = vrot.lane.b32.xlu0 %v4608, 32
    %v4625 = vpop.permute.xlu0 %4624
    %4626 = vrot.lane.b32.xlu0 %v4609, 32
    %v4627 = vpop.permute.xlu0 %4626
    %4628 = vrot.lane.b32.xlu0 %v4610, 32
    %v4629 = vpop.permute.xlu0 %4628
    %4630 = vrot.lane.b32.xlu0 %v4611, 32
    %v4631 = vpop.permute.xlu0 %4630
    %4632 = vrot.lane.b32.xlu0 %v4612, 32
    %v4633 = vpop.permute.xlu0 %4632
    %4634 = vrot.lane.b32.xlu0 %v4613, 32
    %v4635 = vpop.permute.xlu0 %4634
    %4636 = vrot.lane.b32.xlu0 %v4614, 32
    %v4637 = vpop.permute.xlu0 %4636
    %4638 = vrot.lane.b32.xlu0 %v4615, 32
    %v4639 = vpop.permute.xlu0 %4638
    %v4648 = vadd.f32 %v4568, %v4625
    %v4649 = vadd.f32 %v4569, %v4627
    %v4650 = vadd.f32 %v4570, %v4629
    %v4651 = vadd.f32 %v4571, %v4631
    %v4652 = vadd.f32 %v4572, %v4633
    %v4653 = vadd.f32 %v4573, %v4635
    %v4654 = vadd.f32 %v4574, %v4637
    %v4655 = vadd.f32 %v4575, %v4639
    %v4656 = vtanh.pop %v4648
    %v4657 = vtanh.pop %v4649
    %v4658 = vtanh.pop %v4650
    %v4659 = vtanh.pop %v4651
    %v4660 = vtanh.pop %v4652
    %v4661 = vtanh.pop %v4653
    %v4662 = vtanh.pop %v4654
    %v4663 = vtanh.pop %v4655
    %4672 = vrot.lane.b32.xlu0 %v4656, 32
    %v4673 = vpop.permute.xlu0 %4672
    %4674 = vrot.lane.b32.xlu0 %v4657, 32
    %v4675 = vpop.permute.xlu0 %4674
    %4676 = vrot.lane.b32.xlu0 %v4658, 32
    %v4677 = vpop.permute.xlu0 %4676
    %4678 = vrot.lane.b32.xlu0 %v4659, 32
    %v4679 = vpop.permute.xlu0 %4678
    %4680 = vrot.lane.b32.xlu0 %v4660, 32
    %v4681 = vpop.permute.xlu0 %4680
    %4682 = vrot.lane.b32.xlu0 %v4661, 32
    %v4683 = vpop.permute.xlu0 %4682
    %4684 = vrot.lane.b32.xlu0 %v4662, 32
    %v4685 = vpop.permute.xlu0 %4684
    %4686 = vrot.lane.b32.xlu0 %v4663, 32
    %v4687 = vpop.permute.xlu0 %4686
    %v4696 = vmul.f32 %v4545, %v4673
    %v4697 = vmul.f32 %v4547, %v4675
    %v4698 = vmul.f32 %v4549, %v4677
    %v4699 = vmul.f32 %v4551, %v4679
    %v4700 = vmul.f32 %v4553, %v4681
    %v4701 = vmul.f32 %v4555, %v4683
    %v4702 = vmul.f32 %v4557, %v4685
    %v4703 = vmul.f32 %v4559, %v4687
    %4712 = vrot.lane.b32.xlu0 %v4696, 64
    %v4713 = vpop.permute.xlu0 %4712
    %4714 = vrot.lane.b32.xlu0 %v4697, 64
    %v4715 = vpop.permute.xlu0 %4714
    %4716 = vrot.lane.b32.xlu0 %v4698, 64
    %v4717 = vpop.permute.xlu0 %4716
    %4718 = vrot.lane.b32.xlu0 %v4699, 64
    %v4719 = vpop.permute.xlu0 %4718
    %4720 = vrot.lane.b32.xlu0 %v4700, 64
    %v4721 = vpop.permute.xlu0 %4720
    %4722 = vrot.lane.b32.xlu0 %v4701, 64
    %v4723 = vpop.permute.xlu0 %4722
    %4724 = vrot.lane.b32.xlu0 %v4702, 64
    %v4725 = vpop.permute.xlu0 %4724
    %4726 = vrot.lane.b32.xlu0 %v4703, 64
    %v4727 = vpop.permute.xlu0 %4726
    %v4736 = vsel %vm364, %v4713, 0.0
    %4737 = vadd.xlane.f32.xlu0 %v4736
    %v4738 = vpop.xlane.xlu0 %4737
    %v4739 = vsel %vm364, %v4715, 0.0
    %4740 = vadd.xlane.f32.xlu0 %v4739
    %v4741 = vpop.xlane.xlu0 %4740
    %v4742 = vsel %vm364, %v4717, 0.0
    %4743 = vadd.xlane.f32.xlu0 %v4742
    %v4744 = vpop.xlane.xlu0 %4743
    %v4745 = vsel %vm364, %v4719, 0.0
    %4746 = vadd.xlane.f32.xlu0 %v4745
    %v4747 = vpop.xlane.xlu0 %4746
    %v4748 = vsel %vm364, %v4721, 0.0
    %4749 = vadd.xlane.f32.xlu0 %v4748
    %v4750 = vpop.xlane.xlu0 %4749
    %v4751 = vsel %vm364, %v4723, 0.0
    %4752 = vadd.xlane.f32.xlu0 %v4751
    %v4753 = vpop.xlane.xlu0 %4752
    %v4754 = vsel %vm364, %v4725, 0.0
    %4755 = vadd.xlane.f32.xlu0 %v4754
    %v4756 = vpop.xlane.xlu0 %4755
    %v4757 = vsel %vm364, %v4727, 0.0
    %4758 = vadd.xlane.f32.xlu0 %v4757
    %v4759 = vpop.xlane.xlu0 %4758
    %v4760 = vmul.f32 %v4738, %v377
    %v4761 = vmul.f32 %v4741, %v377
    %v4762 = vmul.f32 %v4744, %v377
    %v4763 = vmul.f32 %v4747, %v377
    %v4764 = vmul.f32 %v4750, %v377
    %v4765 = vmul.f32 %v4753, %v377
    %v4766 = vmul.f32 %v4756, %v377
    %v4767 = vmul.f32 %v4759, %v377
    %v4768 = vsub.f32 %v4696, %v4760
    %v4769 = vsub.f32 %v4697, %v4761
    %v4770 = vsub.f32 %v4698, %v4762
    %v4771 = vsub.f32 %v4699, %v4763
    %v4772 = vsub.f32 %v4700, %v4764
    %v4773 = vsub.f32 %v4701, %v4765
    %v4774 = vsub.f32 %v4702, %v4766
    %v4775 = vsub.f32 %v4703, %v4767
    %v4776 = vmul.f32 %v4768, %v4768
    %v4777 = vmul.f32 %v4769, %v4769
    %v4778 = vmul.f32 %v4770, %v4770
    %v4779 = vmul.f32 %v4771, %v4771
    %v4780 = vmul.f32 %v4772, %v4772
    %v4781 = vmul.f32 %v4773, %v4773
    %v4782 = vmul.f32 %v4774, %v4774
    %v4783 = vmul.f32 %v4775, %v4775
    %4792 = vrot.lane.b32.xlu0 %v4776, 64
    %v4793 = vpop.permute.xlu0 %4792
    %4794 = vrot.lane.b32.xlu0 %v4777, 64
    %v4795 = vpop.permute.xlu0 %4794
    %4796 = vrot.lane.b32.xlu0 %v4778, 64
    %v4797 = vpop.permute.xlu0 %4796
    %4798 = vrot.lane.b32.xlu0 %v4779, 64
    %v4799 = vpop.permute.xlu0 %4798
    %4800 = vrot.lane.b32.xlu0 %v4780, 64
    %v4801 = vpop.permute.xlu0 %4800
    %4802 = vrot.lane.b32.xlu0 %v4781, 64
    %v4803 = vpop.permute.xlu0 %4802
    %4804 = vrot.lane.b32.xlu0 %v4782, 64
    %v4805 = vpop.permute.xlu0 %4804
    %4806 = vrot.lane.b32.xlu0 %v4783, 64
    %v4807 = vpop.permute.xlu0 %4806
    %v4816 = vsel %vm364, %v4793, 0.0
    %4817 = vadd.xlane.f32.xlu0 %v4816
    %v4818 = vpop.xlane.xlu0 %4817
    %v4819 = vsel %vm364, %v4795, 0.0
    %4820 = vadd.xlane.f32.xlu0 %v4819
    %v4821 = vpop.xlane.xlu0 %4820
    %v4822 = vsel %vm364, %v4797, 0.0
    %4823 = vadd.xlane.f32.xlu0 %v4822
    %v4824 = vpop.xlane.xlu0 %4823
    %v4825 = vsel %vm364, %v4799, 0.0
    %4826 = vadd.xlane.f32.xlu0 %v4825
    %v4827 = vpop.xlane.xlu0 %4826
    %v4828 = vsel %vm364, %v4801, 0.0
    %4829 = vadd.xlane.f32.xlu0 %v4828
    %v4830 = vpop.xlane.xlu0 %4829
    %v4831 = vsel %vm364, %v4803, 0.0
    %4832 = vadd.xlane.f32.xlu0 %v4831
    %v4833 = vpop.xlane.xlu0 %4832
    %v4834 = vsel %vm364, %v4805, 0.0
    %4835 = vadd.xlane.f32.xlu0 %v4834
    %v4836 = vpop.xlane.xlu0 %4835
    %v4837 = vsel %vm364, %v4807, 0.0
    %4838 = vadd.xlane.f32.xlu0 %v4837
    %v4839 = vpop.xlane.xlu0 %4838
    %v4840 = vmul.f32 %v4818, %v377
    %v4841 = vmul.f32 %v4821, %v377
    %v4842 = vmul.f32 %v4824, %v377
    %v4843 = vmul.f32 %v4827, %v377
    %v4844 = vmul.f32 %v4830, %v377
    %v4845 = vmul.f32 %v4833, %v377
    %v4846 = vmul.f32 %v4836, %v377
    %v4847 = vmul.f32 %v4839, %v377
    %v4848 = vadd.f32 %v4840, 1e-05
    %v4849 = vadd.f32 %v4841, 1e-05
    %v4850 = vadd.f32 %v4842, 1e-05
    %v4851 = vadd.f32 %v4843, 1e-05
    %v4852 = vadd.f32 %v4844, 1e-05
    %v4853 = vadd.f32 %v4845, 1e-05
    %v4854 = vadd.f32 %v4846, 1e-05
    %v4855 = vadd.f32 %v4847, 1e-05
    %v4856 = vrsqrt.pop %v4848
    %v4857 = vrsqrt.pop %v4849
    %v4858 = vrsqrt.pop %v4850
    %v4859 = vrsqrt.pop %v4851
    %v4860 = vrsqrt.pop %v4852
    %v4861 = vrsqrt.pop %v4853
    %v4862 = vrsqrt.pop %v4854
    %v4863 = vrsqrt.pop %v4855
    %v4864 = vmul.f32 %v4768, %v4856
    %v4865 = vmul.f32 %v4769, %v4857
    %v4866 = vmul.f32 %v4770, %v4858
    %v4867 = vmul.f32 %v4771, %v4859
    %v4868 = vmul.f32 %v4772, %v4860
    %v4869 = vmul.f32 %v4773, %v4861
    %v4870 = vmul.f32 %v4774, %v4862
    %v4871 = vmul.f32 %v4775, %v4863
    %v4872 = vmul.f32 %v4864, %v1415
    %v4873 = vmul.f32 %v4865, %v1415
    %v4874 = vmul.f32 %v4866, %v1415
    %v4875 = vmul.f32 %v4867, %v1415
    %v4876 = vmul.f32 %v4868, %v1415
    %v4877 = vmul.f32 %v4869, %v1415
    %v4878 = vmul.f32 %v4870, %v1415
    %v4879 = vmul.f32 %v4871, %v1415
    %v4880 = vadd.f32 %v4872, %v1431
    %v4881 = vadd.f32 %v4873, %v1431
    %v4882 = vadd.f32 %v4874, %v1431
    %v4883 = vadd.f32 %v4875, %v1431
    %v4884 = vadd.f32 %v4876, %v1431
    %v4885 = vadd.f32 %v4877, %v1431
    %v4886 = vadd.f32 %v4878, %v1431
    %v4887 = vadd.f32 %v4879, %v1431
    %v4888 = vpack.c.bf16 %v4881, %v4880
    %v4889 = vpack.c.bf16 %v4883, %v4882
    %v4890 = vpack.c.bf16 %v4885, %v4884
    %v4891 = vpack.c.bf16 %v4887, %v4886
    %v4892 = vlaneseq
    %v4893 = vshrl.u32 %v4892, 7
    %v4894 = vsub.s32 0, %v4893
    %v4895 = vrot.slane %v137, %v4894
    %4900 = vrot.lane.b32.xlu0 %v4888, 64
    %v4901 = vpop.permute.xlu0 %4900
    %4902 = vrot.lane.b32.xlu0 %v4889, 64
    %v4903 = vpop.permute.xlu0 %4902
    %4904 = vrot.lane.b32.xlu0 %v4890, 64
    %v4905 = vpop.permute.xlu0 %4904
    %4906 = vrot.lane.b32.xlu0 %v4891, 64
    %v4907 = vpop.permute.xlu0 %4906
    %v4912 = vunpack.c.l.b16 %v92
    %v4913 = vunpack.c.l.b16 %v93
    %v4914 = vunpack.c.l.b16 %v94
    %v4915 = vunpack.c.l.b16 %v95
    %v4916 = vpack.c.b16 %v4913, %v4912
    %v4917 = vpack.c.b16 %v4915, %v4914
    %v4921 = vsel %vm364, %v4901, 0
    %v4924 = vsel %vm364, %v4903, 0
    %v4927 = vsel %vm364, %v4905, 0
    %v4930 = vsel %vm364, %v4907, 0
    %4932 = vmatprep.subr.bf16.mxu0 0
    %4933 = vmatpush1.bf16.msra.mxu0 0
    %4934 = vmatprep.subr.bf16.mxu0 0
    %4935 = vmatpush1.bf16.msra.mxu0 0
    %4936 = vmatprep.subr.bf16.mxu0 0
    %4937 = vmatpush1.bf16.msra.mxu0 0
    %4938 = vmatprep.subr.bf16.mxu0 0
    %4939 = vmatpush1.bf16.msra.mxu0 0
    %4940 = vmatprep.subr.bf16.mxu0 0
    %4941 = vmatpush1.bf16.msra.mxu0 0
    %4942 = vmatprep.subr.bf16.mxu0 0
    %4943 = vmatpush1.bf16.msra.mxu0 0
    %4944 = vmatprep.subr.bf16.mxu0 0
    %4945 = vmatpush1.bf16.msra.mxu0 %v4917
    %4946 = vmatprep.subr.bf16.mxu0 0
    %4947 = vmatpush1.bf16.msra.mxu0 %v4916
    %4948 = vmatprep.subr.bf16.mxu0 0
    %4949 = vmatpush2.bf16.msra.mxu0 0
    %4950 = vmatprep.subr.bf16.mxu0 0
    %4951 = vmatpush2.bf16.msra.mxu0 0
    %4952 = vmatprep.subr.bf16.mxu0 0
    %4953 = vmatpush2.bf16.msra.mxu0 0
    %4954 = vmatprep.subr.bf16.mxu0 0
    %4955 = vmatpush2.bf16.msra.mxu0 0
    %4956 = vmatprep.subr.bf16.mxu0 0
    %4957 = vmatpush2.bf16.msra.mxu0 0
    %4958 = vmatprep.subr.bf16.mxu0 0
    %4959 = vmatpush2.bf16.msra.mxu0 0
    %4960 = vmatprep.subr.bf16.mxu0 0
    %4961 = vmatpush2.bf16.msra.mxu0 0
    %4962 = vmatprep.subr.bf16.mxu0 0
    %4963 = vmatpush2.bf16.msra.mxu0 0
    %4964 = vmatprep.mubr.bf16.mxu0 0
    %4965 = vmatmul.mubr.bf16.gmra.mxu0 %v4921
    %v4966 = vpop.f32.mrf.mxu0
    %v4967 = vadd.f32 %v4895, %v4966
    %v4968 = vpop.f32.mrf.mxu0
    %v4969 = vpop.f32.mrf.mxu0
    %v4970 = vadd.f32 %v4895, %v4969
    %v4971 = vpop.f32.mrf.mxu0
    %4972 = vmatprep.mubr.bf16.mxu0 0
    %4973 = vmatmul.mubr.bf16.gmra.mxu0 %v4924
    %v4974 = vpop.f32.mrf.mxu0
    %v4975 = vadd.f32 %v4895, %v4974
    %v4976 = vpop.f32.mrf.mxu0
    %v4977 = vpop.f32.mrf.mxu0
    %v4978 = vadd.f32 %v4895, %v4977
    %v4979 = vpop.f32.mrf.mxu0
    %4980 = vmatprep.mubr.bf16.mxu0 0
    %4981 = vmatmul.mubr.bf16.gmra.mxu0 %v4927
    %v4982 = vpop.f32.mrf.mxu0
    %v4983 = vadd.f32 %v4895, %v4982
    %v4984 = vpop.f32.mrf.mxu0
    %v4985 = vpop.f32.mrf.mxu0
    %v4986 = vadd.f32 %v4895, %v4985
    %v4987 = vpop.f32.mrf.mxu0
    %4988 = vmatprep.mubr.bf16.mxu0 0
    %4989 = vmatmul.mubr.bf16.gmra.mxu0 %v4930
    %v4990 = vpop.f32.mrf.mxu0
    %v4991 = vadd.f32 %v4895, %v4990
    %v4992 = vpop.f32.mrf.mxu0
    %v4993 = vpop.f32.mrf.mxu0
    %v4994 = vadd.f32 %v4895, %v4993
    %v4995 = vpop.f32.mrf.mxu0
    %4996 = vdwg.mxu0
    %v4997 = vmax.f32 %v4967, 0.0
    %v4998 = vmax.f32 %v4970, 0.0
    %v4999 = vmax.f32 %v4975, 0.0
    %v5000 = vmax.f32 %v4978, 0.0
    %v5001 = vmax.f32 %v4983, 0.0
    %v5002 = vmax.f32 %v4986, 0.0
    %v5003 = vmax.f32 %v4991, 0.0
    %v5004 = vmax.f32 %v4994, 0.0
    %v5005 = vpack.c.bf16 %v4998, %v4997
    %v5006 = vpack.c.bf16 %v5000, %v4999
    %v5007 = vpack.c.bf16 %v5002, %v5001
    %v5008 = vpack.c.bf16 %v5004, %v5003
    %v5009 = vlaneseq
    %v5010 = vshrl.u32 %v5009, 7
    %v5011 = vsub.s32 0, %v5010
    %v5012 = vrot.slane %v138, %v5011
    %v5017 = vunpack.c.l.b16 %v97
    %v5018 = vunpack.c.l.b16 %v98
    %v5019 = vunpack.c.l.b16 %v99
    %v5020 = vunpack.c.l.b16 %v100
    %v5021 = vpack.c.b16 %v5018, %v5017
    %v5022 = vpack.c.b16 %v5020, %v5019
    %v5026 = vsel %vm364, %v5005, 0
    %v5029 = vsel %vm364, %v5006, 0
    %v5032 = vsel %vm364, %v5007, 0
    %v5035 = vsel %vm364, %v5008, 0
    %5037 = vmatprep.subr.bf16.mxu0 0
    %5038 = vmatpush1.bf16.msra.mxu0 0
    %5039 = vmatprep.subr.bf16.mxu0 0
    %5040 = vmatpush1.bf16.msra.mxu0 0
    %5041 = vmatprep.subr.bf16.mxu0 0
    %5042 = vmatpush1.bf16.msra.mxu0 0
    %5043 = vmatprep.subr.bf16.mxu0 0
    %5044 = vmatpush1.bf16.msra.mxu0 0
    %5045 = vmatprep.subr.bf16.mxu0 0
    %5046 = vmatpush1.bf16.msra.mxu0 0
    %5047 = vmatprep.subr.bf16.mxu0 0
    %5048 = vmatpush1.bf16.msra.mxu0 0
    %5049 = vmatprep.subr.bf16.mxu0 0
    %5050 = vmatpush1.bf16.msra.mxu0 %v5022
    %5051 = vmatprep.subr.bf16.mxu0 0
    %5052 = vmatpush1.bf16.msra.mxu0 %v5021
    %5053 = vmatprep.subr.bf16.mxu0 0
    %5054 = vmatpush2.bf16.msra.mxu0 0
    %5055 = vmatprep.subr.bf16.mxu0 0
    %5056 = vmatpush2.bf16.msra.mxu0 0
    %5057 = vmatprep.subr.bf16.mxu0 0
    %5058 = vmatpush2.bf16.msra.mxu0 0
    %5059 = vmatprep.subr.bf16.mxu0 0
    %5060 = vmatpush2.bf16.msra.mxu0 0
    %5061 = vmatprep.subr.bf16.mxu0 0
    %5062 = vmatpush2.bf16.msra.mxu0 0
    %5063 = vmatprep.subr.bf16.mxu0 0
    %5064 = vmatpush2.bf16.msra.mxu0 0
    %5065 = vmatprep.subr.bf16.mxu0 0
    %5066 = vmatpush2.bf16.msra.mxu0 0
    %5067 = vmatprep.subr.bf16.mxu0 0
    %5068 = vmatpush2.bf16.msra.mxu0 0
    %5069 = vmatprep.mubr.bf16.mxu0 0
    %5070 = vmatmul.mubr.bf16.gmra.mxu0 %v5026
    %v5071 = vpop.f32.mrf.mxu0
    %v5072 = vadd.f32 %v5012, %v5071
    %v5073 = vpop.f32.mrf.mxu0
    %v5074 = vpop.f32.mrf.mxu0
    %v5075 = vadd.f32 %v5012, %v5074
    %v5076 = vpop.f32.mrf.mxu0
    %5077 = vmatprep.mubr.bf16.mxu0 0
    %5078 = vmatmul.mubr.bf16.gmra.mxu0 %v5029
    %v5079 = vpop.f32.mrf.mxu0
    %v5080 = vadd.f32 %v5012, %v5079
    %v5081 = vpop.f32.mrf.mxu0
    %v5082 = vpop.f32.mrf.mxu0
    %v5083 = vadd.f32 %v5012, %v5082
    %v5084 = vpop.f32.mrf.mxu0
    %5085 = vmatprep.mubr.bf16.mxu0 0
    %5086 = vmatmul.mubr.bf16.gmra.mxu0 %v5032
    %v5087 = vpop.f32.mrf.mxu0
    %v5088 = vadd.f32 %v5012, %v5087
    %v5089 = vpop.f32.mrf.mxu0
    %v5090 = vpop.f32.mrf.mxu0
    %v5091 = vadd.f32 %v5012, %v5090
    %v5092 = vpop.f32.mrf.mxu0
    %5093 = vmatprep.mubr.bf16.mxu0 0
    %5094 = vmatmul.mubr.bf16.gmra.mxu0 %v5035
    %v5095 = vpop.f32.mrf.mxu0
    %v5096 = vadd.f32 %v5012, %v5095
    %v5097 = vpop.f32.mrf.mxu0
    %v5098 = vpop.f32.mrf.mxu0
    %v5099 = vadd.f32 %v5012, %v5098
    %v5100 = vpop.f32.mrf.mxu0
    %5101 = vdwg.mxu0
    %v5102 = vmax.f32 %v5072, 0.0
    %v5103 = vmax.f32 %v5075, 0.0
    %v5104 = vmax.f32 %v5080, 0.0
    %v5105 = vmax.f32 %v5083, 0.0
    %v5106 = vmax.f32 %v5088, 0.0
    %v5107 = vmax.f32 %v5091, 0.0
    %v5108 = vmax.f32 %v5096, 0.0
    %v5109 = vmax.f32 %v5099, 0.0
    %v5110 = vlaneseq
    %v5111 = vshrl.u32 %v5110, 7
    %v5112 = vsub.s32 0, %v5111
    %v5113 = vrot.slane %v139, %v5112
    %v5114 = vmul.f32 %v5102, %v5113
    %v5115 = vmul.f32 %v5103, %v5113
    %v5116 = vmul.f32 %v5104, %v5113
    %v5117 = vmul.f32 %v5105, %v5113
    %v5118 = vmul.f32 %v5106, %v5113
    %v5119 = vmul.f32 %v5107, %v5113
    %v5120 = vmul.f32 %v5108, %v5113
    %v5121 = vmul.f32 %v5109, %v5113
    %v5122 = vsel %vm364, %v5114, 0.0
    %5123 = vadd.xlane.f32.xlu0 %v5122
    %v5124 = vpop.xlane.xlu0 %5123
    %v5125 = vsel %vm364, %v5115, 0.0
    %5126 = vadd.xlane.f32.xlu0 %v5125
    %v5127 = vpop.xlane.xlu0 %5126
    %v5128 = vsel %vm364, %v5116, 0.0
    %5129 = vadd.xlane.f32.xlu0 %v5128
    %v5130 = vpop.xlane.xlu0 %5129
    %v5131 = vsel %vm364, %v5117, 0.0
    %5132 = vadd.xlane.f32.xlu0 %v5131
    %v5133 = vpop.xlane.xlu0 %5132
    %v5134 = vsel %vm364, %v5118, 0.0
    %5135 = vadd.xlane.f32.xlu0 %v5134
    %v5136 = vpop.xlane.xlu0 %5135
    %v5137 = vsel %vm364, %v5119, 0.0
    %5138 = vadd.xlane.f32.xlu0 %v5137
    %v5139 = vpop.xlane.xlu0 %5138
    %v5140 = vsel %vm364, %v5120, 0.0
    %5141 = vadd.xlane.f32.xlu0 %v5140
    %v5142 = vpop.xlane.xlu0 %5141
    %v5143 = vsel %vm364, %v5121, 0.0
    %5144 = vadd.xlane.f32.xlu0 %v5143
    %v5145 = vpop.xlane.xlu0 %5144
    %v5146 = vstv %s61
    %v5147 = vadd.f32 %v5124, %v5146
    %v5148 = vadd.f32 %v5127, %v5146
    %v5149 = vadd.f32 %v5130, %v5146
    %v5150 = vadd.f32 %v5133, %v5146
    %v5151 = vadd.f32 %v5136, %v5146
    %v5152 = vadd.f32 %v5139, %v5146
    %v5153 = vadd.f32 %v5142, %v5146
    %v5154 = vadd.f32 %v5145, %v5146
    %v5155 = vmul.f32 %v5147, %v284
    %v5156 = vmul.f32 %v5148, %v285
    %v5157 = vmul.f32 %v5149, %v286
    %v5158 = vmul.f32 %v5150, %v287
    %v5159 = vmul.f32 %v5151, %v288
    %v5160 = vmul.f32 %v5152, %v289
    %v5161 = vmul.f32 %v5153, %v290
    %v5162 = vmul.f32 %v5154, %v291
    %vm5163 = vcmask 7168
    %v5164 = vsel %vm5163, %v5155, 0.0
    %v5165 = vsel %vm5163, %v5156, 0.0
    %v5166 = vadd.f32 %v5164, %v5165
    %v5167 = vrot.slane %v5166, 4
    %v5168 = vadd.f32 %v5166, %v5167
    %v5169 = vrot.slane %v5168, 2
    %v5170 = vadd.f32 %v5168, %v5169
    %v5171 = vrot.slane %v5170, 1
    %v5172 = vadd.f32 %v5170, %v5171
    %v5173 = vsel %vm5163, %v5157, 0.0
    %v5174 = vsel %vm5163, %v5158, 0.0
    %v5175 = vadd.f32 %v5173, %v5174
    %v5176 = vrot.slane %v5175, 4
    %v5177 = vadd.f32 %v5175, %v5176
    %v5178 = vrot.slane %v5177, 2
    %v5179 = vadd.f32 %v5177, %v5178
    %v5180 = vrot.slane %v5179, 1
    %v5181 = vadd.f32 %v5179, %v5180
    %v5182 = vsel %vm5163, %v5159, 0.0
    %v5183 = vsel %vm5163, %v5160, 0.0
    %v5184 = vadd.f32 %v5182, %v5183
    %v5185 = vrot.slane %v5184, 4
    %v5186 = vadd.f32 %v5184, %v5185
    %v5187 = vrot.slane %v5186, 2
    %v5188 = vadd.f32 %v5186, %v5187
    %v5189 = vrot.slane %v5188, 1
    %v5190 = vadd.f32 %v5188, %v5189
    %v5191 = vsel %vm5163, %v5161, 0.0
    %v5192 = vsel %vm5163, %v5162, 0.0
    %v5193 = vadd.f32 %v5191, %v5192
    %v5194 = vrot.slane %v5193, 4
    %v5195 = vadd.f32 %v5193, %v5194
    %v5196 = vrot.slane %v5195, 2
    %v5197 = vadd.f32 %v5195, %v5196
    %v5198 = vrot.slane %v5197, 1
    %v5199 = vadd.f32 %v5197, %v5198
    %v5200 = vxor.u32 %v5172, 2147483648
    %v5201 = vxor.u32 %v5181, 2147483648
    %v5202 = vxor.u32 %v5190, 2147483648
    %v5203 = vxor.u32 %v5199, 2147483648
    %v5204 = vmul.f32 %v5200, 1.442695
    %v5205 = vpow.pop %v5204
    %v5206 = vmul.f32 %v5201, 1.442695
    %v5207 = vpow.pop %v5206
    %v5208 = vmul.f32 %v5202, 1.442695
    %v5209 = vpow.pop %v5208
    %v5210 = vmul.f32 %v5203, 1.442695
    %v5211 = vpow.pop %v5210
    %v5212 = vadd.f32 %v5205, 1.0
    %v5213 = vadd.f32 %v5207, 1.0
    %v5214 = vadd.f32 %v5209, 1.0
    %v5215 = vadd.f32 %v5211, 1.0
    %v5216 = vrcp.pop %v5212
    %v5217 = vmul.f32 1.0, %v5216
    %v5218 = vrcp.pop %v5213
    %v5219 = vmul.f32 1.0, %v5218
    %v5220 = vrcp.pop %v5214
    %v5221 = vmul.f32 1.0, %v5220
    %v5222 = vrcp.pop %v5215
    %v5223 = vmul.f32 1.0, %v5222
    %vm5224 = vcmask 0
    %5225 = vst.msk [vmem:[%s9] sm:$0x1] %vm5224, %v5217
    %5226 = vst.msk [vmem:[%s9 + $0x1] sm:$0x1] %vm5224, %v5219
    %5227 = vst.msk [vmem:[%s9 + $0x2] sm:$0x1] %vm5224, %v5221
    %5228 = vst.msk [vmem:[%s9 + $0x3] sm:$0x1] %vm5224, %v5223
    // Predicated region
    $region46: #{tpu_custom_call.1} parent=1 // pred_check
      _
    $region47: #{tpu_custom_call.1} parent=1 // pred_check_branch
      %5230 = sbr.rel (0) target = $region49
    $region48: #{tpu_custom_call.1} parent=1 // pred_region
      _
    $region49: #{tpu_custom_call.1} parent=1 // pred_fallthru
      _
    // Predicated region
    $region50: #{tpu_custom_call.1} parent=1 // pred_check
      _
    $region51: #{tpu_custom_call.1} parent=1 // pred_check_branch
      %5232 = sbr.rel (0) target = $region53
    $region52: #{tpu_custom_call.1} parent=1 // pred_region
      _
    $region53: #{tpu_custom_call.1} parent=1 // pred_fallthru
      _
    %5233 = vsyncpa [#allocation3], 1
    %5234 = vsyncpa [#allocation4], 1

</llo_original>
